<compile_context>
chip_gen: v7x
topology: tpu7x:2x2x1
jax: 0.10.0
libtpu: 0.0.40
codegen_flags: <defaults>
</compile_context>

<pallas_src>
import math
from functools import partial

import jax
import jax.numpy as jnp
from jax.experimental import pallas as pl
from jax.experimental.pallas import tpu as pltpu


def _round_up(x, m):
    return (x + m - 1) // m * m


# ---------------------------------------------------------------------------
# Kernel
# ---------------------------------------------------------------------------
def _layernorm_affine(h, gamma, beta, eps):
    # One-pass stats, all in f32.
    mean = jnp.mean(h, axis=-1, keepdims=True)
    mean_sq = jnp.mean(h * h, axis=-1, keepdims=True)
    var = jnp.maximum(mean_sq - mean * mean, 0.0)
    hn = (h - mean) * jax.lax.rsqrt(var + eps)
    return hn * gamma + beta


def _inr_fused_kernel(*refs, n_layers, eps):
    # refs layout:
    #   x_ref,                 [tile_n, D]   f32
    #   b_ref,                 [D, F2]       bf16 (2*pi already folded in)
    #   w0_sin, w0_cos,        [F2, L]       bf16   (split of W0 [F=2*F2, L])
    #   bias0, gamma0, beta0,  [1, L]        f32
    #   (w_i, bias_i, gamma_i, beta_i) * (n_layers - 1)
    #   o_ref                  [tile_n, L]   f32
    x_ref, b_ref = refs[0], refs[1]
    o_ref = refs[-1]
    p = refs[2:-1]

    # Gaussian Fourier features (B includes the 2*pi factor).
    proj = jnp.dot(x_ref[...].astype(jnp.bfloat16), b_ref[...],
                   preferred_element_type=jnp.float32)
    sin_p = jnp.sin(proj).astype(jnp.bfloat16)
    cos_p = jnp.cos(proj).astype(jnp.bfloat16)

    # Layer 0:  concat([sin, cos]) @ W0  ==  sin @ W0[:F2] + cos @ W0[F2:]
    w0s, w0c, bias, gamma, beta = p[0], p[1], p[2], p[3], p[4]
    h = (jnp.dot(sin_p, w0s[...], preferred_element_type=jnp.float32)
         + jnp.dot(cos_p, w0c[...], preferred_element_type=jnp.float32)
         + bias[...])
    h = jnp.maximum(h, 0.0)  # ReLU
    # TODO(synk): Dropout is identity here (eval-mode forward); training-mode
    # stochastic dropout would need pltpu.prng_* inside the kernel.
    h = _layernorm_affine(h, gamma[...], beta[...], eps)

    idx = 5
    for _ in range(n_layers - 1):
        w, bias, gamma, beta = p[idx], p[idx + 1], p[idx + 2], p[idx + 3]
        idx += 4
        h = jnp.dot(h.astype(jnp.bfloat16), w[...],
                    preferred_element_type=jnp.float32) + bias[...]
        h = jnp.maximum(h, 0.0)
        h = _layernorm_affine(h, gamma[...], beta[...], eps)

    o_ref[...] = h.astype(o_ref.dtype)


# ---------------------------------------------------------------------------
# Wrapper
# ---------------------------------------------------------------------------
def inr_forward(x, params, *, eps=1e-5, tile_n=512):
    """x: [batch, time, in_feats] -> [batch, time, layer_size]."""
    batch, time, in_feats = x.shape
    N = batch * time
    x2d = x.reshape(N, in_feats).astype(jnp.float32)

    B = params["B"]            # [D, F2] bf16, 2*pi folded in
    layers = params["layers"]
    n_layers = len(layers)
    F2 = B.shape[1]
    L = layers[0][0].shape[1]

    # Row tiling: pad N so the grid divides evenly (out-of-range rows are junk
    # but are sliced off below); tile second-to-last dim stays 8-aligned.
    tn = min(tile_n, _round_up(N, 8))
    n_pad = _round_up(N, tn)
    if n_pad != N:
        x2d = jnp.pad(x2d, ((0, n_pad - N), (0, 0)))

    # Flatten parameters; split layer 0's weight into sin/cos halves.
    W0, b0, g0, bt0 = layers[0]
    flat = [B, W0[:F2], W0[F2:], b0, g0, bt0]
    for (W, b, g, bt) in layers[1:]:
        flat += [W, b, g, bt]

    grid = (n_pad // tn,)

    def row_spec(feat):
        return pl.BlockSpec((tn, feat), lambda i: (i, 0))

    def const_spec(a):
        return pl.BlockSpec(a.shape, lambda i: (0, 0))

    out = pl.pallas_call(
        partial(_inr_fused_kernel, n_layers=n_layers, eps=eps),
        out_shape=jax.ShapeDtypeStruct((n_pad, L), jnp.float32),
        grid=grid,
        in_specs=[row_spec(in_feats)] + [const_spec(a) for a in flat],
        out_specs=row_spec(L),
        compiler_params=pltpu.CompilerParams(
            dimension_semantics=("parallel",),
        ),
    )(x2d, *flat)

    return out[:N].reshape(batch, time, L)


# ---------------------------------------------------------------------------
# Deterministic parameter construction (mirrors the torch __init__ shapes)
# ---------------------------------------------------------------------------
def make_params(key, in_feats, n_layers, layer_size, n_fourier_feats, scales):
    # TODO(synk): n_fourier_feats == 0 (plain Linear feature path) not handled.
    n_scale_feats = n_fourier_feats // (2 * len(scales))
    assert n_scale_feats * 2 * len(scales) == n_fourier_feats

    keys = jax.random.split(key, 1 + 2 * n_layers)
    # Gaussian Fourier projection matrix B: [in_feats, n_fourier_feats // 2],
    # with the 2*pi factor folded in, stored bf16 for the MXU.
    b_cols = []
    bkeys = jax.random.split(keys[0], len(scales))
    for s, bk in zip(scales, bkeys):
        b_cols.append(jax.random.normal(bk, (in_feats, n_scale_feats), jnp.float32) * s)
    B = (2.0 * math.pi) * jnp.concatenate(b_cols, axis=1)

    layers = []
    in_size = n_fourier_feats
    for i in range(n_layers):
        wk, bk = keys[1 + 2 * i], keys[2 + 2 * i]
        bound = 1.0 / math.sqrt(in_size)
        W = jax.random.uniform(wk, (in_size, layer_size), jnp.float32, -bound, bound)
        b = jax.random.uniform(bk, (1, layer_size), jnp.float32, -bound, bound)
        gamma = jnp.ones((1, layer_size), jnp.float32)
        beta = jnp.zeros((1, layer_size), jnp.float32)
        layers.append((W.astype(jnp.bfloat16), b, gamma, beta))
        in_size = layer_size

    return {"B": B.astype(jnp.bfloat16), "layers": layers}


# ---------------------------------------------------------------------------
# Pure-JAX reference (same bf16 matmul precision) for a correctness check.
# ---------------------------------------------------------------------------
def inr_reference(x, params, eps=1e-5):
    batch, time, in_feats = x.shape
    h = x.reshape(batch * time, in_feats).astype(jnp.float32)
    proj = jnp.dot(h.astype(jnp.bfloat16), params["B"],
                   preferred_element_type=jnp.float32)
    h = jnp.concatenate([jnp.sin(proj), jnp.cos(proj)], axis=-1)
    for (W, b, g, bt) in params["layers"]:
        h = jnp.dot(h.astype(jnp.bfloat16), W,
                    preferred_element_type=jnp.float32) + b
        h = jnp.maximum(h, 0.0)
        mean = jnp.mean(h, axis=-1, keepdims=True)
        var = jnp.mean(jnp.square(h - mean), axis=-1, keepdims=True)
        h = (h - mean) * jax.lax.rsqrt(var + eps) * g + bt
    return h.reshape(batch, time, -1)


# ---------------------------------------------------------------------------
if __name__ == "__main__":
    # Small but lane-dense shapes (feature dims are multiples of 128).
    batch, time, in_feats = 2, 64, 4
    n_layers, layer_size = 3, 128
    n_fourier_feats, scales = 256, [1.0, 10.0]

    key = jax.random.PRNGKey(0)
    pkey, xkey = jax.random.split(key)
    params = make_params(pkey, in_feats, n_layers, layer_size, n_fourier_feats, scales)
    x = jax.random.normal(xkey, (batch, time, in_feats), jnp.float32)

    out = inr_forward(x, params)
    jax.block_until_ready(out)
    assert out.shape == (batch, time, layer_size)

    ref = inr_reference(x, params)
    assert jnp.allclose(out, ref, atol=2e-2, rtol=2e-2), (
        float(jnp.max(jnp.abs(out - ref))))

    print("KERNEL_OK")
</pallas_src>

<mosaic_0001>
module attributes {stable_mosaic.version = 11 : i64} {
  func.func @_inr_fused_kernel(%arg0: i32, %arg1: memref<128x4xf32, #tpu.memory_space<vmem>>, %arg2: memref<4x128xbf16, #tpu.memory_space<vmem>>, %arg3: memref<128x128xbf16, #tpu.memory_space<vmem>>, %arg4: memref<128x128xbf16, #tpu.memory_space<vmem>>, %arg5: memref<1x128xf32, #tpu.memory_space<vmem>>, %arg6: memref<1x128xf32, #tpu.memory_space<vmem>>, %arg7: memref<1x128xf32, #tpu.memory_space<vmem>>, %arg8: memref<128x128xbf16, #tpu.memory_space<vmem>>, %arg9: memref<1x128xf32, #tpu.memory_space<vmem>>, %arg10: memref<1x128xf32, #tpu.memory_space<vmem>>, %arg11: memref<1x128xf32, #tpu.memory_space<vmem>>, %arg12: memref<128x128xbf16, #tpu.memory_space<vmem>>, %arg13: memref<1x128xf32, #tpu.memory_space<vmem>>, %arg14: memref<1x128xf32, #tpu.memory_space<vmem>>, %arg15: memref<1x128xf32, #tpu.memory_space<vmem>>, %arg16: memref<128x128xf32, #tpu.memory_space<vmem>>) attributes {dimension_semantics = [#tpu.dimension_semantics<parallel>], iteration_bounds = array<i64: 1>, scalar_prefetch = 0 : i64, scratch_operands = 0 : i64, tpu.core_type = #tpu.core_type<tc>, window_params = [{transform_indices = @transform_0, window_bounds = array<i64: 128, 4>}, {pipeline_mode = #tpu.pipeline_mode<synchronous>, transform_indices = @transform_1, window_bounds = array<i64: 4, 128>}, {pipeline_mode = #tpu.pipeline_mode<synchronous>, transform_indices = @transform_2, window_bounds = array<i64: 128, 128>}, {pipeline_mode = #tpu.pipeline_mode<synchronous>, transform_indices = @transform_3, window_bounds = array<i64: 128, 128>}, {pipeline_mode = #tpu.pipeline_mode<synchronous>, transform_indices = @transform_4, window_bounds = array<i64: 1, 128>}, {pipeline_mode = #tpu.pipeline_mode<synchronous>, transform_indices = @transform_5, window_bounds = array<i64: 1, 128>}, {pipeline_mode = #tpu.pipeline_mode<synchronous>, transform_indices = @transform_6, window_bounds = array<i64: 1, 128>}, {pipeline_mode = #tpu.pipeline_mode<synchronous>, transform_indices = @transform_7, window_bounds = array<i64: 128, 128>}, {pipeline_mode = #tpu.pipeline_mode<synchronous>, transform_indices = @transform_8, window_bounds = array<i64: 1, 128>}, {pipeline_mode = #tpu.pipeline_mode<synchronous>, transform_indices = @transform_9, window_bounds = array<i64: 1, 128>}, {pipeline_mode = #tpu.pipeline_mode<synchronous>, transform_indices = @transform_10, window_bounds = array<i64: 1, 128>}, {pipeline_mode = #tpu.pipeline_mode<synchronous>, transform_indices = @transform_11, window_bounds = array<i64: 128, 128>}, {pipeline_mode = #tpu.pipeline_mode<synchronous>, transform_indices = @transform_12, window_bounds = array<i64: 1, 128>}, {pipeline_mode = #tpu.pipeline_mode<synchronous>, transform_indices = @transform_13, window_bounds = array<i64: 1, 128>}, {pipeline_mode = #tpu.pipeline_mode<synchronous>, transform_indices = @transform_14, window_bounds = array<i64: 1, 128>}, {transform_indices = @transform_15, window_bounds = array<i64: 128, 128>}]} {
    %c0 = arith.constant 0 : index
    %c0_0 = arith.constant 0 : index
    %0 = vector.load %arg1[%c0, %c0_0] : memref<128x4xf32, #tpu.memory_space<vmem>>, vector<128x4xf32>
    %1 = arith.truncf %0 : vector<128x4xf32> to vector<128x4xbf16>
    %c0_1 = arith.constant 0 : index
    %c0_2 = arith.constant 0 : index
    %2 = vector.load %arg2[%c0_1, %c0_2] : memref<4x128xbf16, #tpu.memory_space<vmem>>, vector<4x128xbf16>
    %cst = arith.constant dense<0.000000e+00> : vector<128x128xf32>
    %3 = tpu.matmul %1, %2, %cst {dimension_numbers = #tpu.dot_dimension_numbers<[1], [0], [0], [1], [0, 0, 1, 1], [], []>} : vector<128x4xbf16>, vector<4x128xbf16>, vector<128x128xf32> -> vector<128x128xf32>
    %4 = math.sin %3 : vector<128x128xf32>
    %5 = arith.truncf %4 : vector<128x128xf32> to vector<128x128xbf16>
    %6 = math.cos %3 : vector<128x128xf32>
    %7 = arith.truncf %6 : vector<128x128xf32> to vector<128x128xbf16>
    %c0_3 = arith.constant 0 : index
    %c0_4 = arith.constant 0 : index
    %8 = vector.load %arg3[%c0_3, %c0_4] : memref<128x128xbf16, #tpu.memory_space<vmem>>, vector<128x128xbf16>
    %cst_5 = arith.constant dense<0.000000e+00> : vector<128x128xf32>
    %9 = tpu.matmul %5, %8, %cst_5 {dimension_numbers = #tpu.dot_dimension_numbers<[1], [0], [0], [1], [0, 0, 1, 1], [], []>} : vector<128x128xbf16>, vector<128x128xbf16>, vector<128x128xf32> -> vector<128x128xf32>
    %c0_6 = arith.constant 0 : index
    %c0_7 = arith.constant 0 : index
    %10 = vector.load %arg4[%c0_6, %c0_7] : memref<128x128xbf16, #tpu.memory_space<vmem>>, vector<128x128xbf16>
    %cst_8 = arith.constant dense<0.000000e+00> : vector<128x128xf32>
    %11 = tpu.matmul %7, %10, %cst_8 {dimension_numbers = #tpu.dot_dimension_numbers<[1], [0], [0], [1], [0, 0, 1, 1], [], []>} : vector<128x128xbf16>, vector<128x128xbf16>, vector<128x128xf32> -> vector<128x128xf32>
    %12 = arith.addf %9, %11 : vector<128x128xf32>
    %c0_9 = arith.constant 0 : index
    %c0_10 = arith.constant 0 : index
    %13 = vector.load %arg5[%c0_9, %c0_10] : memref<1x128xf32, #tpu.memory_space<vmem>>, vector<1x128xf32>
    %14 = vector.broadcast %13 : vector<1x128xf32> to vector<128x128xf32>
    %15 = arith.addf %12, %14 : vector<128x128xf32>
    %cst_11 = arith.constant 0.000000e+00 : f32
    %16 = vector.broadcast %cst_11 : f32 to vector<128x128xf32>
    %17 = arith.maximumf %15, %16 : vector<128x128xf32>
    %c0_12 = arith.constant 0 : index
    %c0_13 = arith.constant 0 : index
    %18 = vector.load %arg6[%c0_12, %c0_13] : memref<1x128xf32, #tpu.memory_space<vmem>>, vector<1x128xf32>
    %c0_14 = arith.constant 0 : index
    %c0_15 = arith.constant 0 : index
    %19 = vector.load %arg7[%c0_14, %c0_15] : memref<1x128xf32, #tpu.memory_space<vmem>>, vector<1x128xf32>
    %cst_16 = arith.constant dense<0.000000e+00> : vector<128xf32>
    %20 = vector.multi_reduction <add>, %17, %cst_16 [1] : vector<128x128xf32> to vector<128xf32>
    %21 = vector.shape_cast %20 : vector<128xf32> to vector<128x1xf32>
    %cst_17 = arith.constant 1.280000e+02 : f32
    %22 = vector.broadcast %cst_17 : f32 to vector<128x1xf32>
    %23 = arith.divf %21, %22 : vector<128x1xf32>
    %24 = arith.mulf %17, %17 : vector<128x128xf32>
    %cst_18 = arith.constant dense<0.000000e+00> : vector<128xf32>
    %25 = vector.multi_reduction <add>, %24, %cst_18 [1] : vector<128x128xf32> to vector<128xf32>
    %26 = vector.shape_cast %25 : vector<128xf32> to vector<128x1xf32>
    %cst_19 = arith.constant 1.280000e+02 : f32
    %27 = vector.broadcast %cst_19 : f32 to vector<128x1xf32>
    %28 = arith.divf %26, %27 : vector<128x1xf32>
    %29 = arith.mulf %23, %23 : vector<128x1xf32>
    %30 = arith.subf %28, %29 : vector<128x1xf32>
    %cst_20 = arith.constant 0.000000e+00 : f32
    %31 = vector.broadcast %cst_20 : f32 to vector<128x1xf32>
    %32 = arith.maximumf %30, %31 : vector<128x1xf32>
    %33 = vector.broadcast %23 : vector<128x1xf32> to vector<128x128xf32>
    %34 = arith.subf %17, %33 : vector<128x128xf32>
    %cst_21 = arith.constant 9.99999974E-6 : f32
    %35 = vector.broadcast %cst_21 : f32 to vector<128x1xf32>
    %36 = arith.addf %32, %35 : vector<128x1xf32>
    %37 = math.rsqrt %36 : vector<128x1xf32>
    %38 = vector.broadcast %37 : vector<128x1xf32> to vector<128x128xf32>
    %39 = arith.mulf %34, %38 : vector<128x128xf32>
    %40 = vector.broadcast %18 : vector<1x128xf32> to vector<128x128xf32>
    %41 = arith.mulf %39, %40 : vector<128x128xf32>
    %42 = vector.broadcast %19 : vector<1x128xf32> to vector<128x128xf32>
    %43 = arith.addf %41, %42 : vector<128x128xf32>
    %44 = arith.truncf %43 : vector<128x128xf32> to vector<128x128xbf16>
    %c0_22 = arith.constant 0 : index
    %c0_23 = arith.constant 0 : index
    %45 = vector.load %arg8[%c0_22, %c0_23] : memref<128x128xbf16, #tpu.memory_space<vmem>>, vector<128x128xbf16>
    %cst_24 = arith.constant dense<0.000000e+00> : vector<128x128xf32>
    %46 = tpu.matmul %44, %45, %cst_24 {dimension_numbers = #tpu.dot_dimension_numbers<[1], [0], [0], [1], [0, 0, 1, 1], [], []>} : vector<128x128xbf16>, vector<128x128xbf16>, vector<128x128xf32> -> vector<128x128xf32>
    %c0_25 = arith.constant 0 : index
    %c0_26 = arith.constant 0 : index
    %47 = vector.load %arg9[%c0_25, %c0_26] : memref<1x128xf32, #tpu.memory_space<vmem>>, vector<1x128xf32>
    %48 = vector.broadcast %47 : vector<1x128xf32> to vector<128x128xf32>
    %49 = arith.addf %46, %48 : vector<128x128xf32>
    %cst_27 = arith.constant 0.000000e+00 : f32
    %50 = vector.broadcast %cst_27 : f32 to vector<128x128xf32>
    %51 = arith.maximumf %49, %50 : vector<128x128xf32>
    %c0_28 = arith.constant 0 : index
    %c0_29 = arith.constant 0 : index
    %52 = vector.load %arg10[%c0_28, %c0_29] : memref<1x128xf32, #tpu.memory_space<vmem>>, vector<1x128xf32>
    %c0_30 = arith.constant 0 : index
    %c0_31 = arith.constant 0 : index
    %53 = vector.load %arg11[%c0_30, %c0_31] : memref<1x128xf32, #tpu.memory_space<vmem>>, vector<1x128xf32>
    %cst_32 = arith.constant dense<0.000000e+00> : vector<128xf32>
    %54 = vector.multi_reduction <add>, %51, %cst_32 [1] : vector<128x128xf32> to vector<128xf32>
    %55 = vector.shape_cast %54 : vector<128xf32> to vector<128x1xf32>
    %cst_33 = arith.constant 1.280000e+02 : f32
    %56 = vector.broadcast %cst_33 : f32 to vector<128x1xf32>
    %57 = arith.divf %55, %56 : vector<128x1xf32>
    %58 = arith.mulf %51, %51 : vector<128x128xf32>
    %cst_34 = arith.constant dense<0.000000e+00> : vector<128xf32>
    %59 = vector.multi_reduction <add>, %58, %cst_34 [1] : vector<128x128xf32> to vector<128xf32>
    %60 = vector.shape_cast %59 : vector<128xf32> to vector<128x1xf32>
    %cst_35 = arith.constant 1.280000e+02 : f32
    %61 = vector.broadcast %cst_35 : f32 to vector<128x1xf32>
    %62 = arith.divf %60, %61 : vector<128x1xf32>
    %63 = arith.mulf %57, %57 : vector<128x1xf32>
    %64 = arith.subf %62, %63 : vector<128x1xf32>
    %cst_36 = arith.constant 0.000000e+00 : f32
    %65 = vector.broadcast %cst_36 : f32 to vector<128x1xf32>
    %66 = arith.maximumf %64, %65 : vector<128x1xf32>
    %67 = vector.broadcast %57 : vector<128x1xf32> to vector<128x128xf32>
    %68 = arith.subf %51, %67 : vector<128x128xf32>
    %cst_37 = arith.constant 9.99999974E-6 : f32
    %69 = vector.broadcast %cst_37 : f32 to vector<128x1xf32>
    %70 = arith.addf %66, %69 : vector<128x1xf32>
    %71 = math.rsqrt %70 : vector<128x1xf32>
    %72 = vector.broadcast %71 : vector<128x1xf32> to vector<128x128xf32>
    %73 = arith.mulf %68, %72 : vector<128x128xf32>
    %74 = vector.broadcast %52 : vector<1x128xf32> to vector<128x128xf32>
    %75 = arith.mulf %73, %74 : vector<128x128xf32>
    %76 = vector.broadcast %53 : vector<1x128xf32> to vector<128x128xf32>
    %77 = arith.addf %75, %76 : vector<128x128xf32>
    %78 = arith.truncf %77 : vector<128x128xf32> to vector<128x128xbf16>
    %c0_38 = arith.constant 0 : index
    %c0_39 = arith.constant 0 : index
    %79 = vector.load %arg12[%c0_38, %c0_39] : memref<128x128xbf16, #tpu.memory_space<vmem>>, vector<128x128xbf16>
    %cst_40 = arith.constant dense<0.000000e+00> : vector<128x128xf32>
    %80 = tpu.matmul %78, %79, %cst_40 {dimension_numbers = #tpu.dot_dimension_numbers<[1], [0], [0], [1], [0, 0, 1, 1], [], []>} : vector<128x128xbf16>, vector<128x128xbf16>, vector<128x128xf32> -> vector<128x128xf32>
    %c0_41 = arith.constant 0 : index
    %c0_42 = arith.constant 0 : index
    %81 = vector.load %arg13[%c0_41, %c0_42] : memref<1x128xf32, #tpu.memory_space<vmem>>, vector<1x128xf32>
    %82 = vector.broadcast %81 : vector<1x128xf32> to vector<128x128xf32>
    %83 = arith.addf %80, %82 : vector<128x128xf32>
    %cst_43 = arith.constant 0.000000e+00 : f32
    %84 = vector.broadcast %cst_43 : f32 to vector<128x128xf32>
    %85 = arith.maximumf %83, %84 : vector<128x128xf32>
    %c0_44 = arith.constant 0 : index
    %c0_45 = arith.constant 0 : index
    %86 = vector.load %arg14[%c0_44, %c0_45] : memref<1x128xf32, #tpu.memory_space<vmem>>, vector<1x128xf32>
    %c0_46 = arith.constant 0 : index
    %c0_47 = arith.constant 0 : index
    %87 = vector.load %arg15[%c0_46, %c0_47] : memref<1x128xf32, #tpu.memory_space<vmem>>, vector<1x128xf32>
    %cst_48 = arith.constant dense<0.000000e+00> : vector<128xf32>
    %88 = vector.multi_reduction <add>, %85, %cst_48 [1] : vector<128x128xf32> to vector<128xf32>
    %89 = vector.shape_cast %88 : vector<128xf32> to vector<128x1xf32>
    %cst_49 = arith.constant 1.280000e+02 : f32
    %90 = vector.broadcast %cst_49 : f32 to vector<128x1xf32>
    %91 = arith.divf %89, %90 : vector<128x1xf32>
    %92 = arith.mulf %85, %85 : vector<128x128xf32>
    %cst_50 = arith.constant dense<0.000000e+00> : vector<128xf32>
    %93 = vector.multi_reduction <add>, %92, %cst_50 [1] : vector<128x128xf32> to vector<128xf32>
    %94 = vector.shape_cast %93 : vector<128xf32> to vector<128x1xf32>
    %cst_51 = arith.constant 1.280000e+02 : f32
    %95 = vector.broadcast %cst_51 : f32 to vector<128x1xf32>
    %96 = arith.divf %94, %95 : vector<128x1xf32>
    %97 = arith.mulf %91, %91 : vector<128x1xf32>
    %98 = arith.subf %96, %97 : vector<128x1xf32>
    %cst_52 = arith.constant 0.000000e+00 : f32
    %99 = vector.broadcast %cst_52 : f32 to vector<128x1xf32>
    %100 = arith.maximumf %98, %99 : vector<128x1xf32>
    %101 = vector.broadcast %91 : vector<128x1xf32> to vector<128x128xf32>
    %102 = arith.subf %85, %101 : vector<128x128xf32>
    %cst_53 = arith.constant 9.99999974E-6 : f32
    %103 = vector.broadcast %cst_53 : f32 to vector<128x1xf32>
    %104 = arith.addf %100, %103 : vector<128x1xf32>
    %105 = math.rsqrt %104 : vector<128x1xf32>
    %106 = vector.broadcast %105 : vector<128x1xf32> to vector<128x128xf32>
    %107 = arith.mulf %102, %106 : vector<128x128xf32>
    %108 = vector.broadcast %86 : vector<1x128xf32> to vector<128x128xf32>
    %109 = arith.mulf %107, %108 : vector<128x128xf32>
    %110 = vector.broadcast %87 : vector<1x128xf32> to vector<128x128xf32>
    %111 = arith.addf %109, %110 : vector<128x128xf32>
    %c0_54 = arith.constant 0 : index
    %c0_55 = arith.constant 0 : index
    %112 = vector.load %arg16[%c0_54, %c0_55] : memref<128x128xf32, #tpu.memory_space<vmem>>, vector<128x128xf32>
    tpu.vector_store %arg16[%c0_54, %c0_55], %111 {strides = array<i32>} : memref<128x128xf32, #tpu.memory_space<vmem>>, vector<128x128xf32>,
    return
  }
  func.func @transform_0(%arg0: i32) -> (i32, i32) {
    %c0_i32 = arith.constant 0 : i32
    %c0_i32_0 = arith.constant 0 : i32
    return %arg0, %c0_i32 : i32, i32
  }
  func.func @transform_1(%arg0: i32) -> (i32, i32) {
    %c0_i32 = arith.constant 0 : i32
    %c0_i32_0 = arith.constant 0 : i32
    %c0_i32_1 = arith.constant 0 : i32
    return %c0_i32, %c0_i32_0 : i32, i32
  }
  func.func @transform_2(%arg0: i32) -> (i32, i32) {
    %c0_i32 = arith.constant 0 : i32
    %c0_i32_0 = arith.constant 0 : i32
    %c0_i32_1 = arith.constant 0 : i32
    return %c0_i32, %c0_i32_0 : i32, i32
  }
  func.func @transform_3(%arg0: i32) -> (i32, i32) {
    %c0_i32 = arith.constant 0 : i32
    %c0_i32_0 = arith.constant 0 : i32
    %c0_i32_1 = arith.constant 0 : i32
    return %c0_i32, %c0_i32_0 : i32, i32
  }
  func.func @transform_4(%arg0: i32) -> (i32, i32) {
    %c0_i32 = arith.constant 0 : i32
    %c0_i32_0 = arith.constant 0 : i32
    %c0_i32_1 = arith.constant 0 : i32
    return %c0_i32, %c0_i32_0 : i32, i32
  }
  func.func @transform_5(%arg0: i32) -> (i32, i32) {
    %c0_i32 = arith.constant 0 : i32
    %c0_i32_0 = arith.constant 0 : i32
    %c0_i32_1 = arith.constant 0 : i32
    return %c0_i32, %c0_i32_0 : i32, i32
  }
  func.func @transform_6(%arg0: i32) -> (i32, i32) {
    %c0_i32 = arith.constant 0 : i32
    %c0_i32_0 = arith.constant 0 : i32
    %c0_i32_1 = arith.constant 0 : i32
    return %c0_i32, %c0_i32_0 : i32, i32
  }
  func.func @transform_7(%arg0: i32) -> (i32, i32) {
    %c0_i32 = arith.constant 0 : i32
    %c0_i32_0 = arith.constant 0 : i32
    %c0_i32_1 = arith.constant 0 : i32
    return %c0_i32, %c0_i32_0 : i32, i32
  }
  func.func @transform_8(%arg0: i32) -> (i32, i32) {
    %c0_i32 = arith.constant 0 : i32
    %c0_i32_0 = arith.constant 0 : i32
    %c0_i32_1 = arith.constant 0 : i32
    return %c0_i32, %c0_i32_0 : i32, i32
  }
  func.func @transform_9(%arg0: i32) -> (i32, i32) {
    %c0_i32 = arith.constant 0 : i32
    %c0_i32_0 = arith.constant 0 : i32
    %c0_i32_1 = arith.constant 0 : i32
    return %c0_i32, %c0_i32_0 : i32, i32
  }
  func.func @transform_10(%arg0: i32) -> (i32, i32) {
    %c0_i32 = arith.constant 0 : i32
    %c0_i32_0 = arith.constant 0 : i32
    %c0_i32_1 = arith.constant 0 : i32
    return %c0_i32, %c0_i32_0 : i32, i32
  }
  func.func @transform_11(%arg0: i32) -> (i32, i32) {
    %c0_i32 = arith.constant 0 : i32
    %c0_i32_0 = arith.constant 0 : i32
    %c0_i32_1 = arith.constant 0 : i32
    return %c0_i32, %c0_i32_0 : i32, i32
  }
  func.func @transform_12(%arg0: i32) -> (i32, i32) {
    %c0_i32 = arith.constant 0 : i32
    %c0_i32_0 = arith.constant 0 : i32
    %c0_i32_1 = arith.constant 0 : i32
    return %c0_i32, %c0_i32_0 : i32, i32
  }
  func.func @transform_13(%arg0: i32) -> (i32, i32) {
    %c0_i32 = arith.constant 0 : i32
    %c0_i32_0 = arith.constant 0 : i32
    %c0_i32_1 = arith.constant 0 : i32
    return %c0_i32, %c0_i32_0 : i32, i32
  }
  func.func @transform_14(%arg0: i32) -> (i32, i32) {
    %c0_i32 = arith.constant 0 : i32
    %c0_i32_0 = arith.constant 0 : i32
    %c0_i32_1 = arith.constant 0 : i32
    return %c0_i32, %c0_i32_0 : i32, i32
  }
  func.func @transform_15(%arg0: i32) -> (i32, i32) {
    %c0_i32 = arith.constant 0 : i32
    %c0_i32_0 = arith.constant 0 : i32
    return %arg0, %c0_i32 : i32, i32
  }
}

</mosaic_0001>

<llo_original>
// kernel: tpu_custom_call.1
$region0: #{tpu_custom_call.1}
  #allocation0 [shape = 'u32[]', space=smem, size = 0x4, offset = 0x4, fixed_abs, tag = 'smem constant byte address 0x4 - core index']
  #allocation1 [shape = 'u32[144,128]{1,0:T(1,128)}', space=vmem, size = 0x12000, scoped, tag = 'internal scratch']
  %s0 = inlined_call_operand.vmem [shape: f32[128,4], index: 0, kind: input, shape index: {}]
  %s1 = inlined_call_operand.vmem [shape: bf16[4,128], index: 1, kind: input, shape index: {}]
  %s2 = inlined_call_operand.vmem [shape: bf16[128,128], index: 2, kind: input, shape index: {}]
  %s3 = inlined_call_operand.vmem [shape: bf16[128,128], index: 3, kind: input, shape index: {}]
  %s4 = inlined_call_operand.vmem [shape: f32[1,128], index: 4, kind: input, shape index: {}]
  %s5 = inlined_call_operand.vmem [shape: f32[1,128], index: 5, kind: input, shape index: {}]
  %s6 = inlined_call_operand.vmem [shape: f32[1,128], index: 6, kind: input, shape index: {}]
  %s7 = inlined_call_operand.hbm [shape: bf16[128,128], index: 7, kind: input, shape index: {}]
  %s8 = inlined_call_operand.vmem [shape: f32[1,128], index: 8, kind: input, shape index: {}]
  %s9 = inlined_call_operand.vmem [shape: f32[1,128], index: 9, kind: input, shape index: {}]
  %s10 = inlined_call_operand.vmem [shape: f32[1,128], index: 10, kind: input, shape index: {}]
  %s11 = inlined_call_operand.hbm [shape: bf16[128,128], index: 11, kind: input, shape index: {}]
  %s12 = inlined_call_operand.vmem [shape: f32[1,128], index: 12, kind: input, shape index: {}]
  %s13 = inlined_call_operand.vmem [shape: f32[1,128], index: 13, kind: input, shape index: {}]
  %s14 = inlined_call_operand.vmem [shape: f32[1,128], index: 14, kind: input, shape index: {}]
  %s15 = inlined_call_operand.hbm [shape: f32[128,128], index: 15, kind: output, shape index: {}]
  %s16 = sld [smem:[#allocation0]]
  $region78: #{tpu_custom_call.1} parent=0
    _
  %s18 = ssub.s32 1, %s16
  %s19 = scalar_select 0, %s18, %s16
  $region1: #{tpu_custom_call.1} parent=0
    #allocation2 [shape = 'u8[32768]{0}', space=vmem, size = 0x8000, scoped, tag = 'input window, operand 7, single buffered']
    #allocation3 [shape = 's32[1]{0}', space=sflag, size = 0x4, scoped, tag = 'scoped memory for tpu_custom_call.1']
    #allocation4 [shape = 's32[1]{0}', space=sflag, size = 0x4, scoped, tag = 'scoped memory for tpu_custom_call.1']
    #allocation5 [shape = 'u8[32768]{0}', space=vmem, size = 0x8000, scoped, tag = 'input window, operand 11, single buffered']
    #allocation6 [shape = 's32[1]{0}', space=sflag, size = 0x4, scoped, tag = 'scoped memory for tpu_custom_call.1']
    #allocation7 [shape = 'u8[65536]{0}', space=vmem, size = 0x10000, scoped, tag = 'output window, operand 0, single buffered']
    %20 = vsyncpa [#allocation3], 0
    %21 = vsyncpa [#allocation6], 0
    %22 = vsyncpa [#allocation4], 0
    // Predicated region
    $region2: #{tpu_custom_call.1} parent=1 // pred_check
      _
    $region3: #{tpu_custom_call.1} parent=1 // pred_check_branch
      %24 = sbr.rel (0) target = $region5
    $region4: #{tpu_custom_call.1} parent=1 // pred_region
      _
    $region5: #{tpu_custom_call.1} parent=1 // pred_fallthru
      _
    // Predicated region
    $region6: #{tpu_custom_call.1} parent=1 // pred_check
      _
    $region7: #{tpu_custom_call.1} parent=1 // pred_check_branch
      %26 = sbr.rel (0) target = $region9
    $region8: #{tpu_custom_call.1} parent=1 // pred_region
      _
    $region9: #{tpu_custom_call.1} parent=1 // pred_fallthru
      _
    // Predicated region
    $region10: #{tpu_custom_call.1} parent=1 // pred_check
      _
    $region11: #{tpu_custom_call.1} parent=1 // pred_check_branch
      %28 = sbr.rel (0) target = $region13
    $region12: #{tpu_custom_call.1} parent=1 // pred_region
      _
    $region13: #{tpu_custom_call.1} parent=1 // pred_fallthru
      _
    // Predicated region
    $region14: #{tpu_custom_call.1} parent=1 // pred_check
      _
    $region15: #{tpu_custom_call.1} parent=1 // pred_check_branch
      %30 = sbr.rel (0) target = $region17
    $region16: #{tpu_custom_call.1} parent=1 // pred_region
      _
    $region17: #{tpu_custom_call.1} parent=1 // pred_fallthru
      _
    // Predicated region
    $region18: #{tpu_custom_call.1} parent=1 // pred_check
      _
    $region19: #{tpu_custom_call.1} parent=1 // pred_check_branch
      %32 = sbr.rel (0) target = $region21
    $region20: #{tpu_custom_call.1} parent=1 // pred_region
      _
    $region21: #{tpu_custom_call.1} parent=1 // pred_fallthru
      _
    // Predicated region
    $region22: #{tpu_custom_call.1} parent=1 // pred_check
      _
    $region23: #{tpu_custom_call.1} parent=1 // pred_check_branch
      %34 = sbr.rel (0) target = $region25
    $region24: #{tpu_custom_call.1} parent=1 // pred_region
      _
    $region25: #{tpu_custom_call.1} parent=1 // pred_fallthru
      _
    // Predicated region
    $region26: #{tpu_custom_call.1} parent=1 // pred_check
      _
    $region27: #{tpu_custom_call.1} parent=1 // pred_check_branch
      %36 = sbr.rel (0) target = $region29
    $region28: #{tpu_custom_call.1} parent=1 // pred_region
      _
    $region29: #{tpu_custom_call.1} parent=1 // pred_fallthru
      _
    // Predicated region
    $region30: #{tpu_custom_call.1} parent=1 // pred_check
      _
    $region31: #{tpu_custom_call.1} parent=1 // pred_check_branch
      %38 = sbr.rel (0) target = $region33
    $region32: #{tpu_custom_call.1} parent=1 // pred_region
      %s40 = ssub.s32 1024, 1024
      %41 = vsyncadd [#allocation3], %s40
      %s42 = sshll.u32 [#allocation2], 4
      %s43 = int_to_ptr.vmem [resolvable:$true] %s42
      %48 = dma.hbm_to_vmem [thread:$0]  %s7, 1024, %s43, [#allocation3], 64, 64, 4
    $region33: #{tpu_custom_call.1} parent=1 // pred_fallthru
      _
    // Predicated region
    $region34: #{tpu_custom_call.1} parent=1 // pred_check
      _
    $region35: #{tpu_custom_call.1} parent=1 // pred_check_branch
      %50 = sbr.rel (0) target = $region37
    $region36: #{tpu_custom_call.1} parent=1 // pred_region
      _
    $region37: #{tpu_custom_call.1} parent=1 // pred_fallthru
      _
    // Predicated region
    $region38: #{tpu_custom_call.1} parent=1 // pred_check
      _
    $region39: #{tpu_custom_call.1} parent=1 // pred_check_branch
      %52 = sbr.rel (0) target = $region41
    $region40: #{tpu_custom_call.1} parent=1 // pred_region
      _
    $region41: #{tpu_custom_call.1} parent=1 // pred_fallthru
      _
    // Predicated region
    $region42: #{tpu_custom_call.1} parent=1 // pred_check
      _
    $region43: #{tpu_custom_call.1} parent=1 // pred_check_branch
      %54 = sbr.rel (0) target = $region45
    $region44: #{tpu_custom_call.1} parent=1 // pred_region
      _
    $region45: #{tpu_custom_call.1} parent=1 // pred_fallthru
      _
    // Predicated region
    $region46: #{tpu_custom_call.1} parent=1 // pred_check
      _
    $region47: #{tpu_custom_call.1} parent=1 // pred_check_branch
      %56 = sbr.rel (0) target = $region49
    $region48: #{tpu_custom_call.1} parent=1 // pred_region
      %s58 = ssub.s32 1024, 1024
      %59 = vsyncadd [#allocation6], %s58
      %s60 = sshll.u32 [#allocation5], 4
      %s61 = int_to_ptr.vmem [resolvable:$true] %s60
      %66 = dma.hbm_to_vmem [thread:$0]  %s11, 1024, %s61, [#allocation6], 64, 64, 4
    $region49: #{tpu_custom_call.1} parent=1 // pred_fallthru
      _
    // Predicated region
    $region50: #{tpu_custom_call.1} parent=1 // pred_check
      _
    $region51: #{tpu_custom_call.1} parent=1 // pred_check_branch
      %68 = sbr.rel (0) target = $region53
    $region52: #{tpu_custom_call.1} parent=1 // pred_region
      _
    $region53: #{tpu_custom_call.1} parent=1 // pred_fallthru
      _
    // Predicated region
    $region54: #{tpu_custom_call.1} parent=1 // pred_check
      _
    $region55: #{tpu_custom_call.1} parent=1 // pred_check_branch
      %70 = sbr.rel (0) target = $region57
    $region56: #{tpu_custom_call.1} parent=1 // pred_region
      _
    $region57: #{tpu_custom_call.1} parent=1 // pred_fallthru
      _
    // Predicated region
    $region58: #{tpu_custom_call.1} parent=1 // pred_check
      _
    $region59: #{tpu_custom_call.1} parent=1 // pred_check_branch
      %72 = sbr.rel (0) target = $region61
    $region60: #{tpu_custom_call.1} parent=1 // pred_region
      _
    $region61: #{tpu_custom_call.1} parent=1 // pred_fallthru
      _
    // Predicated region
    $region62: #{tpu_custom_call.1} parent=1 // pred_check
      _
    $region63: #{tpu_custom_call.1} parent=1 // pred_check_branch
      %74 = sbr.rel (0) target = $region65
    $region64: #{tpu_custom_call.1} parent=1 // pred_region
      %75 = dma.done [#allocation3], 1024
    $region65: #{tpu_custom_call.1} parent=1 // pred_fallthru
      _
    // Predicated region
    $region66: #{tpu_custom_call.1} parent=1 // pred_check
      _
    $region67: #{tpu_custom_call.1} parent=1 // pred_check_branch
      %77 = sbr.rel (0) target = $region69
    $region68: #{tpu_custom_call.1} parent=1 // pred_region
      %78 = dma.done [#allocation6], 1024
    $region69: #{tpu_custom_call.1} parent=1 // pred_fallthru
      _
    %v80 = vld [vmem:[%s0] sm:$0xff]
    %v81 = vld [vmem:[%s0 + $0x8] sm:$0xff]
    %v82 = vld [vmem:[%s0 + $0x10] sm:$0xff]
    %v83 = vld [vmem:[%s0 + $0x18] sm:$0xff]
    %v84 = vld [vmem:[%s0 + $0x20] sm:$0xff]
    %v85 = vld [vmem:[%s0 + $0x28] sm:$0xff]
    %v86 = vld [vmem:[%s0 + $0x30] sm:$0xff]
    %v87 = vld [vmem:[%s0 + $0x38] sm:$0xff]
    %v88 = vld [vmem:[%s0 + $0x40] sm:$0xff]
    %v89 = vld [vmem:[%s0 + $0x48] sm:$0xff]
    %v90 = vld [vmem:[%s0 + $0x50] sm:$0xff]
    %v91 = vld [vmem:[%s0 + $0x58] sm:$0xff]
    %v92 = vld [vmem:[%s0 + $0x60] sm:$0xff]
    %v93 = vld [vmem:[%s0 + $0x68] sm:$0xff]
    %v94 = vld [vmem:[%s0 + $0x70] sm:$0xff]
    %v95 = vld [vmem:[%s0 + $0x78] sm:$0xff]
    %v96 = vpack.c.bf16 %v81, %v80
    %v97 = vpack.c.bf16 %v83, %v82
    %v98 = vpack.c.bf16 %v85, %v84
    %v99 = vpack.c.bf16 %v87, %v86
    %v100 = vpack.c.bf16 %v89, %v88
    %v101 = vpack.c.bf16 %v91, %v90
    %v102 = vpack.c.bf16 %v93, %v92
    %v103 = vpack.c.bf16 %v95, %v94
    %v104 = vld [vmem:[%s1] sm:$0x3]
    %vm105 = vcmask 31744
    %v107 = vsel %vm105, %v96, 0
    %v110 = vsel %vm105, %v97, 0
    %v113 = vsel %vm105, %v98, 0
    %v116 = vsel %vm105, %v99, 0
    %v119 = vsel %vm105, %v100, 0
    %v122 = vsel %vm105, %v101, 0
    %v125 = vsel %vm105, %v102, 0
    %v128 = vsel %vm105, %v103, 0
    %vm130 = vcmask 1041408
    %v132 = vsel %vm130, %v104, 0
    %134 = vmatprep.subr.bf16.mxu0 0
    %135 = vmatpush1.bf16.msra.mxu0 %v132
    %136 = vmatprep.subr.bf16.mxu0 0
    %137 = vmatpush1.bf16.msra.mxu0 0
    %138 = vmatprep.subr.bf16.mxu0 0
    %139 = vmatpush1.bf16.msra.mxu0 0
    %140 = vmatprep.subr.bf16.mxu0 0
    %141 = vmatpush1.bf16.msra.mxu0 0
    %142 = vmatprep.subr.bf16.mxu0 0
    %143 = vmatpush1.bf16.msra.mxu0 0
    %144 = vmatprep.subr.bf16.mxu0 0
    %145 = vmatpush1.bf16.msra.mxu0 0
    %146 = vmatprep.subr.bf16.mxu0 0
    %147 = vmatpush1.bf16.msra.mxu0 0
    %148 = vmatprep.subr.bf16.mxu0 0
    %149 = vmatpush1.bf16.msra.mxu0 0
    %150 = vmatprep.subr.bf16.mxu0 0
    %151 = vmatpush1.bf16.msra.mxu0 0
    %152 = vmatprep.subr.bf16.mxu0 0
    %153 = vmatpush1.bf16.msra.mxu0 0
    %154 = vmatprep.subr.bf16.mxu0 0
    %155 = vmatpush1.bf16.msra.mxu0 0
    %156 = vmatprep.subr.bf16.mxu0 0
    %157 = vmatpush1.bf16.msra.mxu0 0
    %158 = vmatprep.subr.bf16.mxu0 0
    %159 = vmatpush1.bf16.msra.mxu0 0
    %160 = vmatprep.subr.bf16.mxu0 0
    %161 = vmatpush1.bf16.msra.mxu0 0
    %162 = vmatprep.subr.bf16.mxu0 0
    %163 = vmatpush1.bf16.msra.mxu0 0
    %164 = vmatprep.subr.bf16.mxu0 0
    %165 = vmatpush1.bf16.msra.mxu0 0
    %166 = vmatprep.mubr.bf16.mxu0 0
    %167 = vmatmul.mubr.bf16.gmra.mrb[0].mxu0 %v107
    %v168 = vpop.f32.mrb[0].mxu0
    %v169 = vadd.f32 0.0, %v168
    %v170 = vpop.f32.mrb[0].mxu0
    %v171 = vpop.f32.mrb[0].mxu0
    %v172 = vadd.f32 0.0, %v171
    %v173 = vpop.f32.mrb[0].mxu0
    %174 = vmatprep.mubr.bf16.mxu0 0
    %175 = vmatmul.mubr.bf16.gmra.mrb[0].mxu0 %v110
    %v176 = vpop.f32.mrb[0].mxu0
    %v177 = vadd.f32 0.0, %v176
    %v178 = vpop.f32.mrb[0].mxu0
    %v179 = vpop.f32.mrb[0].mxu0
    %v180 = vadd.f32 0.0, %v179
    %v181 = vpop.f32.mrb[0].mxu0
    %182 = vmatprep.mubr.bf16.mxu0 0
    %183 = vmatmul.mubr.bf16.gmra.mrb[0].mxu0 %v113
    %v184 = vpop.f32.mrb[0].mxu0
    %v185 = vadd.f32 0.0, %v184
    %v186 = vpop.f32.mrb[0].mxu0
    %v187 = vpop.f32.mrb[0].mxu0
    %v188 = vadd.f32 0.0, %v187
    %v189 = vpop.f32.mrb[0].mxu0
    %190 = vmatprep.mubr.bf16.mxu0 0
    %191 = vmatmul.mubr.bf16.gmra.mrb[0].mxu0 %v116
    %v192 = vpop.f32.mrb[0].mxu0
    %v193 = vadd.f32 0.0, %v192
    %v194 = vpop.f32.mrb[0].mxu0
    %v195 = vpop.f32.mrb[0].mxu0
    %v196 = vadd.f32 0.0, %v195
    %v197 = vpop.f32.mrb[0].mxu0
    %198 = vmatprep.mubr.bf16.mxu0 0
    %199 = vmatmul.mubr.bf16.gmra.mrb[0].mxu0 %v119
    %v200 = vpop.f32.mrb[0].mxu0
    %v201 = vadd.f32 0.0, %v200
    %v202 = vpop.f32.mrb[0].mxu0
    %v203 = vpop.f32.mrb[0].mxu0
    %v204 = vadd.f32 0.0, %v203
    %v205 = vpop.f32.mrb[0].mxu0
    %206 = vmatprep.mubr.bf16.mxu0 0
    %207 = vmatmul.mubr.bf16.gmra.mrb[0].mxu0 %v122
    %v208 = vpop.f32.mrb[0].mxu0
    %v209 = vadd.f32 0.0, %v208
    %v210 = vpop.f32.mrb[0].mxu0
    %v211 = vpop.f32.mrb[0].mxu0
    %v212 = vadd.f32 0.0, %v211
    %v213 = vpop.f32.mrb[0].mxu0
    %214 = vmatprep.mubr.bf16.mxu0 0
    %215 = vmatmul.mubr.bf16.gmra.mrb[0].mxu0 %v125
    %v216 = vpop.f32.mrb[0].mxu0
    %v217 = vadd.f32 0.0, %v216
    %v218 = vpop.f32.mrb[0].mxu0
    %v219 = vpop.f32.mrb[0].mxu0
    %v220 = vadd.f32 0.0, %v219
    %v221 = vpop.f32.mrb[0].mxu0
    %222 = vmatprep.mubr.bf16.mxu0 0
    %223 = vmatmul.mubr.bf16.gmra.mrb[0].mxu0 %v128
    %v224 = vpop.f32.mrb[0].mxu0
    %v225 = vadd.f32 0.0, %v224
    %v226 = vpop.f32.mrb[0].mxu0
    %v227 = vpop.f32.mrb[0].mxu0
    %v228 = vadd.f32 0.0, %v227
    %v229 = vpop.f32.mrb[0].mxu0
    %230 = vdwg.mxu0
    %v231 = vand.u32 2147483647, %v169
    %vm232 = vcmp.le.f32.partialorder %v231, 0.7853982
    %vm233 = vcmp.lt.s32.totalorder %v169, 0
    %v234 = vand.u32 %v169, 2139095040
    %v235 = vshrl.u32 %v234, 23
    %v236 = vsub.s32 %v235, 127
    %v237 = vand.u32 2147483647, %v169
    %v238 = vand.u32 %v237, 8388607
    %v239 = vor.u32 %v238, 8388608
    %v240 = vsub.s32 0, %v239
    %v241 = vadd.s32 %v236, 1
    %vm242 = vcmp.gt.s32.totalorder %v241, 0
    %v243 = vsel %vm242, %v241, 0
    %v244 = vshrl.u32 %v243, 5
    %v245 = vand.u32 %v243, 31
    %v246 = vsub.s32 32, %v245
    %v247 = vshrl.u32 683565275, %v246
    %v248 = vshll.u32 683565275, %v245
    %v249 = vshrl.u32 2475754826, %v246
    %v250 = vor.u32 %v248, %v249
    %v251 = vshll.u32 2475754826, %v245
    %v252 = vshrl.u32 2131351028, %v246
    %v253 = vor.u32 %v251, %v252
    %v254 = vshll.u32 2131351028, %v245
    %v255 = vshrl.u32 2102212464, %v246
    %v256 = vor.u32 %v254, %v255
    %v257 = vshll.u32 2102212464, %v245
    %v258 = vshrl.u32 920167782, %v246
    %v259 = vor.u32 %v257, %v258
    %v260 = vshll.u32 920167782, %v245
    %v261 = vshrl.u32 1326507024, %v246
    %v262 = vor.u32 %v260, %v261
    %vm263 = vcmp.lt.s32.totalorder %v244, 1
    %vm264 = vcmp.lt.s32.totalorder %v244, 2
    %vm265 = vcmp.lt.s32.totalorder %v244, 3
    %vm266 = vcmp.lt.s32.totalorder %v244, 4
    %v267 = vsel %vm263, %v247, %v250
    %v268 = vsel %vm266, %v256, 2102212464
    %v269 = vsel %vm265, %v253, %v268
    %v270 = vsel %vm264, %v267, %v269
    %v271 = vsel %vm263, %v250, %v253
    %v272 = vsel %vm266, %v259, 920167782
    %v273 = vsel %vm265, %v256, %v272
    %v274 = vsel %vm264, %v271, %v273
    %v275 = vsel %vm263, %v253, %v256
    %v276 = vsel %vm266, %v262, 1326507024
    %v277 = vsel %vm265, %v259, %v276
    %v278 = vsel %vm264, %v275, %v277
    %v279 = vshll.u32 %v239, 8
    %v280 = vmul.u32.u64.compose %v279, %v278
    %v281 = vextract.low.u32 %v280
    %v282 = vextract.high.u32 %v280
    %v283 = vmul.u32.u64.compose %v279, %v274
    %v284 = vextract.low.u32 %v283
    %v285 = vextract.high.u32 %v283
    %v286 = vmul.u32 %v279, %v270
    %v287 = vadd.s32 %v282, %v284
    %vm288 = vc.u32 %v282, %v284
    %v289 = vadd.s32 %v285, 1
    %v290 = vsel %vm288, %v289, %v285
    %v291 = vadd.s32 %v286, %v290
    %v292 = vadd.s32 %v291, 536870912
    %v293 = vshrl.u32 %v292, 30
    %v294 = vshll.u32 %v293, 30
    %v295 = vsub.s32 %v291, %v294
    %vm296 = vcmp.lt.s32.totalorder %v295, 0
    %v297 = vsub.s32 0, %v295
    %v298 = vsel %vm296, %v297, %v295
    %v299 = vclz %v298
    %v300 = vsub.s32 %v299, 2
    %vm301 = vcmp.gt.s32.totalorder 0, %v300
    %v302 = vsel %vm301, 0, %v300
    %v303 = vsub.s32 32, %v302
    %v304 = vshll.u32 %v295, %v302
    %v305 = vshrl.u32 %v287, %v303
    %v306 = vor.u32 %v304, %v305
    %v307 = vsub.s32 4294967266, %v302
    %v308 = vadd.s32 %v307, 127
    %v309 = vshll.u32 %v308, 23
    %v310 = vor.u32 4788187, %v309
    %v311 = vand.u32 2147483647, %v310
    %v313 = vcvt.s32.f32 %v306
    %v314 = vmul.f32 %v313, %v311
    %v315 = vxor.u32 %v314, 2147483648
    %v316 = vsel %vm233, %v315, %v314
    %v317 = vsub.s32 4, %v293
    %v318 = vsel %vm233, %v317, %v293
    %v319 = vsel %vm232, %v169, %v316
    %v320 = vsel %vm232, 0, %v318
    %v321 = vcosq.f32.pop %v319
    %v322 = vsinq.f32.pop %v319
    %vm323 = vweird.f32 %v169
    %v324 = vadd.s32 %v320, 3
    %v325 = vand.u32 %v324, 3
    %vm326 = vcmp.lt.s32.totalorder %v325, 2
    %vm327 = vcmp.eq.s32.totalorder %v325, 0
    %v328 = vxor.u32 %v322, 2147483648
    %v329 = vsel %vm327, %v321, %v328
    %vm330 = vcmp.eq.s32.totalorder %v325, 2
    %v331 = vxor.u32 %v321, 2147483648
    %v332 = vsel %vm330, %v331, %v322
    %v333 = vsel %vm326, %v329, %v332
    %v334 = vsel %vm323, nan, %v333
    %v335 = vand.u32 2147483647, %v172
    %vm336 = vcmp.le.f32.partialorder %v335, 0.7853982
    %vm337 = vcmp.lt.s32.totalorder %v172, 0
    %v338 = vand.u32 %v172, 2139095040
    %v339 = vshrl.u32 %v338, 23
    %v340 = vsub.s32 %v339, 127
    %v341 = vand.u32 2147483647, %v172
    %v342 = vand.u32 %v341, 8388607
    %v343 = vor.u32 %v342, 8388608
    %v344 = vsub.s32 0, %v343
    %v345 = vadd.s32 %v340, 1
    %vm346 = vcmp.gt.s32.totalorder %v345, 0
    %v347 = vsel %vm346, %v345, 0
    %v348 = vshrl.u32 %v347, 5
    %v349 = vand.u32 %v347, 31
    %v350 = vsub.s32 32, %v349
    %v351 = vshrl.u32 683565275, %v350
    %v352 = vshll.u32 683565275, %v349
    %v353 = vshrl.u32 2475754826, %v350
    %v354 = vor.u32 %v352, %v353
    %v355 = vshll.u32 2475754826, %v349
    %v356 = vshrl.u32 2131351028, %v350
    %v357 = vor.u32 %v355, %v356
    %v358 = vshll.u32 2131351028, %v349
    %v359 = vshrl.u32 2102212464, %v350
    %v360 = vor.u32 %v358, %v359
    %v361 = vshll.u32 2102212464, %v349
    %v362 = vshrl.u32 920167782, %v350
    %v363 = vor.u32 %v361, %v362
    %v364 = vshll.u32 920167782, %v349
    %v365 = vshrl.u32 1326507024, %v350
    %v366 = vor.u32 %v364, %v365
    %vm367 = vcmp.lt.s32.totalorder %v348, 1
    %vm368 = vcmp.lt.s32.totalorder %v348, 2
    %vm369 = vcmp.lt.s32.totalorder %v348, 3
    %vm370 = vcmp.lt.s32.totalorder %v348, 4
    %v371 = vsel %vm367, %v351, %v354
    %v372 = vsel %vm370, %v360, 2102212464
    %v373 = vsel %vm369, %v357, %v372
    %v374 = vsel %vm368, %v371, %v373
    %v375 = vsel %vm367, %v354, %v357
    %v376 = vsel %vm370, %v363, 920167782
    %v377 = vsel %vm369, %v360, %v376
    %v378 = vsel %vm368, %v375, %v377
    %v379 = vsel %vm367, %v357, %v360
    %v380 = vsel %vm370, %v366, 1326507024
    %v381 = vsel %vm369, %v363, %v380
    %v382 = vsel %vm368, %v379, %v381
    %v383 = vshll.u32 %v343, 8
    %v384 = vmul.u32.u64.compose %v383, %v382
    %v385 = vextract.low.u32 %v384
    %v386 = vextract.high.u32 %v384
    %v387 = vmul.u32.u64.compose %v383, %v378
    %v388 = vextract.low.u32 %v387
    %v389 = vextract.high.u32 %v387
    %v390 = vmul.u32 %v383, %v374
    %v391 = vadd.s32 %v386, %v388
    %vm392 = vc.u32 %v386, %v388
    %v393 = vadd.s32 %v389, 1
    %v394 = vsel %vm392, %v393, %v389
    %v395 = vadd.s32 %v390, %v394
    %v396 = vadd.s32 %v395, 536870912
    %v397 = vshrl.u32 %v396, 30
    %v398 = vshll.u32 %v397, 30
    %v399 = vsub.s32 %v395, %v398
    %vm400 = vcmp.lt.s32.totalorder %v399, 0
    %v401 = vsub.s32 0, %v399
    %v402 = vsel %vm400, %v401, %v399
    %v403 = vclz %v402
    %v404 = vsub.s32 %v403, 2
    %vm405 = vcmp.gt.s32.totalorder 0, %v404
    %v406 = vsel %vm405, 0, %v404
    %v407 = vsub.s32 32, %v406
    %v408 = vshll.u32 %v399, %v406
    %v409 = vshrl.u32 %v391, %v407
    %v410 = vor.u32 %v408, %v409
    %v411 = vsub.s32 4294967266, %v406
    %v412 = vadd.s32 %v411, 127
    %v413 = vshll.u32 %v412, 23
    %v414 = vor.u32 4788187, %v413
    %v415 = vand.u32 2147483647, %v414
    %v417 = vcvt.s32.f32 %v410
    %v418 = vmul.f32 %v417, %v415
    %v419 = vxor.u32 %v418, 2147483648
    %v420 = vsel %vm337, %v419, %v418
    %v421 = vsub.s32 4, %v397
    %v422 = vsel %vm337, %v421, %v397
    %v423 = vsel %vm336, %v172, %v420
    %v424 = vsel %vm336, 0, %v422
    %v425 = vcosq.f32.pop %v423
    %v426 = vsinq.f32.pop %v423
    %vm427 = vweird.f32 %v172
    %v428 = vadd.s32 %v424, 3
    %v429 = vand.u32 %v428, 3
    %vm430 = vcmp.lt.s32.totalorder %v429, 2
    %vm431 = vcmp.eq.s32.totalorder %v429, 0
    %v432 = vxor.u32 %v426, 2147483648
    %v433 = vsel %vm431, %v425, %v432
    %vm434 = vcmp.eq.s32.totalorder %v429, 2
    %v435 = vxor.u32 %v425, 2147483648
    %v436 = vsel %vm434, %v435, %v426
    %v437 = vsel %vm430, %v433, %v436
    %v438 = vsel %vm427, nan, %v437
    %v439 = vand.u32 2147483647, %v177
    %vm440 = vcmp.le.f32.partialorder %v439, 0.7853982
    %vm441 = vcmp.lt.s32.totalorder %v177, 0
    %v442 = vand.u32 %v177, 2139095040
    %v443 = vshrl.u32 %v442, 23
    %v444 = vsub.s32 %v443, 127
    %v445 = vand.u32 2147483647, %v177
    %v446 = vand.u32 %v445, 8388607
    %v447 = vor.u32 %v446, 8388608
    %v448 = vsub.s32 0, %v447
    %v449 = vadd.s32 %v444, 1
    %vm450 = vcmp.gt.s32.totalorder %v449, 0
    %v451 = vsel %vm450, %v449, 0
    %v452 = vshrl.u32 %v451, 5
    %v453 = vand.u32 %v451, 31
    %v454 = vsub.s32 32, %v453
    %v455 = vshrl.u32 683565275, %v454
    %v456 = vshll.u32 683565275, %v453
    %v457 = vshrl.u32 2475754826, %v454
    %v458 = vor.u32 %v456, %v457
    %v459 = vshll.u32 2475754826, %v453
    %v460 = vshrl.u32 2131351028, %v454
    %v461 = vor.u32 %v459, %v460
    %v462 = vshll.u32 2131351028, %v453
    %v463 = vshrl.u32 2102212464, %v454
    %v464 = vor.u32 %v462, %v463
    %v465 = vshll.u32 2102212464, %v453
    %v466 = vshrl.u32 920167782, %v454
    %v467 = vor.u32 %v465, %v466
    %v468 = vshll.u32 920167782, %v453
    %v469 = vshrl.u32 1326507024, %v454
    %v470 = vor.u32 %v468, %v469
    %vm471 = vcmp.lt.s32.totalorder %v452, 1
    %vm472 = vcmp.lt.s32.totalorder %v452, 2
    %vm473 = vcmp.lt.s32.totalorder %v452, 3
    %vm474 = vcmp.lt.s32.totalorder %v452, 4
    %v475 = vsel %vm471, %v455, %v458
    %v476 = vsel %vm474, %v464, 2102212464
    %v477 = vsel %vm473, %v461, %v476
    %v478 = vsel %vm472, %v475, %v477
    %v479 = vsel %vm471, %v458, %v461
    %v480 = vsel %vm474, %v467, 920167782
    %v481 = vsel %vm473, %v464, %v480
    %v482 = vsel %vm472, %v479, %v481
    %v483 = vsel %vm471, %v461, %v464
    %v484 = vsel %vm474, %v470, 1326507024
    %v485 = vsel %vm473, %v467, %v484
    %v486 = vsel %vm472, %v483, %v485
    %v487 = vshll.u32 %v447, 8
    %v488 = vmul.u32.u64.compose %v487, %v486
    %v489 = vextract.low.u32 %v488
    %v490 = vextract.high.u32 %v488
    %v491 = vmul.u32.u64.compose %v487, %v482
    %v492 = vextract.low.u32 %v491
    %v493 = vextract.high.u32 %v491
    %v494 = vmul.u32 %v487, %v478
    %v495 = vadd.s32 %v490, %v492
    %vm496 = vc.u32 %v490, %v492
    %v497 = vadd.s32 %v493, 1
    %v498 = vsel %vm496, %v497, %v493
    %v499 = vadd.s32 %v494, %v498
    %v500 = vadd.s32 %v499, 536870912
    %v501 = vshrl.u32 %v500, 30
    %v502 = vshll.u32 %v501, 30
    %v503 = vsub.s32 %v499, %v502
    %vm504 = vcmp.lt.s32.totalorder %v503, 0
    %v505 = vsub.s32 0, %v503
    %v506 = vsel %vm504, %v505, %v503
    %v507 = vclz %v506
    %v508 = vsub.s32 %v507, 2
    %vm509 = vcmp.gt.s32.totalorder 0, %v508
    %v510 = vsel %vm509, 0, %v508
    %v511 = vsub.s32 32, %v510
    %v512 = vshll.u32 %v503, %v510
    %v513 = vshrl.u32 %v495, %v511
    %v514 = vor.u32 %v512, %v513
    %v515 = vsub.s32 4294967266, %v510
    %v516 = vadd.s32 %v515, 127
    %v517 = vshll.u32 %v516, 23
    %v518 = vor.u32 4788187, %v517
    %v519 = vand.u32 2147483647, %v518
    %v521 = vcvt.s32.f32 %v514
    %v522 = vmul.f32 %v521, %v519
    %v523 = vxor.u32 %v522, 2147483648
    %v524 = vsel %vm441, %v523, %v522
    %v525 = vsub.s32 4, %v501
    %v526 = vsel %vm441, %v525, %v501
    %v527 = vsel %vm440, %v177, %v524
    %v528 = vsel %vm440, 0, %v526
    %v529 = vcosq.f32.pop %v527
    %v530 = vsinq.f32.pop %v527
    %vm531 = vweird.f32 %v177
    %v532 = vadd.s32 %v528, 3
    %v533 = vand.u32 %v532, 3
    %vm534 = vcmp.lt.s32.totalorder %v533, 2
    %vm535 = vcmp.eq.s32.totalorder %v533, 0
    %v536 = vxor.u32 %v530, 2147483648
    %v537 = vsel %vm535, %v529, %v536
    %vm538 = vcmp.eq.s32.totalorder %v533, 2
    %v539 = vxor.u32 %v529, 2147483648
    %v540 = vsel %vm538, %v539, %v530
    %v541 = vsel %vm534, %v537, %v540
    %v542 = vsel %vm531, nan, %v541
    %v543 = vand.u32 2147483647, %v180
    %vm544 = vcmp.le.f32.partialorder %v543, 0.7853982
    %vm545 = vcmp.lt.s32.totalorder %v180, 0
    %v546 = vand.u32 %v180, 2139095040
    %v547 = vshrl.u32 %v546, 23
    %v548 = vsub.s32 %v547, 127
    %v549 = vand.u32 2147483647, %v180
    %v550 = vand.u32 %v549, 8388607
    %v551 = vor.u32 %v550, 8388608
    %v552 = vsub.s32 0, %v551
    %v553 = vadd.s32 %v548, 1
    %vm554 = vcmp.gt.s32.totalorder %v553, 0
    %v555 = vsel %vm554, %v553, 0
    %v556 = vshrl.u32 %v555, 5
    %v557 = vand.u32 %v555, 31
    %v558 = vsub.s32 32, %v557
    %v559 = vshrl.u32 683565275, %v558
    %v560 = vshll.u32 683565275, %v557
    %v561 = vshrl.u32 2475754826, %v558
    %v562 = vor.u32 %v560, %v561
    %v563 = vshll.u32 2475754826, %v557
    %v564 = vshrl.u32 2131351028, %v558
    %v565 = vor.u32 %v563, %v564
    %v566 = vshll.u32 2131351028, %v557
    %v567 = vshrl.u32 2102212464, %v558
    %v568 = vor.u32 %v566, %v567
    %v569 = vshll.u32 2102212464, %v557
    %v570 = vshrl.u32 920167782, %v558
    %v571 = vor.u32 %v569, %v570
    %v572 = vshll.u32 920167782, %v557
    %v573 = vshrl.u32 1326507024, %v558
    %v574 = vor.u32 %v572, %v573
    %vm575 = vcmp.lt.s32.totalorder %v556, 1
    %vm576 = vcmp.lt.s32.totalorder %v556, 2
    %vm577 = vcmp.lt.s32.totalorder %v556, 3
    %vm578 = vcmp.lt.s32.totalorder %v556, 4
    %v579 = vsel %vm575, %v559, %v562
    %v580 = vsel %vm578, %v568, 2102212464
    %v581 = vsel %vm577, %v565, %v580
    %v582 = vsel %vm576, %v579, %v581
    %v583 = vsel %vm575, %v562, %v565
    %v584 = vsel %vm578, %v571, 920167782
    %v585 = vsel %vm577, %v568, %v584
    %v586 = vsel %vm576, %v583, %v585
    %v587 = vsel %vm575, %v565, %v568
    %v588 = vsel %vm578, %v574, 1326507024
    %v589 = vsel %vm577, %v571, %v588
    %v590 = vsel %vm576, %v587, %v589
    %v591 = vshll.u32 %v551, 8
    %v592 = vmul.u32.u64.compose %v591, %v590
    %v593 = vextract.low.u32 %v592
    %v594 = vextract.high.u32 %v592
    %v595 = vmul.u32.u64.compose %v591, %v586
    %v596 = vextract.low.u32 %v595
    %v597 = vextract.high.u32 %v595
    %v598 = vmul.u32 %v591, %v582
    %v599 = vadd.s32 %v594, %v596
    %vm600 = vc.u32 %v594, %v596
    %v601 = vadd.s32 %v597, 1
    %v602 = vsel %vm600, %v601, %v597
    %v603 = vadd.s32 %v598, %v602
    %v604 = vadd.s32 %v603, 536870912
    %v605 = vshrl.u32 %v604, 30
    %v606 = vshll.u32 %v605, 30
    %v607 = vsub.s32 %v603, %v606
    %vm608 = vcmp.lt.s32.totalorder %v607, 0
    %v609 = vsub.s32 0, %v607
    %v610 = vsel %vm608, %v609, %v607
    %v611 = vclz %v610
    %v612 = vsub.s32 %v611, 2
    %vm613 = vcmp.gt.s32.totalorder 0, %v612
    %v614 = vsel %vm613, 0, %v612
    %v615 = vsub.s32 32, %v614
    %v616 = vshll.u32 %v607, %v614
    %v617 = vshrl.u32 %v599, %v615
    %v618 = vor.u32 %v616, %v617
    %v619 = vsub.s32 4294967266, %v614
    %v620 = vadd.s32 %v619, 127
    %v621 = vshll.u32 %v620, 23
    %v622 = vor.u32 4788187, %v621
    %v623 = vand.u32 2147483647, %v622
    %v625 = vcvt.s32.f32 %v618
    %v626 = vmul.f32 %v625, %v623
    %v627 = vxor.u32 %v626, 2147483648
    %v628 = vsel %vm545, %v627, %v626
    %v629 = vsub.s32 4, %v605
    %v630 = vsel %vm545, %v629, %v605
    %v631 = vsel %vm544, %v180, %v628
    %v632 = vsel %vm544, 0, %v630
    %v633 = vcosq.f32.pop %v631
    %v634 = vsinq.f32.pop %v631
    %vm635 = vweird.f32 %v180
    %v636 = vadd.s32 %v632, 3
    %v637 = vand.u32 %v636, 3
    %vm638 = vcmp.lt.s32.totalorder %v637, 2
    %vm639 = vcmp.eq.s32.totalorder %v637, 0
    %v640 = vxor.u32 %v634, 2147483648
    %v641 = vsel %vm639, %v633, %v640
    %vm642 = vcmp.eq.s32.totalorder %v637, 2
    %v643 = vxor.u32 %v633, 2147483648
    %v644 = vsel %vm642, %v643, %v634
    %v645 = vsel %vm638, %v641, %v644
    %v646 = vsel %vm635, nan, %v645
    %v647 = vand.u32 2147483647, %v185
    %vm648 = vcmp.le.f32.partialorder %v647, 0.7853982
    %vm649 = vcmp.lt.s32.totalorder %v185, 0
    %v650 = vand.u32 %v185, 2139095040
    %v651 = vshrl.u32 %v650, 23
    %v652 = vsub.s32 %v651, 127
    %v653 = vand.u32 2147483647, %v185
    %v654 = vand.u32 %v653, 8388607
    %v655 = vor.u32 %v654, 8388608
    %v656 = vsub.s32 0, %v655
    %v657 = vadd.s32 %v652, 1
    %vm658 = vcmp.gt.s32.totalorder %v657, 0
    %v659 = vsel %vm658, %v657, 0
    %v660 = vshrl.u32 %v659, 5
    %v661 = vand.u32 %v659, 31
    %v662 = vsub.s32 32, %v661
    %v663 = vshrl.u32 683565275, %v662
    %v664 = vshll.u32 683565275, %v661
    %v665 = vshrl.u32 2475754826, %v662
    %v666 = vor.u32 %v664, %v665
    %v667 = vshll.u32 2475754826, %v661
    %v668 = vshrl.u32 2131351028, %v662
    %v669 = vor.u32 %v667, %v668
    %v670 = vshll.u32 2131351028, %v661
    %v671 = vshrl.u32 2102212464, %v662
    %v672 = vor.u32 %v670, %v671
    %v673 = vshll.u32 2102212464, %v661
    %v674 = vshrl.u32 920167782, %v662
    %v675 = vor.u32 %v673, %v674
    %v676 = vshll.u32 920167782, %v661
    %v677 = vshrl.u32 1326507024, %v662
    %v678 = vor.u32 %v676, %v677
    %vm679 = vcmp.lt.s32.totalorder %v660, 1
    %vm680 = vcmp.lt.s32.totalorder %v660, 2
    %vm681 = vcmp.lt.s32.totalorder %v660, 3
    %vm682 = vcmp.lt.s32.totalorder %v660, 4
    %v683 = vsel %vm679, %v663, %v666
    %v684 = vsel %vm682, %v672, 2102212464
    %v685 = vsel %vm681, %v669, %v684
    %v686 = vsel %vm680, %v683, %v685
    %v687 = vsel %vm679, %v666, %v669
    %v688 = vsel %vm682, %v675, 920167782
    %v689 = vsel %vm681, %v672, %v688
    %v690 = vsel %vm680, %v687, %v689
    %v691 = vsel %vm679, %v669, %v672
    %v692 = vsel %vm682, %v678, 1326507024
    %v693 = vsel %vm681, %v675, %v692
    %v694 = vsel %vm680, %v691, %v693
    %v695 = vshll.u32 %v655, 8
    %v696 = vmul.u32.u64.compose %v695, %v694
    %v697 = vextract.low.u32 %v696
    %v698 = vextract.high.u32 %v696
    %v699 = vmul.u32.u64.compose %v695, %v690
    %v700 = vextract.low.u32 %v699
    %v701 = vextract.high.u32 %v699
    %v702 = vmul.u32 %v695, %v686
    %v703 = vadd.s32 %v698, %v700
    %vm704 = vc.u32 %v698, %v700
    %v705 = vadd.s32 %v701, 1
    %v706 = vsel %vm704, %v705, %v701
    %v707 = vadd.s32 %v702, %v706
    %v708 = vadd.s32 %v707, 536870912
    %v709 = vshrl.u32 %v708, 30
    %v710 = vshll.u32 %v709, 30
    %v711 = vsub.s32 %v707, %v710
    %vm712 = vcmp.lt.s32.totalorder %v711, 0
    %v713 = vsub.s32 0, %v711
    %v714 = vsel %vm712, %v713, %v711
    %v715 = vclz %v714
    %v716 = vsub.s32 %v715, 2
    %vm717 = vcmp.gt.s32.totalorder 0, %v716
    %v718 = vsel %vm717, 0, %v716
    %v719 = vsub.s32 32, %v718
    %v720 = vshll.u32 %v711, %v718
    %v721 = vshrl.u32 %v703, %v719
    %v722 = vor.u32 %v720, %v721
    %v723 = vsub.s32 4294967266, %v718
    %v724 = vadd.s32 %v723, 127
    %v725 = vshll.u32 %v724, 23
    %v726 = vor.u32 4788187, %v725
    %v727 = vand.u32 2147483647, %v726
    %v729 = vcvt.s32.f32 %v722
    %v730 = vmul.f32 %v729, %v727
    %v731 = vxor.u32 %v730, 2147483648
    %v732 = vsel %vm649, %v731, %v730
    %v733 = vsub.s32 4, %v709
    %v734 = vsel %vm649, %v733, %v709
    %v735 = vsel %vm648, %v185, %v732
    %v736 = vsel %vm648, 0, %v734
    %v737 = vcosq.f32.pop %v735
    %v738 = vsinq.f32.pop %v735
    %vm739 = vweird.f32 %v185
    %v740 = vadd.s32 %v736, 3
    %v741 = vand.u32 %v740, 3
    %vm742 = vcmp.lt.s32.totalorder %v741, 2
    %vm743 = vcmp.eq.s32.totalorder %v741, 0
    %v744 = vxor.u32 %v738, 2147483648
    %v745 = vsel %vm743, %v737, %v744
    %vm746 = vcmp.eq.s32.totalorder %v741, 2
    %v747 = vxor.u32 %v737, 2147483648
    %v748 = vsel %vm746, %v747, %v738
    %v749 = vsel %vm742, %v745, %v748
    %v750 = vsel %vm739, nan, %v749
    %v751 = vand.u32 2147483647, %v188
    %vm752 = vcmp.le.f32.partialorder %v751, 0.7853982
    %vm753 = vcmp.lt.s32.totalorder %v188, 0
    %v754 = vand.u32 %v188, 2139095040
    %v755 = vshrl.u32 %v754, 23
    %v756 = vsub.s32 %v755, 127
    %v757 = vand.u32 2147483647, %v188
    %v758 = vand.u32 %v757, 8388607
    %v759 = vor.u32 %v758, 8388608
    %v760 = vsub.s32 0, %v759
    %v761 = vadd.s32 %v756, 1
    %vm762 = vcmp.gt.s32.totalorder %v761, 0
    %v763 = vsel %vm762, %v761, 0
    %v764 = vshrl.u32 %v763, 5
    %v765 = vand.u32 %v763, 31
    %v766 = vsub.s32 32, %v765
    %v767 = vshrl.u32 683565275, %v766
    %v768 = vshll.u32 683565275, %v765
    %v769 = vshrl.u32 2475754826, %v766
    %v770 = vor.u32 %v768, %v769
    %v771 = vshll.u32 2475754826, %v765
    %v772 = vshrl.u32 2131351028, %v766
    %v773 = vor.u32 %v771, %v772
    %v774 = vshll.u32 2131351028, %v765
    %v775 = vshrl.u32 2102212464, %v766
    %v776 = vor.u32 %v774, %v775
    %v777 = vshll.u32 2102212464, %v765
    %v778 = vshrl.u32 920167782, %v766
    %v779 = vor.u32 %v777, %v778
    %v780 = vshll.u32 920167782, %v765
    %v781 = vshrl.u32 1326507024, %v766
    %v782 = vor.u32 %v780, %v781
    %vm783 = vcmp.lt.s32.totalorder %v764, 1
    %vm784 = vcmp.lt.s32.totalorder %v764, 2
    %vm785 = vcmp.lt.s32.totalorder %v764, 3
    %vm786 = vcmp.lt.s32.totalorder %v764, 4
    %v787 = vsel %vm783, %v767, %v770
    %v788 = vsel %vm786, %v776, 2102212464
    %v789 = vsel %vm785, %v773, %v788
    %v790 = vsel %vm784, %v787, %v789
    %v791 = vsel %vm783, %v770, %v773
    %v792 = vsel %vm786, %v779, 920167782
    %v793 = vsel %vm785, %v776, %v792
    %v794 = vsel %vm784, %v791, %v793
    %v795 = vsel %vm783, %v773, %v776
    %v796 = vsel %vm786, %v782, 1326507024
    %v797 = vsel %vm785, %v779, %v796
    %v798 = vsel %vm784, %v795, %v797
    %v799 = vshll.u32 %v759, 8
    %v800 = vmul.u32.u64.compose %v799, %v798
    %v801 = vextract.low.u32 %v800
    %v802 = vextract.high.u32 %v800
    %v803 = vmul.u32.u64.compose %v799, %v794
    %v804 = vextract.low.u32 %v803
    %v805 = vextract.high.u32 %v803
    %v806 = vmul.u32 %v799, %v790
    %v807 = vadd.s32 %v802, %v804
    %vm808 = vc.u32 %v802, %v804
    %v809 = vadd.s32 %v805, 1
    %v810 = vsel %vm808, %v809, %v805
    %v811 = vadd.s32 %v806, %v810
    %v812 = vadd.s32 %v811, 536870912
    %v813 = vshrl.u32 %v812, 30
    %v814 = vshll.u32 %v813, 30
    %v815 = vsub.s32 %v811, %v814
    %vm816 = vcmp.lt.s32.totalorder %v815, 0
    %v817 = vsub.s32 0, %v815
    %v818 = vsel %vm816, %v817, %v815
    %v819 = vclz %v818
    %v820 = vsub.s32 %v819, 2
    %vm821 = vcmp.gt.s32.totalorder 0, %v820
    %v822 = vsel %vm821, 0, %v820
    %v823 = vsub.s32 32, %v822
    %v824 = vshll.u32 %v815, %v822
    %v825 = vshrl.u32 %v807, %v823
    %v826 = vor.u32 %v824, %v825
    %v827 = vsub.s32 4294967266, %v822
    %v828 = vadd.s32 %v827, 127
    %v829 = vshll.u32 %v828, 23
    %v830 = vor.u32 4788187, %v829
    %v831 = vand.u32 2147483647, %v830
    %v833 = vcvt.s32.f32 %v826
    %v834 = vmul.f32 %v833, %v831
    %v835 = vxor.u32 %v834, 2147483648
    %v836 = vsel %vm753, %v835, %v834
    %v837 = vsub.s32 4, %v813
    %v838 = vsel %vm753, %v837, %v813
    %v839 = vsel %vm752, %v188, %v836
    %v840 = vsel %vm752, 0, %v838
    %v841 = vcosq.f32.pop %v839
    %v842 = vsinq.f32.pop %v839
    %vm843 = vweird.f32 %v188
    %v844 = vadd.s32 %v840, 3
    %v845 = vand.u32 %v844, 3
    %vm846 = vcmp.lt.s32.totalorder %v845, 2
    %vm847 = vcmp.eq.s32.totalorder %v845, 0
    %v848 = vxor.u32 %v842, 2147483648
    %v849 = vsel %vm847, %v841, %v848
    %vm850 = vcmp.eq.s32.totalorder %v845, 2
    %v851 = vxor.u32 %v841, 2147483648
    %v852 = vsel %vm850, %v851, %v842
    %v853 = vsel %vm846, %v849, %v852
    %v854 = vsel %vm843, nan, %v853
    %v855 = vand.u32 2147483647, %v193
    %vm856 = vcmp.le.f32.partialorder %v855, 0.7853982
    %vm857 = vcmp.lt.s32.totalorder %v193, 0
    %v858 = vand.u32 %v193, 2139095040
    %v859 = vshrl.u32 %v858, 23
    %v860 = vsub.s32 %v859, 127
    %v861 = vand.u32 2147483647, %v193
    %v862 = vand.u32 %v861, 8388607
    %v863 = vor.u32 %v862, 8388608
    %v864 = vsub.s32 0, %v863
    %v865 = vadd.s32 %v860, 1
    %vm866 = vcmp.gt.s32.totalorder %v865, 0
    %v867 = vsel %vm866, %v865, 0
    %v868 = vshrl.u32 %v867, 5
    %v869 = vand.u32 %v867, 31
    %v870 = vsub.s32 32, %v869
    %v871 = vshrl.u32 683565275, %v870
    %v872 = vshll.u32 683565275, %v869
    %v873 = vshrl.u32 2475754826, %v870
    %v874 = vor.u32 %v872, %v873
    %v875 = vshll.u32 2475754826, %v869
    %v876 = vshrl.u32 2131351028, %v870
    %v877 = vor.u32 %v875, %v876
    %v878 = vshll.u32 2131351028, %v869
    %v879 = vshrl.u32 2102212464, %v870
    %v880 = vor.u32 %v878, %v879
    %v881 = vshll.u32 2102212464, %v869
    %v882 = vshrl.u32 920167782, %v870
    %v883 = vor.u32 %v881, %v882
    %v884 = vshll.u32 920167782, %v869
    %v885 = vshrl.u32 1326507024, %v870
    %v886 = vor.u32 %v884, %v885
    %vm887 = vcmp.lt.s32.totalorder %v868, 1
    %vm888 = vcmp.lt.s32.totalorder %v868, 2
    %vm889 = vcmp.lt.s32.totalorder %v868, 3
    %vm890 = vcmp.lt.s32.totalorder %v868, 4
    %v891 = vsel %vm887, %v871, %v874
    %v892 = vsel %vm890, %v880, 2102212464
    %v893 = vsel %vm889, %v877, %v892
    %v894 = vsel %vm888, %v891, %v893
    %v895 = vsel %vm887, %v874, %v877
    %v896 = vsel %vm890, %v883, 920167782
    %v897 = vsel %vm889, %v880, %v896
    %v898 = vsel %vm888, %v895, %v897
    %v899 = vsel %vm887, %v877, %v880
    %v900 = vsel %vm890, %v886, 1326507024
    %v901 = vsel %vm889, %v883, %v900
    %v902 = vsel %vm888, %v899, %v901
    %v903 = vshll.u32 %v863, 8
    %v904 = vmul.u32.u64.compose %v903, %v902
    %v905 = vextract.low.u32 %v904
    %v906 = vextract.high.u32 %v904
    %v907 = vmul.u32.u64.compose %v903, %v898
    %v908 = vextract.low.u32 %v907
    %v909 = vextract.high.u32 %v907
    %v910 = vmul.u32 %v903, %v894
    %v911 = vadd.s32 %v906, %v908
    %vm912 = vc.u32 %v906, %v908
    %v913 = vadd.s32 %v909, 1
    %v914 = vsel %vm912, %v913, %v909
    %v915 = vadd.s32 %v910, %v914
    %v916 = vadd.s32 %v915, 536870912
    %v917 = vshrl.u32 %v916, 30
    %v918 = vshll.u32 %v917, 30
    %v919 = vsub.s32 %v915, %v918
    %vm920 = vcmp.lt.s32.totalorder %v919, 0
    %v921 = vsub.s32 0, %v919
    %v922 = vsel %vm920, %v921, %v919
    %v923 = vclz %v922
    %v924 = vsub.s32 %v923, 2
    %vm925 = vcmp.gt.s32.totalorder 0, %v924
    %v926 = vsel %vm925, 0, %v924
    %v927 = vsub.s32 32, %v926
    %v928 = vshll.u32 %v919, %v926
    %v929 = vshrl.u32 %v911, %v927
    %v930 = vor.u32 %v928, %v929
    %v931 = vsub.s32 4294967266, %v926
    %v932 = vadd.s32 %v931, 127
    %v933 = vshll.u32 %v932, 23
    %v934 = vor.u32 4788187, %v933
    %v935 = vand.u32 2147483647, %v934
    %v937 = vcvt.s32.f32 %v930
    %v938 = vmul.f32 %v937, %v935
    %v939 = vxor.u32 %v938, 2147483648
    %v940 = vsel %vm857, %v939, %v938
    %v941 = vsub.s32 4, %v917
    %v942 = vsel %vm857, %v941, %v917
    %v943 = vsel %vm856, %v193, %v940
    %v944 = vsel %vm856, 0, %v942
    %v945 = vcosq.f32.pop %v943
    %v946 = vsinq.f32.pop %v943
    %vm947 = vweird.f32 %v193
    %v948 = vadd.s32 %v944, 3
    %v949 = vand.u32 %v948, 3
    %vm950 = vcmp.lt.s32.totalorder %v949, 2
    %vm951 = vcmp.eq.s32.totalorder %v949, 0
    %v952 = vxor.u32 %v946, 2147483648
    %v953 = vsel %vm951, %v945, %v952
    %vm954 = vcmp.eq.s32.totalorder %v949, 2
    %v955 = vxor.u32 %v945, 2147483648
    %v956 = vsel %vm954, %v955, %v946
    %v957 = vsel %vm950, %v953, %v956
    %v958 = vsel %vm947, nan, %v957
    %v959 = vand.u32 2147483647, %v196
    %vm960 = vcmp.le.f32.partialorder %v959, 0.7853982
    %vm961 = vcmp.lt.s32.totalorder %v196, 0
    %v962 = vand.u32 %v196, 2139095040
    %v963 = vshrl.u32 %v962, 23
    %v964 = vsub.s32 %v963, 127
    %v965 = vand.u32 2147483647, %v196
    %v966 = vand.u32 %v965, 8388607
    %v967 = vor.u32 %v966, 8388608
    %v968 = vsub.s32 0, %v967
    %v969 = vadd.s32 %v964, 1
    %vm970 = vcmp.gt.s32.totalorder %v969, 0
    %v971 = vsel %vm970, %v969, 0
    %v972 = vshrl.u32 %v971, 5
    %v973 = vand.u32 %v971, 31
    %v974 = vsub.s32 32, %v973
    %v975 = vshrl.u32 683565275, %v974
    %v976 = vshll.u32 683565275, %v973
    %v977 = vshrl.u32 2475754826, %v974
    %v978 = vor.u32 %v976, %v977
    %v979 = vshll.u32 2475754826, %v973
    %v980 = vshrl.u32 2131351028, %v974
    %v981 = vor.u32 %v979, %v980
    %v982 = vshll.u32 2131351028, %v973
    %v983 = vshrl.u32 2102212464, %v974
    %v984 = vor.u32 %v982, %v983
    %v985 = vshll.u32 2102212464, %v973
    %v986 = vshrl.u32 920167782, %v974
    %v987 = vor.u32 %v985, %v986
    %v988 = vshll.u32 920167782, %v973
    %v989 = vshrl.u32 1326507024, %v974
    %v990 = vor.u32 %v988, %v989
    %vm991 = vcmp.lt.s32.totalorder %v972, 1
    %vm992 = vcmp.lt.s32.totalorder %v972, 2
    %vm993 = vcmp.lt.s32.totalorder %v972, 3
    %vm994 = vcmp.lt.s32.totalorder %v972, 4
    %v995 = vsel %vm991, %v975, %v978
    %v996 = vsel %vm994, %v984, 2102212464
    %v997 = vsel %vm993, %v981, %v996
    %v998 = vsel %vm992, %v995, %v997
    %v999 = vsel %vm991, %v978, %v981
    %v1000 = vsel %vm994, %v987, 920167782
    %v1001 = vsel %vm993, %v984, %v1000
    %v1002 = vsel %vm992, %v999, %v1001
    %v1003 = vsel %vm991, %v981, %v984
    %v1004 = vsel %vm994, %v990, 1326507024
    %v1005 = vsel %vm993, %v987, %v1004
    %v1006 = vsel %vm992, %v1003, %v1005
    %v1007 = vshll.u32 %v967, 8
    %v1008 = vmul.u32.u64.compose %v1007, %v1006
    %v1009 = vextract.low.u32 %v1008
    %v1010 = vextract.high.u32 %v1008
    %v1011 = vmul.u32.u64.compose %v1007, %v1002
    %v1012 = vextract.low.u32 %v1011
    %v1013 = vextract.high.u32 %v1011
    %v1014 = vmul.u32 %v1007, %v998
    %v1015 = vadd.s32 %v1010, %v1012
    %vm1016 = vc.u32 %v1010, %v1012
    %v1017 = vadd.s32 %v1013, 1
    %v1018 = vsel %vm1016, %v1017, %v1013
    %v1019 = vadd.s32 %v1014, %v1018
    %v1020 = vadd.s32 %v1019, 536870912
    %v1021 = vshrl.u32 %v1020, 30
    %v1022 = vshll.u32 %v1021, 30
    %v1023 = vsub.s32 %v1019, %v1022
    %vm1024 = vcmp.lt.s32.totalorder %v1023, 0
    %v1025 = vsub.s32 0, %v1023
    %v1026 = vsel %vm1024, %v1025, %v1023
    %v1027 = vclz %v1026
    %v1028 = vsub.s32 %v1027, 2
    %vm1029 = vcmp.gt.s32.totalorder 0, %v1028
    %v1030 = vsel %vm1029, 0, %v1028
    %v1031 = vsub.s32 32, %v1030
    %v1032 = vshll.u32 %v1023, %v1030
    %v1033 = vshrl.u32 %v1015, %v1031
    %v1034 = vor.u32 %v1032, %v1033
    %v1035 = vsub.s32 4294967266, %v1030
    %v1036 = vadd.s32 %v1035, 127
    %v1037 = vshll.u32 %v1036, 23
    %v1038 = vor.u32 4788187, %v1037
    %v1039 = vand.u32 2147483647, %v1038
    %v1041 = vcvt.s32.f32 %v1034
    %v1042 = vmul.f32 %v1041, %v1039
    %v1043 = vxor.u32 %v1042, 2147483648
    %v1044 = vsel %vm961, %v1043, %v1042
    %v1045 = vsub.s32 4, %v1021
    %v1046 = vsel %vm961, %v1045, %v1021
    %v1047 = vsel %vm960, %v196, %v1044
    %v1048 = vsel %vm960, 0, %v1046
    %v1049 = vcosq.f32.pop %v1047
    %v1050 = vsinq.f32.pop %v1047
    %vm1051 = vweird.f32 %v196
    %v1052 = vadd.s32 %v1048, 3
    %v1053 = vand.u32 %v1052, 3
    %vm1054 = vcmp.lt.s32.totalorder %v1053, 2
    %vm1055 = vcmp.eq.s32.totalorder %v1053, 0
    %v1056 = vxor.u32 %v1050, 2147483648
    %v1057 = vsel %vm1055, %v1049, %v1056
    %vm1058 = vcmp.eq.s32.totalorder %v1053, 2
    %v1059 = vxor.u32 %v1049, 2147483648
    %v1060 = vsel %vm1058, %v1059, %v1050
    %v1061 = vsel %vm1054, %v1057, %v1060
    %v1062 = vsel %vm1051, nan, %v1061
    %v1063 = vand.u32 2147483647, %v201
    %vm1064 = vcmp.le.f32.partialorder %v1063, 0.7853982
    %vm1065 = vcmp.lt.s32.totalorder %v201, 0
    %v1066 = vand.u32 %v201, 2139095040
    %v1067 = vshrl.u32 %v1066, 23
    %v1068 = vsub.s32 %v1067, 127
    %v1069 = vand.u32 2147483647, %v201
    %v1070 = vand.u32 %v1069, 8388607
    %v1071 = vor.u32 %v1070, 8388608
    %v1072 = vsub.s32 0, %v1071
    %v1073 = vadd.s32 %v1068, 1
    %vm1074 = vcmp.gt.s32.totalorder %v1073, 0
    %v1075 = vsel %vm1074, %v1073, 0
    %v1076 = vshrl.u32 %v1075, 5
    %v1077 = vand.u32 %v1075, 31
    %v1078 = vsub.s32 32, %v1077
    %v1079 = vshrl.u32 683565275, %v1078
    %v1080 = vshll.u32 683565275, %v1077
    %v1081 = vshrl.u32 2475754826, %v1078
    %v1082 = vor.u32 %v1080, %v1081
    %v1083 = vshll.u32 2475754826, %v1077
    %v1084 = vshrl.u32 2131351028, %v1078
    %v1085 = vor.u32 %v1083, %v1084
    %v1086 = vshll.u32 2131351028, %v1077
    %v1087 = vshrl.u32 2102212464, %v1078
    %v1088 = vor.u32 %v1086, %v1087
    %v1089 = vshll.u32 2102212464, %v1077
    %v1090 = vshrl.u32 920167782, %v1078
    %v1091 = vor.u32 %v1089, %v1090
    %v1092 = vshll.u32 920167782, %v1077
    %v1093 = vshrl.u32 1326507024, %v1078
    %v1094 = vor.u32 %v1092, %v1093
    %vm1095 = vcmp.lt.s32.totalorder %v1076, 1
    %vm1096 = vcmp.lt.s32.totalorder %v1076, 2
    %vm1097 = vcmp.lt.s32.totalorder %v1076, 3
    %vm1098 = vcmp.lt.s32.totalorder %v1076, 4
    %v1099 = vsel %vm1095, %v1079, %v1082
    %v1100 = vsel %vm1098, %v1088, 2102212464
    %v1101 = vsel %vm1097, %v1085, %v1100
    %v1102 = vsel %vm1096, %v1099, %v1101
    %v1103 = vsel %vm1095, %v1082, %v1085
    %v1104 = vsel %vm1098, %v1091, 920167782
    %v1105 = vsel %vm1097, %v1088, %v1104
    %v1106 = vsel %vm1096, %v1103, %v1105
    %v1107 = vsel %vm1095, %v1085, %v1088
    %v1108 = vsel %vm1098, %v1094, 1326507024
    %v1109 = vsel %vm1097, %v1091, %v1108
    %v1110 = vsel %vm1096, %v1107, %v1109
    %v1111 = vshll.u32 %v1071, 8
    %v1112 = vmul.u32.u64.compose %v1111, %v1110
    %v1113 = vextract.low.u32 %v1112
    %v1114 = vextract.high.u32 %v1112
    %v1115 = vmul.u32.u64.compose %v1111, %v1106
    %v1116 = vextract.low.u32 %v1115
    %v1117 = vextract.high.u32 %v1115
    %v1118 = vmul.u32 %v1111, %v1102
    %v1119 = vadd.s32 %v1114, %v1116
    %vm1120 = vc.u32 %v1114, %v1116
    %v1121 = vadd.s32 %v1117, 1
    %v1122 = vsel %vm1120, %v1121, %v1117
    %v1123 = vadd.s32 %v1118, %v1122
    %v1124 = vadd.s32 %v1123, 536870912
    %v1125 = vshrl.u32 %v1124, 30
    %v1126 = vshll.u32 %v1125, 30
    %v1127 = vsub.s32 %v1123, %v1126
    %vm1128 = vcmp.lt.s32.totalorder %v1127, 0
    %v1129 = vsub.s32 0, %v1127
    %v1130 = vsel %vm1128, %v1129, %v1127
    %v1131 = vclz %v1130
    %v1132 = vsub.s32 %v1131, 2
    %vm1133 = vcmp.gt.s32.totalorder 0, %v1132
    %v1134 = vsel %vm1133, 0, %v1132
    %v1135 = vsub.s32 32, %v1134
    %v1136 = vshll.u32 %v1127, %v1134
    %v1137 = vshrl.u32 %v1119, %v1135
    %v1138 = vor.u32 %v1136, %v1137
    %v1139 = vsub.s32 4294967266, %v1134
    %v1140 = vadd.s32 %v1139, 127
    %v1141 = vshll.u32 %v1140, 23
    %v1142 = vor.u32 4788187, %v1141
    %v1143 = vand.u32 2147483647, %v1142
    %v1145 = vcvt.s32.f32 %v1138
    %v1146 = vmul.f32 %v1145, %v1143
    %v1147 = vxor.u32 %v1146, 2147483648
    %v1148 = vsel %vm1065, %v1147, %v1146
    %v1149 = vsub.s32 4, %v1125
    %v1150 = vsel %vm1065, %v1149, %v1125
    %v1151 = vsel %vm1064, %v201, %v1148
    %v1152 = vsel %vm1064, 0, %v1150
    %v1153 = vcosq.f32.pop %v1151
    %v1154 = vsinq.f32.pop %v1151
    %vm1155 = vweird.f32 %v201
    %v1156 = vadd.s32 %v1152, 3
    %v1157 = vand.u32 %v1156, 3
    %vm1158 = vcmp.lt.s32.totalorder %v1157, 2
    %vm1159 = vcmp.eq.s32.totalorder %v1157, 0
    %v1160 = vxor.u32 %v1154, 2147483648
    %v1161 = vsel %vm1159, %v1153, %v1160
    %vm1162 = vcmp.eq.s32.totalorder %v1157, 2
    %v1163 = vxor.u32 %v1153, 2147483648
    %v1164 = vsel %vm1162, %v1163, %v1154
    %v1165 = vsel %vm1158, %v1161, %v1164
    %v1166 = vsel %vm1155, nan, %v1165
    %v1167 = vand.u32 2147483647, %v204
    %vm1168 = vcmp.le.f32.partialorder %v1167, 0.7853982
    %vm1169 = vcmp.lt.s32.totalorder %v204, 0
    %v1170 = vand.u32 %v204, 2139095040
    %v1171 = vshrl.u32 %v1170, 23
    %v1172 = vsub.s32 %v1171, 127
    %v1173 = vand.u32 2147483647, %v204
    %v1174 = vand.u32 %v1173, 8388607
    %v1175 = vor.u32 %v1174, 8388608
    %v1176 = vsub.s32 0, %v1175
    %v1177 = vadd.s32 %v1172, 1
    %vm1178 = vcmp.gt.s32.totalorder %v1177, 0
    %v1179 = vsel %vm1178, %v1177, 0
    %v1180 = vshrl.u32 %v1179, 5
    %v1181 = vand.u32 %v1179, 31
    %v1182 = vsub.s32 32, %v1181
    %v1183 = vshrl.u32 683565275, %v1182
    %v1184 = vshll.u32 683565275, %v1181
    %v1185 = vshrl.u32 2475754826, %v1182
    %v1186 = vor.u32 %v1184, %v1185
    %v1187 = vshll.u32 2475754826, %v1181
    %v1188 = vshrl.u32 2131351028, %v1182
    %v1189 = vor.u32 %v1187, %v1188
    %v1190 = vshll.u32 2131351028, %v1181
    %v1191 = vshrl.u32 2102212464, %v1182
    %v1192 = vor.u32 %v1190, %v1191
    %v1193 = vshll.u32 2102212464, %v1181
    %v1194 = vshrl.u32 920167782, %v1182
    %v1195 = vor.u32 %v1193, %v1194
    %v1196 = vshll.u32 920167782, %v1181
    %v1197 = vshrl.u32 1326507024, %v1182
    %v1198 = vor.u32 %v1196, %v1197
    %vm1199 = vcmp.lt.s32.totalorder %v1180, 1
    %vm1200 = vcmp.lt.s32.totalorder %v1180, 2
    %vm1201 = vcmp.lt.s32.totalorder %v1180, 3
    %vm1202 = vcmp.lt.s32.totalorder %v1180, 4
    %v1203 = vsel %vm1199, %v1183, %v1186
    %v1204 = vsel %vm1202, %v1192, 2102212464
    %v1205 = vsel %vm1201, %v1189, %v1204
    %v1206 = vsel %vm1200, %v1203, %v1205
    %v1207 = vsel %vm1199, %v1186, %v1189
    %v1208 = vsel %vm1202, %v1195, 920167782
    %v1209 = vsel %vm1201, %v1192, %v1208
    %v1210 = vsel %vm1200, %v1207, %v1209
    %v1211 = vsel %vm1199, %v1189, %v1192
    %v1212 = vsel %vm1202, %v1198, 1326507024
    %v1213 = vsel %vm1201, %v1195, %v1212
    %v1214 = vsel %vm1200, %v1211, %v1213
    %v1215 = vshll.u32 %v1175, 8
    %v1216 = vmul.u32.u64.compose %v1215, %v1214
    %v1217 = vextract.low.u32 %v1216
    %v1218 = vextract.high.u32 %v1216
    %v1219 = vmul.u32.u64.compose %v1215, %v1210
    %v1220 = vextract.low.u32 %v1219
    %v1221 = vextract.high.u32 %v1219
    %v1222 = vmul.u32 %v1215, %v1206
    %v1223 = vadd.s32 %v1218, %v1220
    %vm1224 = vc.u32 %v1218, %v1220
    %v1225 = vadd.s32 %v1221, 1
    %v1226 = vsel %vm1224, %v1225, %v1221
    %v1227 = vadd.s32 %v1222, %v1226
    %v1228 = vadd.s32 %v1227, 536870912
    %v1229 = vshrl.u32 %v1228, 30
    %v1230 = vshll.u32 %v1229, 30
    %v1231 = vsub.s32 %v1227, %v1230
    %vm1232 = vcmp.lt.s32.totalorder %v1231, 0
    %v1233 = vsub.s32 0, %v1231
    %v1234 = vsel %vm1232, %v1233, %v1231
    %v1235 = vclz %v1234
    %v1236 = vsub.s32 %v1235, 2
    %vm1237 = vcmp.gt.s32.totalorder 0, %v1236
    %v1238 = vsel %vm1237, 0, %v1236
    %v1239 = vsub.s32 32, %v1238
    %v1240 = vshll.u32 %v1231, %v1238
    %v1241 = vshrl.u32 %v1223, %v1239
    %v1242 = vor.u32 %v1240, %v1241
    %v1243 = vsub.s32 4294967266, %v1238
    %v1244 = vadd.s32 %v1243, 127
    %v1245 = vshll.u32 %v1244, 23
    %v1246 = vor.u32 4788187, %v1245
    %v1247 = vand.u32 2147483647, %v1246
    %v1249 = vcvt.s32.f32 %v1242
    %v1250 = vmul.f32 %v1249, %v1247
    %v1251 = vxor.u32 %v1250, 2147483648
    %v1252 = vsel %vm1169, %v1251, %v1250
    %v1253 = vsub.s32 4, %v1229
    %v1254 = vsel %vm1169, %v1253, %v1229
    %v1255 = vsel %vm1168, %v204, %v1252
    %v1256 = vsel %vm1168, 0, %v1254
    %v1257 = vcosq.f32.pop %v1255
    %v1258 = vsinq.f32.pop %v1255
    %vm1259 = vweird.f32 %v204
    %v1260 = vadd.s32 %v1256, 3
    %v1261 = vand.u32 %v1260, 3
    %vm1262 = vcmp.lt.s32.totalorder %v1261, 2
    %vm1263 = vcmp.eq.s32.totalorder %v1261, 0
    %v1264 = vxor.u32 %v1258, 2147483648
    %v1265 = vsel %vm1263, %v1257, %v1264
    %vm1266 = vcmp.eq.s32.totalorder %v1261, 2
    %v1267 = vxor.u32 %v1257, 2147483648
    %v1268 = vsel %vm1266, %v1267, %v1258
    %v1269 = vsel %vm1262, %v1265, %v1268
    %v1270 = vsel %vm1259, nan, %v1269
    %v1271 = vand.u32 2147483647, %v209
    %vm1272 = vcmp.le.f32.partialorder %v1271, 0.7853982
    %vm1273 = vcmp.lt.s32.totalorder %v209, 0
    %v1274 = vand.u32 %v209, 2139095040
    %v1275 = vshrl.u32 %v1274, 23
    %v1276 = vsub.s32 %v1275, 127
    %v1277 = vand.u32 2147483647, %v209
    %v1278 = vand.u32 %v1277, 8388607
    %v1279 = vor.u32 %v1278, 8388608
    %v1280 = vsub.s32 0, %v1279
    %v1281 = vadd.s32 %v1276, 1
    %vm1282 = vcmp.gt.s32.totalorder %v1281, 0
    %v1283 = vsel %vm1282, %v1281, 0
    %v1284 = vshrl.u32 %v1283, 5
    %v1285 = vand.u32 %v1283, 31
    %v1286 = vsub.s32 32, %v1285
    %v1287 = vshrl.u32 683565275, %v1286
    %v1288 = vshll.u32 683565275, %v1285
    %v1289 = vshrl.u32 2475754826, %v1286
    %v1290 = vor.u32 %v1288, %v1289
    %v1291 = vshll.u32 2475754826, %v1285
    %v1292 = vshrl.u32 2131351028, %v1286
    %v1293 = vor.u32 %v1291, %v1292
    %v1294 = vshll.u32 2131351028, %v1285
    %v1295 = vshrl.u32 2102212464, %v1286
    %v1296 = vor.u32 %v1294, %v1295
    %v1297 = vshll.u32 2102212464, %v1285
    %v1298 = vshrl.u32 920167782, %v1286
    %v1299 = vor.u32 %v1297, %v1298
    %v1300 = vshll.u32 920167782, %v1285
    %v1301 = vshrl.u32 1326507024, %v1286
    %v1302 = vor.u32 %v1300, %v1301
    %vm1303 = vcmp.lt.s32.totalorder %v1284, 1
    %vm1304 = vcmp.lt.s32.totalorder %v1284, 2
    %vm1305 = vcmp.lt.s32.totalorder %v1284, 3
    %vm1306 = vcmp.lt.s32.totalorder %v1284, 4
    %v1307 = vsel %vm1303, %v1287, %v1290
    %v1308 = vsel %vm1306, %v1296, 2102212464
    %v1309 = vsel %vm1305, %v1293, %v1308
    %v1310 = vsel %vm1304, %v1307, %v1309
    %v1311 = vsel %vm1303, %v1290, %v1293
    %v1312 = vsel %vm1306, %v1299, 920167782
    %v1313 = vsel %vm1305, %v1296, %v1312
    %v1314 = vsel %vm1304, %v1311, %v1313
    %v1315 = vsel %vm1303, %v1293, %v1296
    %v1316 = vsel %vm1306, %v1302, 1326507024
    %v1317 = vsel %vm1305, %v1299, %v1316
    %v1318 = vsel %vm1304, %v1315, %v1317
    %v1319 = vshll.u32 %v1279, 8
    %v1320 = vmul.u32.u64.compose %v1319, %v1318
    %v1321 = vextract.low.u32 %v1320
    %v1322 = vextract.high.u32 %v1320
    %v1323 = vmul.u32.u64.compose %v1319, %v1314
    %v1324 = vextract.low.u32 %v1323
    %v1325 = vextract.high.u32 %v1323
    %v1326 = vmul.u32 %v1319, %v1310
    %v1327 = vadd.s32 %v1322, %v1324
    %vm1328 = vc.u32 %v1322, %v1324
    %v1329 = vadd.s32 %v1325, 1
    %v1330 = vsel %vm1328, %v1329, %v1325
    %v1331 = vadd.s32 %v1326, %v1330
    %v1332 = vadd.s32 %v1331, 536870912
    %v1333 = vshrl.u32 %v1332, 30
    %v1334 = vshll.u32 %v1333, 30
    %v1335 = vsub.s32 %v1331, %v1334
    %vm1336 = vcmp.lt.s32.totalorder %v1335, 0
    %v1337 = vsub.s32 0, %v1335
    %v1338 = vsel %vm1336, %v1337, %v1335
    %v1339 = vclz %v1338
    %v1340 = vsub.s32 %v1339, 2
    %vm1341 = vcmp.gt.s32.totalorder 0, %v1340
    %v1342 = vsel %vm1341, 0, %v1340
    %v1343 = vsub.s32 32, %v1342
    %v1344 = vshll.u32 %v1335, %v1342
    %v1345 = vshrl.u32 %v1327, %v1343
    %v1346 = vor.u32 %v1344, %v1345
    %v1347 = vsub.s32 4294967266, %v1342
    %v1348 = vadd.s32 %v1347, 127
    %v1349 = vshll.u32 %v1348, 23
    %v1350 = vor.u32 4788187, %v1349
    %v1351 = vand.u32 2147483647, %v1350
    %v1353 = vcvt.s32.f32 %v1346
    %v1354 = vmul.f32 %v1353, %v1351
    %v1355 = vxor.u32 %v1354, 2147483648
    %v1356 = vsel %vm1273, %v1355, %v1354
    %v1357 = vsub.s32 4, %v1333
    %v1358 = vsel %vm1273, %v1357, %v1333
    %v1359 = vsel %vm1272, %v209, %v1356
    %v1360 = vsel %vm1272, 0, %v1358
    %v1361 = vcosq.f32.pop %v1359
    %v1362 = vsinq.f32.pop %v1359
    %vm1363 = vweird.f32 %v209
    %v1364 = vadd.s32 %v1360, 3
    %v1365 = vand.u32 %v1364, 3
    %vm1366 = vcmp.lt.s32.totalorder %v1365, 2
    %vm1367 = vcmp.eq.s32.totalorder %v1365, 0
    %v1368 = vxor.u32 %v1362, 2147483648
    %v1369 = vsel %vm1367, %v1361, %v1368
    %vm1370 = vcmp.eq.s32.totalorder %v1365, 2
    %v1371 = vxor.u32 %v1361, 2147483648
    %v1372 = vsel %vm1370, %v1371, %v1362
    %v1373 = vsel %vm1366, %v1369, %v1372
    %v1374 = vsel %vm1363, nan, %v1373
    %v1375 = vand.u32 2147483647, %v212
    %vm1376 = vcmp.le.f32.partialorder %v1375, 0.7853982
    %vm1377 = vcmp.lt.s32.totalorder %v212, 0
    %v1378 = vand.u32 %v212, 2139095040
    %v1379 = vshrl.u32 %v1378, 23
    %v1380 = vsub.s32 %v1379, 127
    %v1381 = vand.u32 2147483647, %v212
    %v1382 = vand.u32 %v1381, 8388607
    %v1383 = vor.u32 %v1382, 8388608
    %v1384 = vsub.s32 0, %v1383
    %v1385 = vadd.s32 %v1380, 1
    %vm1386 = vcmp.gt.s32.totalorder %v1385, 0
    %v1387 = vsel %vm1386, %v1385, 0
    %v1388 = vshrl.u32 %v1387, 5
    %v1389 = vand.u32 %v1387, 31
    %v1390 = vsub.s32 32, %v1389
    %v1391 = vshrl.u32 683565275, %v1390
    %v1392 = vshll.u32 683565275, %v1389
    %v1393 = vshrl.u32 2475754826, %v1390
    %v1394 = vor.u32 %v1392, %v1393
    %v1395 = vshll.u32 2475754826, %v1389
    %v1396 = vshrl.u32 2131351028, %v1390
    %v1397 = vor.u32 %v1395, %v1396
    %v1398 = vshll.u32 2131351028, %v1389
    %v1399 = vshrl.u32 2102212464, %v1390
    %v1400 = vor.u32 %v1398, %v1399
    %v1401 = vshll.u32 2102212464, %v1389
    %v1402 = vshrl.u32 920167782, %v1390
    %v1403 = vor.u32 %v1401, %v1402
    %v1404 = vshll.u32 920167782, %v1389
    %v1405 = vshrl.u32 1326507024, %v1390
    %v1406 = vor.u32 %v1404, %v1405
    %vm1407 = vcmp.lt.s32.totalorder %v1388, 1
    %vm1408 = vcmp.lt.s32.totalorder %v1388, 2
    %vm1409 = vcmp.lt.s32.totalorder %v1388, 3
    %vm1410 = vcmp.lt.s32.totalorder %v1388, 4
    %v1411 = vsel %vm1407, %v1391, %v1394
    %v1412 = vsel %vm1410, %v1400, 2102212464
    %v1413 = vsel %vm1409, %v1397, %v1412
    %v1414 = vsel %vm1408, %v1411, %v1413
    %v1415 = vsel %vm1407, %v1394, %v1397
    %v1416 = vsel %vm1410, %v1403, 920167782
    %v1417 = vsel %vm1409, %v1400, %v1416
    %v1418 = vsel %vm1408, %v1415, %v1417
    %v1419 = vsel %vm1407, %v1397, %v1400
    %v1420 = vsel %vm1410, %v1406, 1326507024
    %v1421 = vsel %vm1409, %v1403, %v1420
    %v1422 = vsel %vm1408, %v1419, %v1421
    %v1423 = vshll.u32 %v1383, 8
    %v1424 = vmul.u32.u64.compose %v1423, %v1422
    %v1425 = vextract.low.u32 %v1424
    %v1426 = vextract.high.u32 %v1424
    %v1427 = vmul.u32.u64.compose %v1423, %v1418
    %v1428 = vextract.low.u32 %v1427
    %v1429 = vextract.high.u32 %v1427
    %v1430 = vmul.u32 %v1423, %v1414
    %v1431 = vadd.s32 %v1426, %v1428
    %vm1432 = vc.u32 %v1426, %v1428
    %v1433 = vadd.s32 %v1429, 1
    %v1434 = vsel %vm1432, %v1433, %v1429
    %v1435 = vadd.s32 %v1430, %v1434
    %v1436 = vadd.s32 %v1435, 536870912
    %v1437 = vshrl.u32 %v1436, 30
    %v1438 = vshll.u32 %v1437, 30
    %v1439 = vsub.s32 %v1435, %v1438
    %vm1440 = vcmp.lt.s32.totalorder %v1439, 0
    %v1441 = vsub.s32 0, %v1439
    %v1442 = vsel %vm1440, %v1441, %v1439
    %v1443 = vclz %v1442
    %v1444 = vsub.s32 %v1443, 2
    %vm1445 = vcmp.gt.s32.totalorder 0, %v1444
    %v1446 = vsel %vm1445, 0, %v1444
    %v1447 = vsub.s32 32, %v1446
    %v1448 = vshll.u32 %v1439, %v1446
    %v1449 = vshrl.u32 %v1431, %v1447
    %v1450 = vor.u32 %v1448, %v1449
    %v1451 = vsub.s32 4294967266, %v1446
    %v1452 = vadd.s32 %v1451, 127
    %v1453 = vshll.u32 %v1452, 23
    %v1454 = vor.u32 4788187, %v1453
    %v1455 = vand.u32 2147483647, %v1454
    %v1457 = vcvt.s32.f32 %v1450
    %v1458 = vmul.f32 %v1457, %v1455
    %v1459 = vxor.u32 %v1458, 2147483648
    %v1460 = vsel %vm1377, %v1459, %v1458
    %v1461 = vsub.s32 4, %v1437
    %v1462 = vsel %vm1377, %v1461, %v1437
    %v1463 = vsel %vm1376, %v212, %v1460
    %v1464 = vsel %vm1376, 0, %v1462
    %v1465 = vcosq.f32.pop %v1463
    %v1466 = vsinq.f32.pop %v1463
    %vm1467 = vweird.f32 %v212
    %v1468 = vadd.s32 %v1464, 3
    %v1469 = vand.u32 %v1468, 3
    %vm1470 = vcmp.lt.s32.totalorder %v1469, 2
    %vm1471 = vcmp.eq.s32.totalorder %v1469, 0
    %v1472 = vxor.u32 %v1466, 2147483648
    %v1473 = vsel %vm1471, %v1465, %v1472
    %vm1474 = vcmp.eq.s32.totalorder %v1469, 2
    %v1475 = vxor.u32 %v1465, 2147483648
    %v1476 = vsel %vm1474, %v1475, %v1466
    %v1477 = vsel %vm1470, %v1473, %v1476
    %v1478 = vsel %vm1467, nan, %v1477
    %v1479 = vand.u32 2147483647, %v217
    %vm1480 = vcmp.le.f32.partialorder %v1479, 0.7853982
    %vm1481 = vcmp.lt.s32.totalorder %v217, 0
    %v1482 = vand.u32 %v217, 2139095040
    %v1483 = vshrl.u32 %v1482, 23
    %v1484 = vsub.s32 %v1483, 127
    %v1485 = vand.u32 2147483647, %v217
    %v1486 = vand.u32 %v1485, 8388607
    %v1487 = vor.u32 %v1486, 8388608
    %v1488 = vsub.s32 0, %v1487
    %v1489 = vadd.s32 %v1484, 1
    %vm1490 = vcmp.gt.s32.totalorder %v1489, 0
    %v1491 = vsel %vm1490, %v1489, 0
    %v1492 = vshrl.u32 %v1491, 5
    %v1493 = vand.u32 %v1491, 31
    %v1494 = vsub.s32 32, %v1493
    %v1495 = vshrl.u32 683565275, %v1494
    %v1496 = vshll.u32 683565275, %v1493
    %v1497 = vshrl.u32 2475754826, %v1494
    %v1498 = vor.u32 %v1496, %v1497
    %v1499 = vshll.u32 2475754826, %v1493
    %v1500 = vshrl.u32 2131351028, %v1494
    %v1501 = vor.u32 %v1499, %v1500
    %v1502 = vshll.u32 2131351028, %v1493
    %v1503 = vshrl.u32 2102212464, %v1494
    %v1504 = vor.u32 %v1502, %v1503
    %v1505 = vshll.u32 2102212464, %v1493
    %v1506 = vshrl.u32 920167782, %v1494
    %v1507 = vor.u32 %v1505, %v1506
    %v1508 = vshll.u32 920167782, %v1493
    %v1509 = vshrl.u32 1326507024, %v1494
    %v1510 = vor.u32 %v1508, %v1509
    %vm1511 = vcmp.lt.s32.totalorder %v1492, 1
    %vm1512 = vcmp.lt.s32.totalorder %v1492, 2
    %vm1513 = vcmp.lt.s32.totalorder %v1492, 3
    %vm1514 = vcmp.lt.s32.totalorder %v1492, 4
    %v1515 = vsel %vm1511, %v1495, %v1498
    %v1516 = vsel %vm1514, %v1504, 2102212464
    %v1517 = vsel %vm1513, %v1501, %v1516
    %v1518 = vsel %vm1512, %v1515, %v1517
    %v1519 = vsel %vm1511, %v1498, %v1501
    %v1520 = vsel %vm1514, %v1507, 920167782
    %v1521 = vsel %vm1513, %v1504, %v1520
    %v1522 = vsel %vm1512, %v1519, %v1521
    %v1523 = vsel %vm1511, %v1501, %v1504
    %v1524 = vsel %vm1514, %v1510, 1326507024
    %v1525 = vsel %vm1513, %v1507, %v1524
    %v1526 = vsel %vm1512, %v1523, %v1525
    %v1527 = vshll.u32 %v1487, 8
    %v1528 = vmul.u32.u64.compose %v1527, %v1526
    %v1529 = vextract.low.u32 %v1528
    %v1530 = vextract.high.u32 %v1528
    %v1531 = vmul.u32.u64.compose %v1527, %v1522
    %v1532 = vextract.low.u32 %v1531
    %v1533 = vextract.high.u32 %v1531
    %v1534 = vmul.u32 %v1527, %v1518
    %v1535 = vadd.s32 %v1530, %v1532
    %vm1536 = vc.u32 %v1530, %v1532
    %v1537 = vadd.s32 %v1533, 1
    %v1538 = vsel %vm1536, %v1537, %v1533
    %v1539 = vadd.s32 %v1534, %v1538
    %v1540 = vadd.s32 %v1539, 536870912
    %v1541 = vshrl.u32 %v1540, 30
    %v1542 = vshll.u32 %v1541, 30
    %v1543 = vsub.s32 %v1539, %v1542
    %vm1544 = vcmp.lt.s32.totalorder %v1543, 0
    %v1545 = vsub.s32 0, %v1543
    %v1546 = vsel %vm1544, %v1545, %v1543
    %v1547 = vclz %v1546
    %v1548 = vsub.s32 %v1547, 2
    %vm1549 = vcmp.gt.s32.totalorder 0, %v1548
    %v1550 = vsel %vm1549, 0, %v1548
    %v1551 = vsub.s32 32, %v1550
    %v1552 = vshll.u32 %v1543, %v1550
    %v1553 = vshrl.u32 %v1535, %v1551
    %v1554 = vor.u32 %v1552, %v1553
    %v1555 = vsub.s32 4294967266, %v1550
    %v1556 = vadd.s32 %v1555, 127
    %v1557 = vshll.u32 %v1556, 23
    %v1558 = vor.u32 4788187, %v1557
    %v1559 = vand.u32 2147483647, %v1558
    %v1561 = vcvt.s32.f32 %v1554
    %v1562 = vmul.f32 %v1561, %v1559
    %v1563 = vxor.u32 %v1562, 2147483648
    %v1564 = vsel %vm1481, %v1563, %v1562
    %v1565 = vsub.s32 4, %v1541
    %v1566 = vsel %vm1481, %v1565, %v1541
    %v1567 = vsel %vm1480, %v217, %v1564
    %v1568 = vsel %vm1480, 0, %v1566
    %v1569 = vcosq.f32.pop %v1567
    %v1570 = vsinq.f32.pop %v1567
    %vm1571 = vweird.f32 %v217
    %v1572 = vadd.s32 %v1568, 3
    %v1573 = vand.u32 %v1572, 3
    %vm1574 = vcmp.lt.s32.totalorder %v1573, 2
    %vm1575 = vcmp.eq.s32.totalorder %v1573, 0
    %v1576 = vxor.u32 %v1570, 2147483648
    %v1577 = vsel %vm1575, %v1569, %v1576
    %vm1578 = vcmp.eq.s32.totalorder %v1573, 2
    %v1579 = vxor.u32 %v1569, 2147483648
    %v1580 = vsel %vm1578, %v1579, %v1570
    %v1581 = vsel %vm1574, %v1577, %v1580
    %v1582 = vsel %vm1571, nan, %v1581
    %v1583 = vand.u32 2147483647, %v220
    %vm1584 = vcmp.le.f32.partialorder %v1583, 0.7853982
    %vm1585 = vcmp.lt.s32.totalorder %v220, 0
    %v1586 = vand.u32 %v220, 2139095040
    %v1587 = vshrl.u32 %v1586, 23
    %v1588 = vsub.s32 %v1587, 127
    %v1589 = vand.u32 2147483647, %v220
    %v1590 = vand.u32 %v1589, 8388607
    %v1591 = vor.u32 %v1590, 8388608
    %v1592 = vsub.s32 0, %v1591
    %v1593 = vadd.s32 %v1588, 1
    %vm1594 = vcmp.gt.s32.totalorder %v1593, 0
    %v1595 = vsel %vm1594, %v1593, 0
    %v1596 = vshrl.u32 %v1595, 5
    %v1597 = vand.u32 %v1595, 31
    %v1598 = vsub.s32 32, %v1597
    %v1599 = vshrl.u32 683565275, %v1598
    %v1600 = vshll.u32 683565275, %v1597
    %v1601 = vshrl.u32 2475754826, %v1598
    %v1602 = vor.u32 %v1600, %v1601
    %v1603 = vshll.u32 2475754826, %v1597
    %v1604 = vshrl.u32 2131351028, %v1598
    %v1605 = vor.u32 %v1603, %v1604
    %v1606 = vshll.u32 2131351028, %v1597
    %v1607 = vshrl.u32 2102212464, %v1598
    %v1608 = vor.u32 %v1606, %v1607
    %v1609 = vshll.u32 2102212464, %v1597
    %v1610 = vshrl.u32 920167782, %v1598
    %v1611 = vor.u32 %v1609, %v1610
    %v1612 = vshll.u32 920167782, %v1597
    %v1613 = vshrl.u32 1326507024, %v1598
    %v1614 = vor.u32 %v1612, %v1613
    %vm1615 = vcmp.lt.s32.totalorder %v1596, 1
    %vm1616 = vcmp.lt.s32.totalorder %v1596, 2
    %vm1617 = vcmp.lt.s32.totalorder %v1596, 3
    %vm1618 = vcmp.lt.s32.totalorder %v1596, 4
    %v1619 = vsel %vm1615, %v1599, %v1602
    %v1620 = vsel %vm1618, %v1608, 2102212464
    %v1621 = vsel %vm1617, %v1605, %v1620
    %v1622 = vsel %vm1616, %v1619, %v1621
    %v1623 = vsel %vm1615, %v1602, %v1605
    %v1624 = vsel %vm1618, %v1611, 920167782
    %v1625 = vsel %vm1617, %v1608, %v1624
    %v1626 = vsel %vm1616, %v1623, %v1625
    %v1627 = vsel %vm1615, %v1605, %v1608
    %v1628 = vsel %vm1618, %v1614, 1326507024
    %v1629 = vsel %vm1617, %v1611, %v1628
    %v1630 = vsel %vm1616, %v1627, %v1629
    %v1631 = vshll.u32 %v1591, 8
    %v1632 = vmul.u32.u64.compose %v1631, %v1630
    %v1633 = vextract.low.u32 %v1632
    %v1634 = vextract.high.u32 %v1632
    %v1635 = vmul.u32.u64.compose %v1631, %v1626
    %v1636 = vextract.low.u32 %v1635
    %v1637 = vextract.high.u32 %v1635
    %v1638 = vmul.u32 %v1631, %v1622
    %v1639 = vadd.s32 %v1634, %v1636
    %vm1640 = vc.u32 %v1634, %v1636
    %v1641 = vadd.s32 %v1637, 1
    %v1642 = vsel %vm1640, %v1641, %v1637
    %v1643 = vadd.s32 %v1638, %v1642
    %v1644 = vadd.s32 %v1643, 536870912
    %v1645 = vshrl.u32 %v1644, 30
    %v1646 = vshll.u32 %v1645, 30
    %v1647 = vsub.s32 %v1643, %v1646
    %vm1648 = vcmp.lt.s32.totalorder %v1647, 0
    %v1649 = vsub.s32 0, %v1647
    %v1650 = vsel %vm1648, %v1649, %v1647
    %v1651 = vclz %v1650
    %v1652 = vsub.s32 %v1651, 2
    %vm1653 = vcmp.gt.s32.totalorder 0, %v1652
    %v1654 = vsel %vm1653, 0, %v1652
    %v1655 = vsub.s32 32, %v1654
    %v1656 = vshll.u32 %v1647, %v1654
    %v1657 = vshrl.u32 %v1639, %v1655
    %v1658 = vor.u32 %v1656, %v1657
    %v1659 = vsub.s32 4294967266, %v1654
    %v1660 = vadd.s32 %v1659, 127
    %v1661 = vshll.u32 %v1660, 23
    %v1662 = vor.u32 4788187, %v1661
    %v1663 = vand.u32 2147483647, %v1662
    %v1665 = vcvt.s32.f32 %v1658
    %v1666 = vmul.f32 %v1665, %v1663
    %v1667 = vxor.u32 %v1666, 2147483648
    %v1668 = vsel %vm1585, %v1667, %v1666
    %v1669 = vsub.s32 4, %v1645
    %v1670 = vsel %vm1585, %v1669, %v1645
    %v1671 = vsel %vm1584, %v220, %v1668
    %v1672 = vsel %vm1584, 0, %v1670
    %v1673 = vcosq.f32.pop %v1671
    %v1674 = vsinq.f32.pop %v1671
    %vm1675 = vweird.f32 %v220
    %v1676 = vadd.s32 %v1672, 3
    %v1677 = vand.u32 %v1676, 3
    %vm1678 = vcmp.lt.s32.totalorder %v1677, 2
    %vm1679 = vcmp.eq.s32.totalorder %v1677, 0
    %v1680 = vxor.u32 %v1674, 2147483648
    %v1681 = vsel %vm1679, %v1673, %v1680
    %vm1682 = vcmp.eq.s32.totalorder %v1677, 2
    %v1683 = vxor.u32 %v1673, 2147483648
    %v1684 = vsel %vm1682, %v1683, %v1674
    %v1685 = vsel %vm1678, %v1681, %v1684
    %v1686 = vsel %vm1675, nan, %v1685
    %v1687 = vand.u32 2147483647, %v225
    %vm1688 = vcmp.le.f32.partialorder %v1687, 0.7853982
    %vm1689 = vcmp.lt.s32.totalorder %v225, 0
    %v1690 = vand.u32 %v225, 2139095040
    %v1691 = vshrl.u32 %v1690, 23
    %v1692 = vsub.s32 %v1691, 127
    %v1693 = vand.u32 2147483647, %v225
    %v1694 = vand.u32 %v1693, 8388607
    %v1695 = vor.u32 %v1694, 8388608
    %v1696 = vsub.s32 0, %v1695
    %v1697 = vadd.s32 %v1692, 1
    %vm1698 = vcmp.gt.s32.totalorder %v1697, 0
    %v1699 = vsel %vm1698, %v1697, 0
    %v1700 = vshrl.u32 %v1699, 5
    %v1701 = vand.u32 %v1699, 31
    %v1702 = vsub.s32 32, %v1701
    %v1703 = vshrl.u32 683565275, %v1702
    %v1704 = vshll.u32 683565275, %v1701
    %v1705 = vshrl.u32 2475754826, %v1702
    %v1706 = vor.u32 %v1704, %v1705
    %v1707 = vshll.u32 2475754826, %v1701
    %v1708 = vshrl.u32 2131351028, %v1702
    %v1709 = vor.u32 %v1707, %v1708
    %v1710 = vshll.u32 2131351028, %v1701
    %v1711 = vshrl.u32 2102212464, %v1702
    %v1712 = vor.u32 %v1710, %v1711
    %v1713 = vshll.u32 2102212464, %v1701
    %v1714 = vshrl.u32 920167782, %v1702
    %v1715 = vor.u32 %v1713, %v1714
    %v1716 = vshll.u32 920167782, %v1701
    %v1717 = vshrl.u32 1326507024, %v1702
    %v1718 = vor.u32 %v1716, %v1717
    %vm1719 = vcmp.lt.s32.totalorder %v1700, 1
    %vm1720 = vcmp.lt.s32.totalorder %v1700, 2
    %vm1721 = vcmp.lt.s32.totalorder %v1700, 3
    %vm1722 = vcmp.lt.s32.totalorder %v1700, 4
    %v1723 = vsel %vm1719, %v1703, %v1706
    %v1724 = vsel %vm1722, %v1712, 2102212464
    %v1725 = vsel %vm1721, %v1709, %v1724
    %v1726 = vsel %vm1720, %v1723, %v1725
    %v1727 = vsel %vm1719, %v1706, %v1709
    %v1728 = vsel %vm1722, %v1715, 920167782
    %v1729 = vsel %vm1721, %v1712, %v1728
    %v1730 = vsel %vm1720, %v1727, %v1729
    %v1731 = vsel %vm1719, %v1709, %v1712
    %v1732 = vsel %vm1722, %v1718, 1326507024
    %v1733 = vsel %vm1721, %v1715, %v1732
    %v1734 = vsel %vm1720, %v1731, %v1733
    %v1735 = vshll.u32 %v1695, 8
    %v1736 = vmul.u32.u64.compose %v1735, %v1734
    %v1737 = vextract.low.u32 %v1736
    %v1738 = vextract.high.u32 %v1736
    %v1739 = vmul.u32.u64.compose %v1735, %v1730
    %v1740 = vextract.low.u32 %v1739
    %v1741 = vextract.high.u32 %v1739
    %v1742 = vmul.u32 %v1735, %v1726
    %v1743 = vadd.s32 %v1738, %v1740
    %vm1744 = vc.u32 %v1738, %v1740
    %v1745 = vadd.s32 %v1741, 1
    %v1746 = vsel %vm1744, %v1745, %v1741
    %v1747 = vadd.s32 %v1742, %v1746
    %v1748 = vadd.s32 %v1747, 536870912
    %v1749 = vshrl.u32 %v1748, 30
    %v1750 = vshll.u32 %v1749, 30
    %v1751 = vsub.s32 %v1747, %v1750
    %vm1752 = vcmp.lt.s32.totalorder %v1751, 0
    %v1753 = vsub.s32 0, %v1751
    %v1754 = vsel %vm1752, %v1753, %v1751
    %v1755 = vclz %v1754
    %v1756 = vsub.s32 %v1755, 2
    %vm1757 = vcmp.gt.s32.totalorder 0, %v1756
    %v1758 = vsel %vm1757, 0, %v1756
    %v1759 = vsub.s32 32, %v1758
    %v1760 = vshll.u32 %v1751, %v1758
    %v1761 = vshrl.u32 %v1743, %v1759
    %v1762 = vor.u32 %v1760, %v1761
    %v1763 = vsub.s32 4294967266, %v1758
    %v1764 = vadd.s32 %v1763, 127
    %v1765 = vshll.u32 %v1764, 23
    %v1766 = vor.u32 4788187, %v1765
    %v1767 = vand.u32 2147483647, %v1766
    %v1769 = vcvt.s32.f32 %v1762
    %v1770 = vmul.f32 %v1769, %v1767
    %v1771 = vxor.u32 %v1770, 2147483648
    %v1772 = vsel %vm1689, %v1771, %v1770
    %v1773 = vsub.s32 4, %v1749
    %v1774 = vsel %vm1689, %v1773, %v1749
    %v1775 = vsel %vm1688, %v225, %v1772
    %v1776 = vsel %vm1688, 0, %v1774
    %v1777 = vcosq.f32.pop %v1775
    %v1778 = vsinq.f32.pop %v1775
    %vm1779 = vweird.f32 %v225
    %v1780 = vadd.s32 %v1776, 3
    %v1781 = vand.u32 %v1780, 3
    %vm1782 = vcmp.lt.s32.totalorder %v1781, 2
    %vm1783 = vcmp.eq.s32.totalorder %v1781, 0
    %v1784 = vxor.u32 %v1778, 2147483648
    %v1785 = vsel %vm1783, %v1777, %v1784
    %vm1786 = vcmp.eq.s32.totalorder %v1781, 2
    %v1787 = vxor.u32 %v1777, 2147483648
    %v1788 = vsel %vm1786, %v1787, %v1778
    %v1789 = vsel %vm1782, %v1785, %v1788
    %v1790 = vsel %vm1779, nan, %v1789
    %v1791 = vand.u32 2147483647, %v228
    %vm1792 = vcmp.le.f32.partialorder %v1791, 0.7853982
    %vm1793 = vcmp.lt.s32.totalorder %v228, 0
    %v1794 = vand.u32 %v228, 2139095040
    %v1795 = vshrl.u32 %v1794, 23
    %v1796 = vsub.s32 %v1795, 127
    %v1797 = vand.u32 2147483647, %v228
    %v1798 = vand.u32 %v1797, 8388607
    %v1799 = vor.u32 %v1798, 8388608
    %v1800 = vsub.s32 0, %v1799
    %v1801 = vadd.s32 %v1796, 1
    %vm1802 = vcmp.gt.s32.totalorder %v1801, 0
    %v1803 = vsel %vm1802, %v1801, 0
    %v1804 = vshrl.u32 %v1803, 5
    %v1805 = vand.u32 %v1803, 31
    %v1806 = vsub.s32 32, %v1805
    %v1807 = vshrl.u32 683565275, %v1806
    %v1808 = vshll.u32 683565275, %v1805
    %v1809 = vshrl.u32 2475754826, %v1806
    %v1810 = vor.u32 %v1808, %v1809
    %v1811 = vshll.u32 2475754826, %v1805
    %v1812 = vshrl.u32 2131351028, %v1806
    %v1813 = vor.u32 %v1811, %v1812
    %v1814 = vshll.u32 2131351028, %v1805
    %v1815 = vshrl.u32 2102212464, %v1806
    %v1816 = vor.u32 %v1814, %v1815
    %v1817 = vshll.u32 2102212464, %v1805
    %v1818 = vshrl.u32 920167782, %v1806
    %v1819 = vor.u32 %v1817, %v1818
    %v1820 = vshll.u32 920167782, %v1805
    %v1821 = vshrl.u32 1326507024, %v1806
    %v1822 = vor.u32 %v1820, %v1821
    %vm1823 = vcmp.lt.s32.totalorder %v1804, 1
    %vm1824 = vcmp.lt.s32.totalorder %v1804, 2
    %vm1825 = vcmp.lt.s32.totalorder %v1804, 3
    %vm1826 = vcmp.lt.s32.totalorder %v1804, 4
    %v1827 = vsel %vm1823, %v1807, %v1810
    %v1828 = vsel %vm1826, %v1816, 2102212464
    %v1829 = vsel %vm1825, %v1813, %v1828
    %v1830 = vsel %vm1824, %v1827, %v1829
    %v1831 = vsel %vm1823, %v1810, %v1813
    %v1832 = vsel %vm1826, %v1819, 920167782
    %v1833 = vsel %vm1825, %v1816, %v1832
    %v1834 = vsel %vm1824, %v1831, %v1833
    %v1835 = vsel %vm1823, %v1813, %v1816
    %v1836 = vsel %vm1826, %v1822, 1326507024
    %v1837 = vsel %vm1825, %v1819, %v1836
    %v1838 = vsel %vm1824, %v1835, %v1837
    %v1839 = vshll.u32 %v1799, 8
    %v1840 = vmul.u32.u64.compose %v1839, %v1838
    %v1841 = vextract.low.u32 %v1840
    %v1842 = vextract.high.u32 %v1840
    %v1843 = vmul.u32.u64.compose %v1839, %v1834
    %v1844 = vextract.low.u32 %v1843
    %v1845 = vextract.high.u32 %v1843
    %v1846 = vmul.u32 %v1839, %v1830
    %v1847 = vadd.s32 %v1842, %v1844
    %vm1848 = vc.u32 %v1842, %v1844
    %v1849 = vadd.s32 %v1845, 1
    %v1850 = vsel %vm1848, %v1849, %v1845
    %v1851 = vadd.s32 %v1846, %v1850
    %v1852 = vadd.s32 %v1851, 536870912
    %v1853 = vshrl.u32 %v1852, 30
    %v1854 = vshll.u32 %v1853, 30
    %v1855 = vsub.s32 %v1851, %v1854
    %vm1856 = vcmp.lt.s32.totalorder %v1855, 0
    %v1857 = vsub.s32 0, %v1855
    %v1858 = vsel %vm1856, %v1857, %v1855
    %v1859 = vclz %v1858
    %v1860 = vsub.s32 %v1859, 2
    %vm1861 = vcmp.gt.s32.totalorder 0, %v1860
    %v1862 = vsel %vm1861, 0, %v1860
    %v1863 = vsub.s32 32, %v1862
    %v1864 = vshll.u32 %v1855, %v1862
    %v1865 = vshrl.u32 %v1847, %v1863
    %v1866 = vor.u32 %v1864, %v1865
    %v1867 = vsub.s32 4294967266, %v1862
    %v1868 = vadd.s32 %v1867, 127
    %v1869 = vshll.u32 %v1868, 23
    %v1870 = vor.u32 4788187, %v1869
    %v1871 = vand.u32 2147483647, %v1870
    %v1873 = vcvt.s32.f32 %v1866
    %v1874 = vmul.f32 %v1873, %v1871
    %v1875 = vxor.u32 %v1874, 2147483648
    %v1876 = vsel %vm1793, %v1875, %v1874
    %v1877 = vsub.s32 4, %v1853
    %v1878 = vsel %vm1793, %v1877, %v1853
    %v1879 = vsel %vm1792, %v228, %v1876
    %v1880 = vsel %vm1792, 0, %v1878
    %v1881 = vcosq.f32.pop %v1879
    %v1882 = vsinq.f32.pop %v1879
    %vm1883 = vweird.f32 %v228
    %v1884 = vadd.s32 %v1880, 3
    %v1885 = vand.u32 %v1884, 3
    %vm1886 = vcmp.lt.s32.totalorder %v1885, 2
    %vm1887 = vcmp.eq.s32.totalorder %v1885, 0
    %v1888 = vxor.u32 %v1882, 2147483648
    %v1889 = vsel %vm1887, %v1881, %v1888
    %vm1890 = vcmp.eq.s32.totalorder %v1885, 2
    %v1891 = vxor.u32 %v1881, 2147483648
    %v1892 = vsel %vm1890, %v1891, %v1882
    %v1893 = vsel %vm1886, %v1889, %v1892
    %v1894 = vsel %vm1883, nan, %v1893
    %v1895 = vpack.c.bf16 %v438, %v334
    %v1896 = vpack.c.bf16 %v646, %v542
    %v1897 = vpack.c.bf16 %v854, %v750
    %v1898 = vpack.c.bf16 %v1062, %v958
    %v1899 = vpack.c.bf16 %v1270, %v1166
    %v1900 = vpack.c.bf16 %v1478, %v1374
    %v1901 = vpack.c.bf16 %v1686, %v1582
    %v1902 = vpack.c.bf16 %v1894, %v1790
    %v1903 = vand.u32 2147483647, %v169
    %vm1904 = vcmp.le.f32.partialorder %v1903, 0.7853982
    %vm1905 = vcmp.lt.s32.totalorder %v169, 0
    %v1906 = vand.u32 %v169, 2139095040
    %v1907 = vshrl.u32 %v1906, 23
    %v1908 = vsub.s32 %v1907, 127
    %v1909 = vand.u32 2147483647, %v169
    %v1910 = vand.u32 %v1909, 8388607
    %v1911 = vor.u32 %v1910, 8388608
    %v1912 = vsub.s32 0, %v1911
    %v1913 = vadd.s32 %v1908, 1
    %vm1914 = vcmp.gt.s32.totalorder %v1913, 0
    %v1915 = vsel %vm1914, %v1913, 0
    %v1916 = vshrl.u32 %v1915, 5
    %v1917 = vand.u32 %v1915, 31
    %v1918 = vsub.s32 32, %v1917
    %v1919 = vshrl.u32 683565275, %v1918
    %v1920 = vshll.u32 683565275, %v1917
    %v1921 = vshrl.u32 2475754826, %v1918
    %v1922 = vor.u32 %v1920, %v1921
    %v1923 = vshll.u32 2475754826, %v1917
    %v1924 = vshrl.u32 2131351028, %v1918
    %v1925 = vor.u32 %v1923, %v1924
    %v1926 = vshll.u32 2131351028, %v1917
    %v1927 = vshrl.u32 2102212464, %v1918
    %v1928 = vor.u32 %v1926, %v1927
    %v1929 = vshll.u32 2102212464, %v1917
    %v1930 = vshrl.u32 920167782, %v1918
    %v1931 = vor.u32 %v1929, %v1930
    %v1932 = vshll.u32 920167782, %v1917
    %v1933 = vshrl.u32 1326507024, %v1918
    %v1934 = vor.u32 %v1932, %v1933
    %vm1935 = vcmp.lt.s32.totalorder %v1916, 1
    %vm1936 = vcmp.lt.s32.totalorder %v1916, 2
    %vm1937 = vcmp.lt.s32.totalorder %v1916, 3
    %vm1938 = vcmp.lt.s32.totalorder %v1916, 4
    %v1939 = vsel %vm1935, %v1919, %v1922
    %v1940 = vsel %vm1938, %v1928, 2102212464
    %v1941 = vsel %vm1937, %v1925, %v1940
    %v1942 = vsel %vm1936, %v1939, %v1941
    %v1943 = vsel %vm1935, %v1922, %v1925
    %v1944 = vsel %vm1938, %v1931, 920167782
    %v1945 = vsel %vm1937, %v1928, %v1944
    %v1946 = vsel %vm1936, %v1943, %v1945
    %v1947 = vsel %vm1935, %v1925, %v1928
    %v1948 = vsel %vm1938, %v1934, 1326507024
    %v1949 = vsel %vm1937, %v1931, %v1948
    %v1950 = vsel %vm1936, %v1947, %v1949
    %v1951 = vshll.u32 %v1911, 8
    %v1952 = vmul.u32.u64.compose %v1951, %v1950
    %v1953 = vextract.low.u32 %v1952
    %v1954 = vextract.high.u32 %v1952
    %v1955 = vmul.u32.u64.compose %v1951, %v1946
    %v1956 = vextract.low.u32 %v1955
    %v1957 = vextract.high.u32 %v1955
    %v1958 = vmul.u32 %v1951, %v1942
    %v1959 = vadd.s32 %v1954, %v1956
    %vm1960 = vc.u32 %v1954, %v1956
    %v1961 = vadd.s32 %v1957, 1
    %v1962 = vsel %vm1960, %v1961, %v1957
    %v1963 = vadd.s32 %v1958, %v1962
    %v1964 = vadd.s32 %v1963, 536870912
    %v1965 = vshrl.u32 %v1964, 30
    %v1966 = vshll.u32 %v1965, 30
    %v1967 = vsub.s32 %v1963, %v1966
    %vm1968 = vcmp.lt.s32.totalorder %v1967, 0
    %v1969 = vsub.s32 0, %v1967
    %v1970 = vsel %vm1968, %v1969, %v1967
    %v1971 = vclz %v1970
    %v1972 = vsub.s32 %v1971, 2
    %vm1973 = vcmp.gt.s32.totalorder 0, %v1972
    %v1974 = vsel %vm1973, 0, %v1972
    %v1975 = vsub.s32 32, %v1974
    %v1976 = vshll.u32 %v1967, %v1974
    %v1977 = vshrl.u32 %v1959, %v1975
    %v1978 = vor.u32 %v1976, %v1977
    %v1979 = vsub.s32 4294967266, %v1974
    %v1980 = vadd.s32 %v1979, 127
    %v1981 = vshll.u32 %v1980, 23
    %v1982 = vor.u32 4788187, %v1981
    %v1983 = vand.u32 2147483647, %v1982
    %v1985 = vcvt.s32.f32 %v1978
    %v1986 = vmul.f32 %v1985, %v1983
    %v1987 = vxor.u32 %v1986, 2147483648
    %v1988 = vsel %vm1905, %v1987, %v1986
    %v1989 = vsub.s32 4, %v1965
    %v1990 = vsel %vm1905, %v1989, %v1965
    %v1991 = vsel %vm1904, %v169, %v1988
    %v1992 = vsel %vm1904, 0, %v1990
    %v1993 = vcosq.f32.pop %v1991
    %v1994 = vsinq.f32.pop %v1991
    %vm1995 = vweird.f32 %v169
    %v1996 = vand.u32 %v1992, 3
    %vm1997 = vcmp.lt.s32.totalorder %v1996, 2
    %vm1998 = vcmp.eq.s32.totalorder %v1996, 0
    %v1999 = vxor.u32 %v1994, 2147483648
    %v2000 = vsel %vm1998, %v1993, %v1999
    %vm2001 = vcmp.eq.s32.totalorder %v1996, 2
    %v2002 = vxor.u32 %v1993, 2147483648
    %v2003 = vsel %vm2001, %v2002, %v1994
    %v2004 = vsel %vm1997, %v2000, %v2003
    %v2005 = vsel %vm1995, nan, %v2004
    %v2006 = vand.u32 2147483647, %v172
    %vm2007 = vcmp.le.f32.partialorder %v2006, 0.7853982
    %vm2008 = vcmp.lt.s32.totalorder %v172, 0
    %v2009 = vand.u32 %v172, 2139095040
    %v2010 = vshrl.u32 %v2009, 23
    %v2011 = vsub.s32 %v2010, 127
    %v2012 = vand.u32 2147483647, %v172
    %v2013 = vand.u32 %v2012, 8388607
    %v2014 = vor.u32 %v2013, 8388608
    %v2015 = vsub.s32 0, %v2014
    %v2016 = vadd.s32 %v2011, 1
    %vm2017 = vcmp.gt.s32.totalorder %v2016, 0
    %v2018 = vsel %vm2017, %v2016, 0
    %v2019 = vshrl.u32 %v2018, 5
    %v2020 = vand.u32 %v2018, 31
    %v2021 = vsub.s32 32, %v2020
    %v2022 = vshrl.u32 683565275, %v2021
    %v2023 = vshll.u32 683565275, %v2020
    %v2024 = vshrl.u32 2475754826, %v2021
    %v2025 = vor.u32 %v2023, %v2024
    %v2026 = vshll.u32 2475754826, %v2020
    %v2027 = vshrl.u32 2131351028, %v2021
    %v2028 = vor.u32 %v2026, %v2027
    %v2029 = vshll.u32 2131351028, %v2020
    %v2030 = vshrl.u32 2102212464, %v2021
    %v2031 = vor.u32 %v2029, %v2030
    %v2032 = vshll.u32 2102212464, %v2020
    %v2033 = vshrl.u32 920167782, %v2021
    %v2034 = vor.u32 %v2032, %v2033
    %v2035 = vshll.u32 920167782, %v2020
    %v2036 = vshrl.u32 1326507024, %v2021
    %v2037 = vor.u32 %v2035, %v2036
    %vm2038 = vcmp.lt.s32.totalorder %v2019, 1
    %vm2039 = vcmp.lt.s32.totalorder %v2019, 2
    %vm2040 = vcmp.lt.s32.totalorder %v2019, 3
    %vm2041 = vcmp.lt.s32.totalorder %v2019, 4
    %v2042 = vsel %vm2038, %v2022, %v2025
    %v2043 = vsel %vm2041, %v2031, 2102212464
    %v2044 = vsel %vm2040, %v2028, %v2043
    %v2045 = vsel %vm2039, %v2042, %v2044
    %v2046 = vsel %vm2038, %v2025, %v2028
    %v2047 = vsel %vm2041, %v2034, 920167782
    %v2048 = vsel %vm2040, %v2031, %v2047
    %v2049 = vsel %vm2039, %v2046, %v2048
    %v2050 = vsel %vm2038, %v2028, %v2031
    %v2051 = vsel %vm2041, %v2037, 1326507024
    %v2052 = vsel %vm2040, %v2034, %v2051
    %v2053 = vsel %vm2039, %v2050, %v2052
    %v2054 = vshll.u32 %v2014, 8
    %v2055 = vmul.u32.u64.compose %v2054, %v2053
    %v2056 = vextract.low.u32 %v2055
    %v2057 = vextract.high.u32 %v2055
    %v2058 = vmul.u32.u64.compose %v2054, %v2049
    %v2059 = vextract.low.u32 %v2058
    %v2060 = vextract.high.u32 %v2058
    %v2061 = vmul.u32 %v2054, %v2045
    %v2062 = vadd.s32 %v2057, %v2059
    %vm2063 = vc.u32 %v2057, %v2059
    %v2064 = vadd.s32 %v2060, 1
    %v2065 = vsel %vm2063, %v2064, %v2060
    %v2066 = vadd.s32 %v2061, %v2065
    %v2067 = vadd.s32 %v2066, 536870912
    %v2068 = vshrl.u32 %v2067, 30
    %v2069 = vshll.u32 %v2068, 30
    %v2070 = vsub.s32 %v2066, %v2069
    %vm2071 = vcmp.lt.s32.totalorder %v2070, 0
    %v2072 = vsub.s32 0, %v2070
    %v2073 = vsel %vm2071, %v2072, %v2070
    %v2074 = vclz %v2073
    %v2075 = vsub.s32 %v2074, 2
    %vm2076 = vcmp.gt.s32.totalorder 0, %v2075
    %v2077 = vsel %vm2076, 0, %v2075
    %v2078 = vsub.s32 32, %v2077
    %v2079 = vshll.u32 %v2070, %v2077
    %v2080 = vshrl.u32 %v2062, %v2078
    %v2081 = vor.u32 %v2079, %v2080
    %v2082 = vsub.s32 4294967266, %v2077
    %v2083 = vadd.s32 %v2082, 127
    %v2084 = vshll.u32 %v2083, 23
    %v2085 = vor.u32 4788187, %v2084
    %v2086 = vand.u32 2147483647, %v2085
    %v2088 = vcvt.s32.f32 %v2081
    %v2089 = vmul.f32 %v2088, %v2086
    %v2090 = vxor.u32 %v2089, 2147483648
    %v2091 = vsel %vm2008, %v2090, %v2089
    %v2092 = vsub.s32 4, %v2068
    %v2093 = vsel %vm2008, %v2092, %v2068
    %v2094 = vsel %vm2007, %v172, %v2091
    %v2095 = vsel %vm2007, 0, %v2093
    %v2096 = vcosq.f32.pop %v2094
    %v2097 = vsinq.f32.pop %v2094
    %vm2098 = vweird.f32 %v172
    %v2099 = vand.u32 %v2095, 3
    %vm2100 = vcmp.lt.s32.totalorder %v2099, 2
    %vm2101 = vcmp.eq.s32.totalorder %v2099, 0
    %v2102 = vxor.u32 %v2097, 2147483648
    %v2103 = vsel %vm2101, %v2096, %v2102
    %vm2104 = vcmp.eq.s32.totalorder %v2099, 2
    %v2105 = vxor.u32 %v2096, 2147483648
    %v2106 = vsel %vm2104, %v2105, %v2097
    %v2107 = vsel %vm2100, %v2103, %v2106
    %v2108 = vsel %vm2098, nan, %v2107
    %v2109 = vand.u32 2147483647, %v177
    %vm2110 = vcmp.le.f32.partialorder %v2109, 0.7853982
    %vm2111 = vcmp.lt.s32.totalorder %v177, 0
    %v2112 = vand.u32 %v177, 2139095040
    %v2113 = vshrl.u32 %v2112, 23
    %v2114 = vsub.s32 %v2113, 127
    %v2115 = vand.u32 2147483647, %v177
    %v2116 = vand.u32 %v2115, 8388607
    %v2117 = vor.u32 %v2116, 8388608
    %v2118 = vsub.s32 0, %v2117
    %v2119 = vadd.s32 %v2114, 1
    %vm2120 = vcmp.gt.s32.totalorder %v2119, 0
    %v2121 = vsel %vm2120, %v2119, 0
    %v2122 = vshrl.u32 %v2121, 5
    %v2123 = vand.u32 %v2121, 31
    %v2124 = vsub.s32 32, %v2123
    %v2125 = vshrl.u32 683565275, %v2124
    %v2126 = vshll.u32 683565275, %v2123
    %v2127 = vshrl.u32 2475754826, %v2124
    %v2128 = vor.u32 %v2126, %v2127
    %v2129 = vshll.u32 2475754826, %v2123
    %v2130 = vshrl.u32 2131351028, %v2124
    %v2131 = vor.u32 %v2129, %v2130
    %v2132 = vshll.u32 2131351028, %v2123
    %v2133 = vshrl.u32 2102212464, %v2124
    %v2134 = vor.u32 %v2132, %v2133
    %v2135 = vshll.u32 2102212464, %v2123
    %v2136 = vshrl.u32 920167782, %v2124
    %v2137 = vor.u32 %v2135, %v2136
    %v2138 = vshll.u32 920167782, %v2123
    %v2139 = vshrl.u32 1326507024, %v2124
    %v2140 = vor.u32 %v2138, %v2139
    %vm2141 = vcmp.lt.s32.totalorder %v2122, 1
    %vm2142 = vcmp.lt.s32.totalorder %v2122, 2
    %vm2143 = vcmp.lt.s32.totalorder %v2122, 3
    %vm2144 = vcmp.lt.s32.totalorder %v2122, 4
    %v2145 = vsel %vm2141, %v2125, %v2128
    %v2146 = vsel %vm2144, %v2134, 2102212464
    %v2147 = vsel %vm2143, %v2131, %v2146
    %v2148 = vsel %vm2142, %v2145, %v2147
    %v2149 = vsel %vm2141, %v2128, %v2131
    %v2150 = vsel %vm2144, %v2137, 920167782
    %v2151 = vsel %vm2143, %v2134, %v2150
    %v2152 = vsel %vm2142, %v2149, %v2151
    %v2153 = vsel %vm2141, %v2131, %v2134
    %v2154 = vsel %vm2144, %v2140, 1326507024
    %v2155 = vsel %vm2143, %v2137, %v2154
    %v2156 = vsel %vm2142, %v2153, %v2155
    %v2157 = vshll.u32 %v2117, 8
    %v2158 = vmul.u32.u64.compose %v2157, %v2156
    %v2159 = vextract.low.u32 %v2158
    %v2160 = vextract.high.u32 %v2158
    %v2161 = vmul.u32.u64.compose %v2157, %v2152
    %v2162 = vextract.low.u32 %v2161
    %v2163 = vextract.high.u32 %v2161
    %v2164 = vmul.u32 %v2157, %v2148
    %v2165 = vadd.s32 %v2160, %v2162
    %vm2166 = vc.u32 %v2160, %v2162
    %v2167 = vadd.s32 %v2163, 1
    %v2168 = vsel %vm2166, %v2167, %v2163
    %v2169 = vadd.s32 %v2164, %v2168
    %v2170 = vadd.s32 %v2169, 536870912
    %v2171 = vshrl.u32 %v2170, 30
    %v2172 = vshll.u32 %v2171, 30
    %v2173 = vsub.s32 %v2169, %v2172
    %vm2174 = vcmp.lt.s32.totalorder %v2173, 0
    %v2175 = vsub.s32 0, %v2173
    %v2176 = vsel %vm2174, %v2175, %v2173
    %v2177 = vclz %v2176
    %v2178 = vsub.s32 %v2177, 2
    %vm2179 = vcmp.gt.s32.totalorder 0, %v2178
    %v2180 = vsel %vm2179, 0, %v2178
    %v2181 = vsub.s32 32, %v2180
    %v2182 = vshll.u32 %v2173, %v2180
    %v2183 = vshrl.u32 %v2165, %v2181
    %v2184 = vor.u32 %v2182, %v2183
    %v2185 = vsub.s32 4294967266, %v2180
    %v2186 = vadd.s32 %v2185, 127
    %v2187 = vshll.u32 %v2186, 23
    %v2188 = vor.u32 4788187, %v2187
    %v2189 = vand.u32 2147483647, %v2188
    %v2191 = vcvt.s32.f32 %v2184
    %v2192 = vmul.f32 %v2191, %v2189
    %v2193 = vxor.u32 %v2192, 2147483648
    %v2194 = vsel %vm2111, %v2193, %v2192
    %v2195 = vsub.s32 4, %v2171
    %v2196 = vsel %vm2111, %v2195, %v2171
    %v2197 = vsel %vm2110, %v177, %v2194
    %v2198 = vsel %vm2110, 0, %v2196
    %v2199 = vcosq.f32.pop %v2197
    %v2200 = vsinq.f32.pop %v2197
    %vm2201 = vweird.f32 %v177
    %v2202 = vand.u32 %v2198, 3
    %vm2203 = vcmp.lt.s32.totalorder %v2202, 2
    %vm2204 = vcmp.eq.s32.totalorder %v2202, 0
    %v2205 = vxor.u32 %v2200, 2147483648
    %v2206 = vsel %vm2204, %v2199, %v2205
    %vm2207 = vcmp.eq.s32.totalorder %v2202, 2
    %v2208 = vxor.u32 %v2199, 2147483648
    %v2209 = vsel %vm2207, %v2208, %v2200
    %v2210 = vsel %vm2203, %v2206, %v2209
    %v2211 = vsel %vm2201, nan, %v2210
    %v2212 = vand.u32 2147483647, %v180
    %vm2213 = vcmp.le.f32.partialorder %v2212, 0.7853982
    %vm2214 = vcmp.lt.s32.totalorder %v180, 0
    %v2215 = vand.u32 %v180, 2139095040
    %v2216 = vshrl.u32 %v2215, 23
    %v2217 = vsub.s32 %v2216, 127
    %v2218 = vand.u32 2147483647, %v180
    %v2219 = vand.u32 %v2218, 8388607
    %v2220 = vor.u32 %v2219, 8388608
    %v2221 = vsub.s32 0, %v2220
    %v2222 = vadd.s32 %v2217, 1
    %vm2223 = vcmp.gt.s32.totalorder %v2222, 0
    %v2224 = vsel %vm2223, %v2222, 0
    %v2225 = vshrl.u32 %v2224, 5
    %v2226 = vand.u32 %v2224, 31
    %v2227 = vsub.s32 32, %v2226
    %v2228 = vshrl.u32 683565275, %v2227
    %v2229 = vshll.u32 683565275, %v2226
    %v2230 = vshrl.u32 2475754826, %v2227
    %v2231 = vor.u32 %v2229, %v2230
    %v2232 = vshll.u32 2475754826, %v2226
    %v2233 = vshrl.u32 2131351028, %v2227
    %v2234 = vor.u32 %v2232, %v2233
    %v2235 = vshll.u32 2131351028, %v2226
    %v2236 = vshrl.u32 2102212464, %v2227
    %v2237 = vor.u32 %v2235, %v2236
    %v2238 = vshll.u32 2102212464, %v2226
    %v2239 = vshrl.u32 920167782, %v2227
    %v2240 = vor.u32 %v2238, %v2239
    %v2241 = vshll.u32 920167782, %v2226
    %v2242 = vshrl.u32 1326507024, %v2227
    %v2243 = vor.u32 %v2241, %v2242
    %vm2244 = vcmp.lt.s32.totalorder %v2225, 1
    %vm2245 = vcmp.lt.s32.totalorder %v2225, 2
    %vm2246 = vcmp.lt.s32.totalorder %v2225, 3
    %vm2247 = vcmp.lt.s32.totalorder %v2225, 4
    %v2248 = vsel %vm2244, %v2228, %v2231
    %v2249 = vsel %vm2247, %v2237, 2102212464
    %v2250 = vsel %vm2246, %v2234, %v2249
    %v2251 = vsel %vm2245, %v2248, %v2250
    %v2252 = vsel %vm2244, %v2231, %v2234
    %v2253 = vsel %vm2247, %v2240, 920167782
    %v2254 = vsel %vm2246, %v2237, %v2253
    %v2255 = vsel %vm2245, %v2252, %v2254
    %v2256 = vsel %vm2244, %v2234, %v2237
    %v2257 = vsel %vm2247, %v2243, 1326507024
    %v2258 = vsel %vm2246, %v2240, %v2257
    %v2259 = vsel %vm2245, %v2256, %v2258
    %v2260 = vshll.u32 %v2220, 8
    %v2261 = vmul.u32.u64.compose %v2260, %v2259
    %v2262 = vextract.low.u32 %v2261
    %v2263 = vextract.high.u32 %v2261
    %v2264 = vmul.u32.u64.compose %v2260, %v2255
    %v2265 = vextract.low.u32 %v2264
    %v2266 = vextract.high.u32 %v2264
    %v2267 = vmul.u32 %v2260, %v2251
    %v2268 = vadd.s32 %v2263, %v2265
    %vm2269 = vc.u32 %v2263, %v2265
    %v2270 = vadd.s32 %v2266, 1
    %v2271 = vsel %vm2269, %v2270, %v2266
    %v2272 = vadd.s32 %v2267, %v2271
    %v2273 = vadd.s32 %v2272, 536870912
    %v2274 = vshrl.u32 %v2273, 30
    %v2275 = vshll.u32 %v2274, 30
    %v2276 = vsub.s32 %v2272, %v2275
    %vm2277 = vcmp.lt.s32.totalorder %v2276, 0
    %v2278 = vsub.s32 0, %v2276
    %v2279 = vsel %vm2277, %v2278, %v2276
    %v2280 = vclz %v2279
    %v2281 = vsub.s32 %v2280, 2
    %vm2282 = vcmp.gt.s32.totalorder 0, %v2281
    %v2283 = vsel %vm2282, 0, %v2281
    %v2284 = vsub.s32 32, %v2283
    %v2285 = vshll.u32 %v2276, %v2283
    %v2286 = vshrl.u32 %v2268, %v2284
    %v2287 = vor.u32 %v2285, %v2286
    %v2288 = vsub.s32 4294967266, %v2283
    %v2289 = vadd.s32 %v2288, 127
    %v2290 = vshll.u32 %v2289, 23
    %v2291 = vor.u32 4788187, %v2290
    %v2292 = vand.u32 2147483647, %v2291
    %v2294 = vcvt.s32.f32 %v2287
    %v2295 = vmul.f32 %v2294, %v2292
    %v2296 = vxor.u32 %v2295, 2147483648
    %v2297 = vsel %vm2214, %v2296, %v2295
    %v2298 = vsub.s32 4, %v2274
    %v2299 = vsel %vm2214, %v2298, %v2274
    %v2300 = vsel %vm2213, %v180, %v2297
    %v2301 = vsel %vm2213, 0, %v2299
    %v2302 = vcosq.f32.pop %v2300
    %v2303 = vsinq.f32.pop %v2300
    %vm2304 = vweird.f32 %v180
    %v2305 = vand.u32 %v2301, 3
    %vm2306 = vcmp.lt.s32.totalorder %v2305, 2
    %vm2307 = vcmp.eq.s32.totalorder %v2305, 0
    %v2308 = vxor.u32 %v2303, 2147483648
    %v2309 = vsel %vm2307, %v2302, %v2308
    %vm2310 = vcmp.eq.s32.totalorder %v2305, 2
    %v2311 = vxor.u32 %v2302, 2147483648
    %v2312 = vsel %vm2310, %v2311, %v2303
    %v2313 = vsel %vm2306, %v2309, %v2312
    %v2314 = vsel %vm2304, nan, %v2313
    %v2315 = vand.u32 2147483647, %v185
    %vm2316 = vcmp.le.f32.partialorder %v2315, 0.7853982
    %vm2317 = vcmp.lt.s32.totalorder %v185, 0
    %v2318 = vand.u32 %v185, 2139095040
    %v2319 = vshrl.u32 %v2318, 23
    %v2320 = vsub.s32 %v2319, 127
    %v2321 = vand.u32 2147483647, %v185
    %v2322 = vand.u32 %v2321, 8388607
    %v2323 = vor.u32 %v2322, 8388608
    %v2324 = vsub.s32 0, %v2323
    %v2325 = vadd.s32 %v2320, 1
    %vm2326 = vcmp.gt.s32.totalorder %v2325, 0
    %v2327 = vsel %vm2326, %v2325, 0
    %v2328 = vshrl.u32 %v2327, 5
    %v2329 = vand.u32 %v2327, 31
    %v2330 = vsub.s32 32, %v2329
    %v2331 = vshrl.u32 683565275, %v2330
    %v2332 = vshll.u32 683565275, %v2329
    %v2333 = vshrl.u32 2475754826, %v2330
    %v2334 = vor.u32 %v2332, %v2333
    %v2335 = vshll.u32 2475754826, %v2329
    %v2336 = vshrl.u32 2131351028, %v2330
    %v2337 = vor.u32 %v2335, %v2336
    %v2338 = vshll.u32 2131351028, %v2329
    %v2339 = vshrl.u32 2102212464, %v2330
    %v2340 = vor.u32 %v2338, %v2339
    %v2341 = vshll.u32 2102212464, %v2329
    %v2342 = vshrl.u32 920167782, %v2330
    %v2343 = vor.u32 %v2341, %v2342
    %v2344 = vshll.u32 920167782, %v2329
    %v2345 = vshrl.u32 1326507024, %v2330
    %v2346 = vor.u32 %v2344, %v2345
    %vm2347 = vcmp.lt.s32.totalorder %v2328, 1
    %vm2348 = vcmp.lt.s32.totalorder %v2328, 2
    %vm2349 = vcmp.lt.s32.totalorder %v2328, 3
    %vm2350 = vcmp.lt.s32.totalorder %v2328, 4
    %v2351 = vsel %vm2347, %v2331, %v2334
    %v2352 = vsel %vm2350, %v2340, 2102212464
    %v2353 = vsel %vm2349, %v2337, %v2352
    %v2354 = vsel %vm2348, %v2351, %v2353
    %v2355 = vsel %vm2347, %v2334, %v2337
    %v2356 = vsel %vm2350, %v2343, 920167782
    %v2357 = vsel %vm2349, %v2340, %v2356
    %v2358 = vsel %vm2348, %v2355, %v2357
    %v2359 = vsel %vm2347, %v2337, %v2340
    %v2360 = vsel %vm2350, %v2346, 1326507024
    %v2361 = vsel %vm2349, %v2343, %v2360
    %v2362 = vsel %vm2348, %v2359, %v2361
    %v2363 = vshll.u32 %v2323, 8
    %v2364 = vmul.u32.u64.compose %v2363, %v2362
    %v2365 = vextract.low.u32 %v2364
    %v2366 = vextract.high.u32 %v2364
    %v2367 = vmul.u32.u64.compose %v2363, %v2358
    %v2368 = vextract.low.u32 %v2367
    %v2369 = vextract.high.u32 %v2367
    %v2370 = vmul.u32 %v2363, %v2354
    %v2371 = vadd.s32 %v2366, %v2368
    %vm2372 = vc.u32 %v2366, %v2368
    %v2373 = vadd.s32 %v2369, 1
    %v2374 = vsel %vm2372, %v2373, %v2369
    %v2375 = vadd.s32 %v2370, %v2374
    %v2376 = vadd.s32 %v2375, 536870912
    %v2377 = vshrl.u32 %v2376, 30
    %v2378 = vshll.u32 %v2377, 30
    %v2379 = vsub.s32 %v2375, %v2378
    %vm2380 = vcmp.lt.s32.totalorder %v2379, 0
    %v2381 = vsub.s32 0, %v2379
    %v2382 = vsel %vm2380, %v2381, %v2379
    %v2383 = vclz %v2382
    %v2384 = vsub.s32 %v2383, 2
    %vm2385 = vcmp.gt.s32.totalorder 0, %v2384
    %v2386 = vsel %vm2385, 0, %v2384
    %v2387 = vsub.s32 32, %v2386
    %v2388 = vshll.u32 %v2379, %v2386
    %v2389 = vshrl.u32 %v2371, %v2387
    %v2390 = vor.u32 %v2388, %v2389
    %v2391 = vsub.s32 4294967266, %v2386
    %v2392 = vadd.s32 %v2391, 127
    %v2393 = vshll.u32 %v2392, 23
    %v2394 = vor.u32 4788187, %v2393
    %v2395 = vand.u32 2147483647, %v2394
    %v2397 = vcvt.s32.f32 %v2390
    %v2398 = vmul.f32 %v2397, %v2395
    %v2399 = vxor.u32 %v2398, 2147483648
    %v2400 = vsel %vm2317, %v2399, %v2398
    %v2401 = vsub.s32 4, %v2377
    %v2402 = vsel %vm2317, %v2401, %v2377
    %v2403 = vsel %vm2316, %v185, %v2400
    %v2404 = vsel %vm2316, 0, %v2402
    %v2405 = vcosq.f32.pop %v2403
    %v2406 = vsinq.f32.pop %v2403
    %vm2407 = vweird.f32 %v185
    %v2408 = vand.u32 %v2404, 3
    %vm2409 = vcmp.lt.s32.totalorder %v2408, 2
    %vm2410 = vcmp.eq.s32.totalorder %v2408, 0
    %v2411 = vxor.u32 %v2406, 2147483648
    %v2412 = vsel %vm2410, %v2405, %v2411
    %vm2413 = vcmp.eq.s32.totalorder %v2408, 2
    %v2414 = vxor.u32 %v2405, 2147483648
    %v2415 = vsel %vm2413, %v2414, %v2406
    %v2416 = vsel %vm2409, %v2412, %v2415
    %v2417 = vsel %vm2407, nan, %v2416
    %v2418 = vand.u32 2147483647, %v188
    %vm2419 = vcmp.le.f32.partialorder %v2418, 0.7853982
    %vm2420 = vcmp.lt.s32.totalorder %v188, 0
    %v2421 = vand.u32 %v188, 2139095040
    %v2422 = vshrl.u32 %v2421, 23
    %v2423 = vsub.s32 %v2422, 127
    %v2424 = vand.u32 2147483647, %v188
    %v2425 = vand.u32 %v2424, 8388607
    %v2426 = vor.u32 %v2425, 8388608
    %v2427 = vsub.s32 0, %v2426
    %v2428 = vadd.s32 %v2423, 1
    %vm2429 = vcmp.gt.s32.totalorder %v2428, 0
    %v2430 = vsel %vm2429, %v2428, 0
    %v2431 = vshrl.u32 %v2430, 5
    %v2432 = vand.u32 %v2430, 31
    %v2433 = vsub.s32 32, %v2432
    %v2434 = vshrl.u32 683565275, %v2433
    %v2435 = vshll.u32 683565275, %v2432
    %v2436 = vshrl.u32 2475754826, %v2433
    %v2437 = vor.u32 %v2435, %v2436
    %v2438 = vshll.u32 2475754826, %v2432
    %v2439 = vshrl.u32 2131351028, %v2433
    %v2440 = vor.u32 %v2438, %v2439
    %v2441 = vshll.u32 2131351028, %v2432
    %v2442 = vshrl.u32 2102212464, %v2433
    %v2443 = vor.u32 %v2441, %v2442
    %v2444 = vshll.u32 2102212464, %v2432
    %v2445 = vshrl.u32 920167782, %v2433
    %v2446 = vor.u32 %v2444, %v2445
    %v2447 = vshll.u32 920167782, %v2432
    %v2448 = vshrl.u32 1326507024, %v2433
    %v2449 = vor.u32 %v2447, %v2448
    %vm2450 = vcmp.lt.s32.totalorder %v2431, 1
    %vm2451 = vcmp.lt.s32.totalorder %v2431, 2
    %vm2452 = vcmp.lt.s32.totalorder %v2431, 3
    %vm2453 = vcmp.lt.s32.totalorder %v2431, 4
    %v2454 = vsel %vm2450, %v2434, %v2437
    %v2455 = vsel %vm2453, %v2443, 2102212464
    %v2456 = vsel %vm2452, %v2440, %v2455
    %v2457 = vsel %vm2451, %v2454, %v2456
    %v2458 = vsel %vm2450, %v2437, %v2440
    %v2459 = vsel %vm2453, %v2446, 920167782
    %v2460 = vsel %vm2452, %v2443, %v2459
    %v2461 = vsel %vm2451, %v2458, %v2460
    %v2462 = vsel %vm2450, %v2440, %v2443
    %v2463 = vsel %vm2453, %v2449, 1326507024
    %v2464 = vsel %vm2452, %v2446, %v2463
    %v2465 = vsel %vm2451, %v2462, %v2464
    %v2466 = vshll.u32 %v2426, 8
    %v2467 = vmul.u32.u64.compose %v2466, %v2465
    %v2468 = vextract.low.u32 %v2467
    %v2469 = vextract.high.u32 %v2467
    %v2470 = vmul.u32.u64.compose %v2466, %v2461
    %v2471 = vextract.low.u32 %v2470
    %v2472 = vextract.high.u32 %v2470
    %v2473 = vmul.u32 %v2466, %v2457
    %v2474 = vadd.s32 %v2469, %v2471
    %vm2475 = vc.u32 %v2469, %v2471
    %v2476 = vadd.s32 %v2472, 1
    %v2477 = vsel %vm2475, %v2476, %v2472
    %v2478 = vadd.s32 %v2473, %v2477
    %v2479 = vadd.s32 %v2478, 536870912
    %v2480 = vshrl.u32 %v2479, 30
    %v2481 = vshll.u32 %v2480, 30
    %v2482 = vsub.s32 %v2478, %v2481
    %vm2483 = vcmp.lt.s32.totalorder %v2482, 0
    %v2484 = vsub.s32 0, %v2482
    %v2485 = vsel %vm2483, %v2484, %v2482
    %v2486 = vclz %v2485
    %v2487 = vsub.s32 %v2486, 2
    %vm2488 = vcmp.gt.s32.totalorder 0, %v2487
    %v2489 = vsel %vm2488, 0, %v2487
    %v2490 = vsub.s32 32, %v2489
    %v2491 = vshll.u32 %v2482, %v2489
    %v2492 = vshrl.u32 %v2474, %v2490
    %v2493 = vor.u32 %v2491, %v2492
    %v2494 = vsub.s32 4294967266, %v2489
    %v2495 = vadd.s32 %v2494, 127
    %v2496 = vshll.u32 %v2495, 23
    %v2497 = vor.u32 4788187, %v2496
    %v2498 = vand.u32 2147483647, %v2497
    %v2500 = vcvt.s32.f32 %v2493
    %v2501 = vmul.f32 %v2500, %v2498
    %v2502 = vxor.u32 %v2501, 2147483648
    %v2503 = vsel %vm2420, %v2502, %v2501
    %v2504 = vsub.s32 4, %v2480
    %v2505 = vsel %vm2420, %v2504, %v2480
    %v2506 = vsel %vm2419, %v188, %v2503
    %v2507 = vsel %vm2419, 0, %v2505
    %v2508 = vcosq.f32.pop %v2506
    %v2509 = vsinq.f32.pop %v2506
    %vm2510 = vweird.f32 %v188
    %v2511 = vand.u32 %v2507, 3
    %vm2512 = vcmp.lt.s32.totalorder %v2511, 2
    %vm2513 = vcmp.eq.s32.totalorder %v2511, 0
    %v2514 = vxor.u32 %v2509, 2147483648
    %v2515 = vsel %vm2513, %v2508, %v2514
    %vm2516 = vcmp.eq.s32.totalorder %v2511, 2
    %v2517 = vxor.u32 %v2508, 2147483648
    %v2518 = vsel %vm2516, %v2517, %v2509
    %v2519 = vsel %vm2512, %v2515, %v2518
    %v2520 = vsel %vm2510, nan, %v2519
    %v2521 = vand.u32 2147483647, %v193
    %vm2522 = vcmp.le.f32.partialorder %v2521, 0.7853982
    %vm2523 = vcmp.lt.s32.totalorder %v193, 0
    %v2524 = vand.u32 %v193, 2139095040
    %v2525 = vshrl.u32 %v2524, 23
    %v2526 = vsub.s32 %v2525, 127
    %v2527 = vand.u32 2147483647, %v193
    %v2528 = vand.u32 %v2527, 8388607
    %v2529 = vor.u32 %v2528, 8388608
    %v2530 = vsub.s32 0, %v2529
    %v2531 = vadd.s32 %v2526, 1
    %vm2532 = vcmp.gt.s32.totalorder %v2531, 0
    %v2533 = vsel %vm2532, %v2531, 0
    %v2534 = vshrl.u32 %v2533, 5
    %v2535 = vand.u32 %v2533, 31
    %v2536 = vsub.s32 32, %v2535
    %v2537 = vshrl.u32 683565275, %v2536
    %v2538 = vshll.u32 683565275, %v2535
    %v2539 = vshrl.u32 2475754826, %v2536
    %v2540 = vor.u32 %v2538, %v2539
    %v2541 = vshll.u32 2475754826, %v2535
    %v2542 = vshrl.u32 2131351028, %v2536
    %v2543 = vor.u32 %v2541, %v2542
    %v2544 = vshll.u32 2131351028, %v2535
    %v2545 = vshrl.u32 2102212464, %v2536
    %v2546 = vor.u32 %v2544, %v2545
    %v2547 = vshll.u32 2102212464, %v2535
    %v2548 = vshrl.u32 920167782, %v2536
    %v2549 = vor.u32 %v2547, %v2548
    %v2550 = vshll.u32 920167782, %v2535
    %v2551 = vshrl.u32 1326507024, %v2536
    %v2552 = vor.u32 %v2550, %v2551
    %vm2553 = vcmp.lt.s32.totalorder %v2534, 1
    %vm2554 = vcmp.lt.s32.totalorder %v2534, 2
    %vm2555 = vcmp.lt.s32.totalorder %v2534, 3
    %vm2556 = vcmp.lt.s32.totalorder %v2534, 4
    %v2557 = vsel %vm2553, %v2537, %v2540
    %v2558 = vsel %vm2556, %v2546, 2102212464
    %v2559 = vsel %vm2555, %v2543, %v2558
    %v2560 = vsel %vm2554, %v2557, %v2559
    %v2561 = vsel %vm2553, %v2540, %v2543
    %v2562 = vsel %vm2556, %v2549, 920167782
    %v2563 = vsel %vm2555, %v2546, %v2562
    %v2564 = vsel %vm2554, %v2561, %v2563
    %v2565 = vsel %vm2553, %v2543, %v2546
    %v2566 = vsel %vm2556, %v2552, 1326507024
    %v2567 = vsel %vm2555, %v2549, %v2566
    %v2568 = vsel %vm2554, %v2565, %v2567
    %v2569 = vshll.u32 %v2529, 8
    %v2570 = vmul.u32.u64.compose %v2569, %v2568
    %v2571 = vextract.low.u32 %v2570
    %v2572 = vextract.high.u32 %v2570
    %v2573 = vmul.u32.u64.compose %v2569, %v2564
    %v2574 = vextract.low.u32 %v2573
    %v2575 = vextract.high.u32 %v2573
    %v2576 = vmul.u32 %v2569, %v2560
    %v2577 = vadd.s32 %v2572, %v2574
    %vm2578 = vc.u32 %v2572, %v2574
    %v2579 = vadd.s32 %v2575, 1
    %v2580 = vsel %vm2578, %v2579, %v2575
    %v2581 = vadd.s32 %v2576, %v2580
    %v2582 = vadd.s32 %v2581, 536870912
    %v2583 = vshrl.u32 %v2582, 30
    %v2584 = vshll.u32 %v2583, 30
    %v2585 = vsub.s32 %v2581, %v2584
    %vm2586 = vcmp.lt.s32.totalorder %v2585, 0
    %v2587 = vsub.s32 0, %v2585
    %v2588 = vsel %vm2586, %v2587, %v2585
    %v2589 = vclz %v2588
    %v2590 = vsub.s32 %v2589, 2
    %vm2591 = vcmp.gt.s32.totalorder 0, %v2590
    %v2592 = vsel %vm2591, 0, %v2590
    %v2593 = vsub.s32 32, %v2592
    %v2594 = vshll.u32 %v2585, %v2592
    %v2595 = vshrl.u32 %v2577, %v2593
    %v2596 = vor.u32 %v2594, %v2595
    %v2597 = vsub.s32 4294967266, %v2592
    %v2598 = vadd.s32 %v2597, 127
    %v2599 = vshll.u32 %v2598, 23
    %v2600 = vor.u32 4788187, %v2599
    %v2601 = vand.u32 2147483647, %v2600
    %v2603 = vcvt.s32.f32 %v2596
    %v2604 = vmul.f32 %v2603, %v2601
    %v2605 = vxor.u32 %v2604, 2147483648
    %v2606 = vsel %vm2523, %v2605, %v2604
    %v2607 = vsub.s32 4, %v2583
    %v2608 = vsel %vm2523, %v2607, %v2583
    %v2609 = vsel %vm2522, %v193, %v2606
    %v2610 = vsel %vm2522, 0, %v2608
    %v2611 = vcosq.f32.pop %v2609
    %v2612 = vsinq.f32.pop %v2609
    %vm2613 = vweird.f32 %v193
    %v2614 = vand.u32 %v2610, 3
    %vm2615 = vcmp.lt.s32.totalorder %v2614, 2
    %vm2616 = vcmp.eq.s32.totalorder %v2614, 0
    %v2617 = vxor.u32 %v2612, 2147483648
    %v2618 = vsel %vm2616, %v2611, %v2617
    %vm2619 = vcmp.eq.s32.totalorder %v2614, 2
    %v2620 = vxor.u32 %v2611, 2147483648
    %v2621 = vsel %vm2619, %v2620, %v2612
    %v2622 = vsel %vm2615, %v2618, %v2621
    %v2623 = vsel %vm2613, nan, %v2622
    %v2624 = vand.u32 2147483647, %v196
    %vm2625 = vcmp.le.f32.partialorder %v2624, 0.7853982
    %vm2626 = vcmp.lt.s32.totalorder %v196, 0
    %v2627 = vand.u32 %v196, 2139095040
    %v2628 = vshrl.u32 %v2627, 23
    %v2629 = vsub.s32 %v2628, 127
    %v2630 = vand.u32 2147483647, %v196
    %v2631 = vand.u32 %v2630, 8388607
    %v2632 = vor.u32 %v2631, 8388608
    %v2633 = vsub.s32 0, %v2632
    %v2634 = vadd.s32 %v2629, 1
    %vm2635 = vcmp.gt.s32.totalorder %v2634, 0
    %v2636 = vsel %vm2635, %v2634, 0
    %v2637 = vshrl.u32 %v2636, 5
    %v2638 = vand.u32 %v2636, 31
    %v2639 = vsub.s32 32, %v2638
    %v2640 = vshrl.u32 683565275, %v2639
    %v2641 = vshll.u32 683565275, %v2638
    %v2642 = vshrl.u32 2475754826, %v2639
    %v2643 = vor.u32 %v2641, %v2642
    %v2644 = vshll.u32 2475754826, %v2638
    %v2645 = vshrl.u32 2131351028, %v2639
    %v2646 = vor.u32 %v2644, %v2645
    %v2647 = vshll.u32 2131351028, %v2638
    %v2648 = vshrl.u32 2102212464, %v2639
    %v2649 = vor.u32 %v2647, %v2648
    %v2650 = vshll.u32 2102212464, %v2638
    %v2651 = vshrl.u32 920167782, %v2639
    %v2652 = vor.u32 %v2650, %v2651
    %v2653 = vshll.u32 920167782, %v2638
    %v2654 = vshrl.u32 1326507024, %v2639
    %v2655 = vor.u32 %v2653, %v2654
    %vm2656 = vcmp.lt.s32.totalorder %v2637, 1
    %vm2657 = vcmp.lt.s32.totalorder %v2637, 2
    %vm2658 = vcmp.lt.s32.totalorder %v2637, 3
    %vm2659 = vcmp.lt.s32.totalorder %v2637, 4
    %v2660 = vsel %vm2656, %v2640, %v2643
    %v2661 = vsel %vm2659, %v2649, 2102212464
    %v2662 = vsel %vm2658, %v2646, %v2661
    %v2663 = vsel %vm2657, %v2660, %v2662
    %v2664 = vsel %vm2656, %v2643, %v2646
    %v2665 = vsel %vm2659, %v2652, 920167782
    %v2666 = vsel %vm2658, %v2649, %v2665
    %v2667 = vsel %vm2657, %v2664, %v2666
    %v2668 = vsel %vm2656, %v2646, %v2649
    %v2669 = vsel %vm2659, %v2655, 1326507024
    %v2670 = vsel %vm2658, %v2652, %v2669
    %v2671 = vsel %vm2657, %v2668, %v2670
    %v2672 = vshll.u32 %v2632, 8
    %v2673 = vmul.u32.u64.compose %v2672, %v2671
    %v2674 = vextract.low.u32 %v2673
    %v2675 = vextract.high.u32 %v2673
    %v2676 = vmul.u32.u64.compose %v2672, %v2667
    %v2677 = vextract.low.u32 %v2676
    %v2678 = vextract.high.u32 %v2676
    %v2679 = vmul.u32 %v2672, %v2663
    %v2680 = vadd.s32 %v2675, %v2677
    %vm2681 = vc.u32 %v2675, %v2677
    %v2682 = vadd.s32 %v2678, 1
    %v2683 = vsel %vm2681, %v2682, %v2678
    %v2684 = vadd.s32 %v2679, %v2683
    %v2685 = vadd.s32 %v2684, 536870912
    %v2686 = vshrl.u32 %v2685, 30
    %v2687 = vshll.u32 %v2686, 30
    %v2688 = vsub.s32 %v2684, %v2687
    %vm2689 = vcmp.lt.s32.totalorder %v2688, 0
    %v2690 = vsub.s32 0, %v2688
    %v2691 = vsel %vm2689, %v2690, %v2688
    %v2692 = vclz %v2691
    %v2693 = vsub.s32 %v2692, 2
    %vm2694 = vcmp.gt.s32.totalorder 0, %v2693
    %v2695 = vsel %vm2694, 0, %v2693
    %v2696 = vsub.s32 32, %v2695
    %v2697 = vshll.u32 %v2688, %v2695
    %v2698 = vshrl.u32 %v2680, %v2696
    %v2699 = vor.u32 %v2697, %v2698
    %v2700 = vsub.s32 4294967266, %v2695
    %v2701 = vadd.s32 %v2700, 127
    %v2702 = vshll.u32 %v2701, 23
    %v2703 = vor.u32 4788187, %v2702
    %v2704 = vand.u32 2147483647, %v2703
    %v2706 = vcvt.s32.f32 %v2699
    %v2707 = vmul.f32 %v2706, %v2704
    %v2708 = vxor.u32 %v2707, 2147483648
    %v2709 = vsel %vm2626, %v2708, %v2707
    %v2710 = vsub.s32 4, %v2686
    %v2711 = vsel %vm2626, %v2710, %v2686
    %v2712 = vsel %vm2625, %v196, %v2709
    %v2713 = vsel %vm2625, 0, %v2711
    %v2714 = vcosq.f32.pop %v2712
    %v2715 = vsinq.f32.pop %v2712
    %vm2716 = vweird.f32 %v196
    %v2717 = vand.u32 %v2713, 3
    %vm2718 = vcmp.lt.s32.totalorder %v2717, 2
    %vm2719 = vcmp.eq.s32.totalorder %v2717, 0
    %v2720 = vxor.u32 %v2715, 2147483648
    %v2721 = vsel %vm2719, %v2714, %v2720
    %vm2722 = vcmp.eq.s32.totalorder %v2717, 2
    %v2723 = vxor.u32 %v2714, 2147483648
    %v2724 = vsel %vm2722, %v2723, %v2715
    %v2725 = vsel %vm2718, %v2721, %v2724
    %v2726 = vsel %vm2716, nan, %v2725
    %v2727 = vand.u32 2147483647, %v201
    %vm2728 = vcmp.le.f32.partialorder %v2727, 0.7853982
    %vm2729 = vcmp.lt.s32.totalorder %v201, 0
    %v2730 = vand.u32 %v201, 2139095040
    %v2731 = vshrl.u32 %v2730, 23
    %v2732 = vsub.s32 %v2731, 127
    %v2733 = vand.u32 2147483647, %v201
    %v2734 = vand.u32 %v2733, 8388607
    %v2735 = vor.u32 %v2734, 8388608
    %v2736 = vsub.s32 0, %v2735
    %v2737 = vadd.s32 %v2732, 1
    %vm2738 = vcmp.gt.s32.totalorder %v2737, 0
    %v2739 = vsel %vm2738, %v2737, 0
    %v2740 = vshrl.u32 %v2739, 5
    %v2741 = vand.u32 %v2739, 31
    %v2742 = vsub.s32 32, %v2741
    %v2743 = vshrl.u32 683565275, %v2742
    %v2744 = vshll.u32 683565275, %v2741
    %v2745 = vshrl.u32 2475754826, %v2742
    %v2746 = vor.u32 %v2744, %v2745
    %v2747 = vshll.u32 2475754826, %v2741
    %v2748 = vshrl.u32 2131351028, %v2742
    %v2749 = vor.u32 %v2747, %v2748
    %v2750 = vshll.u32 2131351028, %v2741
    %v2751 = vshrl.u32 2102212464, %v2742
    %v2752 = vor.u32 %v2750, %v2751
    %v2753 = vshll.u32 2102212464, %v2741
    %v2754 = vshrl.u32 920167782, %v2742
    %v2755 = vor.u32 %v2753, %v2754
    %v2756 = vshll.u32 920167782, %v2741
    %v2757 = vshrl.u32 1326507024, %v2742
    %v2758 = vor.u32 %v2756, %v2757
    %vm2759 = vcmp.lt.s32.totalorder %v2740, 1
    %vm2760 = vcmp.lt.s32.totalorder %v2740, 2
    %vm2761 = vcmp.lt.s32.totalorder %v2740, 3
    %vm2762 = vcmp.lt.s32.totalorder %v2740, 4
    %v2763 = vsel %vm2759, %v2743, %v2746
    %v2764 = vsel %vm2762, %v2752, 2102212464
    %v2765 = vsel %vm2761, %v2749, %v2764
    %v2766 = vsel %vm2760, %v2763, %v2765
    %v2767 = vsel %vm2759, %v2746, %v2749
    %v2768 = vsel %vm2762, %v2755, 920167782
    %v2769 = vsel %vm2761, %v2752, %v2768
    %v2770 = vsel %vm2760, %v2767, %v2769
    %v2771 = vsel %vm2759, %v2749, %v2752
    %v2772 = vsel %vm2762, %v2758, 1326507024
    %v2773 = vsel %vm2761, %v2755, %v2772
    %v2774 = vsel %vm2760, %v2771, %v2773
    %v2775 = vshll.u32 %v2735, 8
    %v2776 = vmul.u32.u64.compose %v2775, %v2774
    %v2777 = vextract.low.u32 %v2776
    %v2778 = vextract.high.u32 %v2776
    %v2779 = vmul.u32.u64.compose %v2775, %v2770
    %v2780 = vextract.low.u32 %v2779
    %v2781 = vextract.high.u32 %v2779
    %v2782 = vmul.u32 %v2775, %v2766
    %v2783 = vadd.s32 %v2778, %v2780
    %vm2784 = vc.u32 %v2778, %v2780
    %v2785 = vadd.s32 %v2781, 1
    %v2786 = vsel %vm2784, %v2785, %v2781
    %v2787 = vadd.s32 %v2782, %v2786
    %v2788 = vadd.s32 %v2787, 536870912
    %v2789 = vshrl.u32 %v2788, 30
    %v2790 = vshll.u32 %v2789, 30
    %v2791 = vsub.s32 %v2787, %v2790
    %vm2792 = vcmp.lt.s32.totalorder %v2791, 0
    %v2793 = vsub.s32 0, %v2791
    %v2794 = vsel %vm2792, %v2793, %v2791
    %v2795 = vclz %v2794
    %v2796 = vsub.s32 %v2795, 2
    %vm2797 = vcmp.gt.s32.totalorder 0, %v2796
    %v2798 = vsel %vm2797, 0, %v2796
    %v2799 = vsub.s32 32, %v2798
    %v2800 = vshll.u32 %v2791, %v2798
    %v2801 = vshrl.u32 %v2783, %v2799
    %v2802 = vor.u32 %v2800, %v2801
    %v2803 = vsub.s32 4294967266, %v2798
    %v2804 = vadd.s32 %v2803, 127
    %v2805 = vshll.u32 %v2804, 23
    %v2806 = vor.u32 4788187, %v2805
    %v2807 = vand.u32 2147483647, %v2806
    %v2809 = vcvt.s32.f32 %v2802
    %v2810 = vmul.f32 %v2809, %v2807
    %v2811 = vxor.u32 %v2810, 2147483648
    %v2812 = vsel %vm2729, %v2811, %v2810
    %v2813 = vsub.s32 4, %v2789
    %v2814 = vsel %vm2729, %v2813, %v2789
    %v2815 = vsel %vm2728, %v201, %v2812
    %v2816 = vsel %vm2728, 0, %v2814
    %v2817 = vcosq.f32.pop %v2815
    %v2818 = vsinq.f32.pop %v2815
    %vm2819 = vweird.f32 %v201
    %v2820 = vand.u32 %v2816, 3
    %vm2821 = vcmp.lt.s32.totalorder %v2820, 2
    %vm2822 = vcmp.eq.s32.totalorder %v2820, 0
    %v2823 = vxor.u32 %v2818, 2147483648
    %v2824 = vsel %vm2822, %v2817, %v2823
    %vm2825 = vcmp.eq.s32.totalorder %v2820, 2
    %v2826 = vxor.u32 %v2817, 2147483648
    %v2827 = vsel %vm2825, %v2826, %v2818
    %v2828 = vsel %vm2821, %v2824, %v2827
    %v2829 = vsel %vm2819, nan, %v2828
    %v2830 = vand.u32 2147483647, %v204
    %vm2831 = vcmp.le.f32.partialorder %v2830, 0.7853982
    %vm2832 = vcmp.lt.s32.totalorder %v204, 0
    %v2833 = vand.u32 %v204, 2139095040
    %v2834 = vshrl.u32 %v2833, 23
    %v2835 = vsub.s32 %v2834, 127
    %v2836 = vand.u32 2147483647, %v204
    %v2837 = vand.u32 %v2836, 8388607
    %v2838 = vor.u32 %v2837, 8388608
    %v2839 = vsub.s32 0, %v2838
    %v2840 = vadd.s32 %v2835, 1
    %vm2841 = vcmp.gt.s32.totalorder %v2840, 0
    %v2842 = vsel %vm2841, %v2840, 0
    %v2843 = vshrl.u32 %v2842, 5
    %v2844 = vand.u32 %v2842, 31
    %v2845 = vsub.s32 32, %v2844
    %v2846 = vshrl.u32 683565275, %v2845
    %v2847 = vshll.u32 683565275, %v2844
    %v2848 = vshrl.u32 2475754826, %v2845
    %v2849 = vor.u32 %v2847, %v2848
    %v2850 = vshll.u32 2475754826, %v2844
    %v2851 = vshrl.u32 2131351028, %v2845
    %v2852 = vor.u32 %v2850, %v2851
    %v2853 = vshll.u32 2131351028, %v2844
    %v2854 = vshrl.u32 2102212464, %v2845
    %v2855 = vor.u32 %v2853, %v2854
    %v2856 = vshll.u32 2102212464, %v2844
    %v2857 = vshrl.u32 920167782, %v2845
    %v2858 = vor.u32 %v2856, %v2857
    %v2859 = vshll.u32 920167782, %v2844
    %v2860 = vshrl.u32 1326507024, %v2845
    %v2861 = vor.u32 %v2859, %v2860
    %vm2862 = vcmp.lt.s32.totalorder %v2843, 1
    %vm2863 = vcmp.lt.s32.totalorder %v2843, 2
    %vm2864 = vcmp.lt.s32.totalorder %v2843, 3
    %vm2865 = vcmp.lt.s32.totalorder %v2843, 4
    %v2866 = vsel %vm2862, %v2846, %v2849
    %v2867 = vsel %vm2865, %v2855, 2102212464
    %v2868 = vsel %vm2864, %v2852, %v2867
    %v2869 = vsel %vm2863, %v2866, %v2868
    %v2870 = vsel %vm2862, %v2849, %v2852
    %v2871 = vsel %vm2865, %v2858, 920167782
    %v2872 = vsel %vm2864, %v2855, %v2871
    %v2873 = vsel %vm2863, %v2870, %v2872
    %v2874 = vsel %vm2862, %v2852, %v2855
    %v2875 = vsel %vm2865, %v2861, 1326507024
    %v2876 = vsel %vm2864, %v2858, %v2875
    %v2877 = vsel %vm2863, %v2874, %v2876
    %v2878 = vshll.u32 %v2838, 8
    %v2879 = vmul.u32.u64.compose %v2878, %v2877
    %v2880 = vextract.low.u32 %v2879
    %v2881 = vextract.high.u32 %v2879
    %v2882 = vmul.u32.u64.compose %v2878, %v2873
    %v2883 = vextract.low.u32 %v2882
    %v2884 = vextract.high.u32 %v2882
    %v2885 = vmul.u32 %v2878, %v2869
    %v2886 = vadd.s32 %v2881, %v2883
    %vm2887 = vc.u32 %v2881, %v2883
    %v2888 = vadd.s32 %v2884, 1
    %v2889 = vsel %vm2887, %v2888, %v2884
    %v2890 = vadd.s32 %v2885, %v2889
    %v2891 = vadd.s32 %v2890, 536870912
    %v2892 = vshrl.u32 %v2891, 30
    %v2893 = vshll.u32 %v2892, 30
    %v2894 = vsub.s32 %v2890, %v2893
    %vm2895 = vcmp.lt.s32.totalorder %v2894, 0
    %v2896 = vsub.s32 0, %v2894
    %v2897 = vsel %vm2895, %v2896, %v2894
    %v2898 = vclz %v2897
    %v2899 = vsub.s32 %v2898, 2
    %vm2900 = vcmp.gt.s32.totalorder 0, %v2899
    %v2901 = vsel %vm2900, 0, %v2899
    %v2902 = vsub.s32 32, %v2901
    %v2903 = vshll.u32 %v2894, %v2901
    %v2904 = vshrl.u32 %v2886, %v2902
    %v2905 = vor.u32 %v2903, %v2904
    %v2906 = vsub.s32 4294967266, %v2901
    %v2907 = vadd.s32 %v2906, 127
    %v2908 = vshll.u32 %v2907, 23
    %v2909 = vor.u32 4788187, %v2908
    %v2910 = vand.u32 2147483647, %v2909
    %v2912 = vcvt.s32.f32 %v2905
    %v2913 = vmul.f32 %v2912, %v2910
    %v2914 = vxor.u32 %v2913, 2147483648
    %v2915 = vsel %vm2832, %v2914, %v2913
    %v2916 = vsub.s32 4, %v2892
    %v2917 = vsel %vm2832, %v2916, %v2892
    %v2918 = vsel %vm2831, %v204, %v2915
    %v2919 = vsel %vm2831, 0, %v2917
    %v2920 = vcosq.f32.pop %v2918
    %v2921 = vsinq.f32.pop %v2918
    %vm2922 = vweird.f32 %v204
    %v2923 = vand.u32 %v2919, 3
    %vm2924 = vcmp.lt.s32.totalorder %v2923, 2
    %vm2925 = vcmp.eq.s32.totalorder %v2923, 0
    %v2926 = vxor.u32 %v2921, 2147483648
    %v2927 = vsel %vm2925, %v2920, %v2926
    %vm2928 = vcmp.eq.s32.totalorder %v2923, 2
    %v2929 = vxor.u32 %v2920, 2147483648
    %v2930 = vsel %vm2928, %v2929, %v2921
    %v2931 = vsel %vm2924, %v2927, %v2930
    %v2932 = vsel %vm2922, nan, %v2931
    %v2933 = vand.u32 2147483647, %v209
    %vm2934 = vcmp.le.f32.partialorder %v2933, 0.7853982
    %vm2935 = vcmp.lt.s32.totalorder %v209, 0
    %v2936 = vand.u32 %v209, 2139095040
    %v2937 = vshrl.u32 %v2936, 23
    %v2938 = vsub.s32 %v2937, 127
    %v2939 = vand.u32 2147483647, %v209
    %v2940 = vand.u32 %v2939, 8388607
    %v2941 = vor.u32 %v2940, 8388608
    %v2942 = vsub.s32 0, %v2941
    %v2943 = vadd.s32 %v2938, 1
    %vm2944 = vcmp.gt.s32.totalorder %v2943, 0
    %v2945 = vsel %vm2944, %v2943, 0
    %v2946 = vshrl.u32 %v2945, 5
    %v2947 = vand.u32 %v2945, 31
    %v2948 = vsub.s32 32, %v2947
    %v2949 = vshrl.u32 683565275, %v2948
    %v2950 = vshll.u32 683565275, %v2947
    %v2951 = vshrl.u32 2475754826, %v2948
    %v2952 = vor.u32 %v2950, %v2951
    %v2953 = vshll.u32 2475754826, %v2947
    %v2954 = vshrl.u32 2131351028, %v2948
    %v2955 = vor.u32 %v2953, %v2954
    %v2956 = vshll.u32 2131351028, %v2947
    %v2957 = vshrl.u32 2102212464, %v2948
    %v2958 = vor.u32 %v2956, %v2957
    %v2959 = vshll.u32 2102212464, %v2947
    %v2960 = vshrl.u32 920167782, %v2948
    %v2961 = vor.u32 %v2959, %v2960
    %v2962 = vshll.u32 920167782, %v2947
    %v2963 = vshrl.u32 1326507024, %v2948
    %v2964 = vor.u32 %v2962, %v2963
    %vm2965 = vcmp.lt.s32.totalorder %v2946, 1
    %vm2966 = vcmp.lt.s32.totalorder %v2946, 2
    %vm2967 = vcmp.lt.s32.totalorder %v2946, 3
    %vm2968 = vcmp.lt.s32.totalorder %v2946, 4
    %v2969 = vsel %vm2965, %v2949, %v2952
    %v2970 = vsel %vm2968, %v2958, 2102212464
    %v2971 = vsel %vm2967, %v2955, %v2970
    %v2972 = vsel %vm2966, %v2969, %v2971
    %v2973 = vsel %vm2965, %v2952, %v2955
    %v2974 = vsel %vm2968, %v2961, 920167782
    %v2975 = vsel %vm2967, %v2958, %v2974
    %v2976 = vsel %vm2966, %v2973, %v2975
    %v2977 = vsel %vm2965, %v2955, %v2958
    %v2978 = vsel %vm2968, %v2964, 1326507024
    %v2979 = vsel %vm2967, %v2961, %v2978
    %v2980 = vsel %vm2966, %v2977, %v2979
    %v2981 = vshll.u32 %v2941, 8
    %v2982 = vmul.u32.u64.compose %v2981, %v2980
    %v2983 = vextract.low.u32 %v2982
    %v2984 = vextract.high.u32 %v2982
    %v2985 = vmul.u32.u64.compose %v2981, %v2976
    %v2986 = vextract.low.u32 %v2985
    %v2987 = vextract.high.u32 %v2985
    %v2988 = vmul.u32 %v2981, %v2972
    %v2989 = vadd.s32 %v2984, %v2986
    %vm2990 = vc.u32 %v2984, %v2986
    %v2991 = vadd.s32 %v2987, 1
    %v2992 = vsel %vm2990, %v2991, %v2987
    %v2993 = vadd.s32 %v2988, %v2992
    %v2994 = vadd.s32 %v2993, 536870912
    %v2995 = vshrl.u32 %v2994, 30
    %v2996 = vshll.u32 %v2995, 30
    %v2997 = vsub.s32 %v2993, %v2996
    %vm2998 = vcmp.lt.s32.totalorder %v2997, 0
    %v2999 = vsub.s32 0, %v2997
    %v3000 = vsel %vm2998, %v2999, %v2997
    %v3001 = vclz %v3000
    %v3002 = vsub.s32 %v3001, 2
    %vm3003 = vcmp.gt.s32.totalorder 0, %v3002
    %v3004 = vsel %vm3003, 0, %v3002
    %v3005 = vsub.s32 32, %v3004
    %v3006 = vshll.u32 %v2997, %v3004
    %v3007 = vshrl.u32 %v2989, %v3005
    %v3008 = vor.u32 %v3006, %v3007
    %v3009 = vsub.s32 4294967266, %v3004
    %v3010 = vadd.s32 %v3009, 127
    %v3011 = vshll.u32 %v3010, 23
    %v3012 = vor.u32 4788187, %v3011
    %v3013 = vand.u32 2147483647, %v3012
    %v3015 = vcvt.s32.f32 %v3008
    %v3016 = vmul.f32 %v3015, %v3013
    %v3017 = vxor.u32 %v3016, 2147483648
    %v3018 = vsel %vm2935, %v3017, %v3016
    %v3019 = vsub.s32 4, %v2995
    %v3020 = vsel %vm2935, %v3019, %v2995
    %v3021 = vsel %vm2934, %v209, %v3018
    %v3022 = vsel %vm2934, 0, %v3020
    %v3023 = vcosq.f32.pop %v3021
    %v3024 = vsinq.f32.pop %v3021
    %vm3025 = vweird.f32 %v209
    %v3026 = vand.u32 %v3022, 3
    %vm3027 = vcmp.lt.s32.totalorder %v3026, 2
    %vm3028 = vcmp.eq.s32.totalorder %v3026, 0
    %v3029 = vxor.u32 %v3024, 2147483648
    %v3030 = vsel %vm3028, %v3023, %v3029
    %vm3031 = vcmp.eq.s32.totalorder %v3026, 2
    %v3032 = vxor.u32 %v3023, 2147483648
    %v3033 = vsel %vm3031, %v3032, %v3024
    %v3034 = vsel %vm3027, %v3030, %v3033
    %v3035 = vsel %vm3025, nan, %v3034
    %v3036 = vand.u32 2147483647, %v212
    %vm3037 = vcmp.le.f32.partialorder %v3036, 0.7853982
    %vm3038 = vcmp.lt.s32.totalorder %v212, 0
    %v3039 = vand.u32 %v212, 2139095040
    %v3040 = vshrl.u32 %v3039, 23
    %v3041 = vsub.s32 %v3040, 127
    %v3042 = vand.u32 2147483647, %v212
    %v3043 = vand.u32 %v3042, 8388607
    %v3044 = vor.u32 %v3043, 8388608
    %v3045 = vsub.s32 0, %v3044
    %v3046 = vadd.s32 %v3041, 1
    %vm3047 = vcmp.gt.s32.totalorder %v3046, 0
    %v3048 = vsel %vm3047, %v3046, 0
    %v3049 = vshrl.u32 %v3048, 5
    %v3050 = vand.u32 %v3048, 31
    %v3051 = vsub.s32 32, %v3050
    %v3052 = vshrl.u32 683565275, %v3051
    %v3053 = vshll.u32 683565275, %v3050
    %v3054 = vshrl.u32 2475754826, %v3051
    %v3055 = vor.u32 %v3053, %v3054
    %v3056 = vshll.u32 2475754826, %v3050
    %v3057 = vshrl.u32 2131351028, %v3051
    %v3058 = vor.u32 %v3056, %v3057
    %v3059 = vshll.u32 2131351028, %v3050
    %v3060 = vshrl.u32 2102212464, %v3051
    %v3061 = vor.u32 %v3059, %v3060
    %v3062 = vshll.u32 2102212464, %v3050
    %v3063 = vshrl.u32 920167782, %v3051
    %v3064 = vor.u32 %v3062, %v3063
    %v3065 = vshll.u32 920167782, %v3050
    %v3066 = vshrl.u32 1326507024, %v3051
    %v3067 = vor.u32 %v3065, %v3066
    %vm3068 = vcmp.lt.s32.totalorder %v3049, 1
    %vm3069 = vcmp.lt.s32.totalorder %v3049, 2
    %vm3070 = vcmp.lt.s32.totalorder %v3049, 3
    %vm3071 = vcmp.lt.s32.totalorder %v3049, 4
    %v3072 = vsel %vm3068, %v3052, %v3055
    %v3073 = vsel %vm3071, %v3061, 2102212464
    %v3074 = vsel %vm3070, %v3058, %v3073
    %v3075 = vsel %vm3069, %v3072, %v3074
    %v3076 = vsel %vm3068, %v3055, %v3058
    %v3077 = vsel %vm3071, %v3064, 920167782
    %v3078 = vsel %vm3070, %v3061, %v3077
    %v3079 = vsel %vm3069, %v3076, %v3078
    %v3080 = vsel %vm3068, %v3058, %v3061
    %v3081 = vsel %vm3071, %v3067, 1326507024
    %v3082 = vsel %vm3070, %v3064, %v3081
    %v3083 = vsel %vm3069, %v3080, %v3082
    %v3084 = vshll.u32 %v3044, 8
    %v3085 = vmul.u32.u64.compose %v3084, %v3083
    %v3086 = vextract.low.u32 %v3085
    %v3087 = vextract.high.u32 %v3085
    %v3088 = vmul.u32.u64.compose %v3084, %v3079
    %v3089 = vextract.low.u32 %v3088
    %v3090 = vextract.high.u32 %v3088
    %v3091 = vmul.u32 %v3084, %v3075
    %v3092 = vadd.s32 %v3087, %v3089
    %vm3093 = vc.u32 %v3087, %v3089
    %v3094 = vadd.s32 %v3090, 1
    %v3095 = vsel %vm3093, %v3094, %v3090
    %v3096 = vadd.s32 %v3091, %v3095
    %v3097 = vadd.s32 %v3096, 536870912
    %v3098 = vshrl.u32 %v3097, 30
    %v3099 = vshll.u32 %v3098, 30
    %v3100 = vsub.s32 %v3096, %v3099
    %vm3101 = vcmp.lt.s32.totalorder %v3100, 0
    %v3102 = vsub.s32 0, %v3100
    %v3103 = vsel %vm3101, %v3102, %v3100
    %v3104 = vclz %v3103
    %v3105 = vsub.s32 %v3104, 2
    %vm3106 = vcmp.gt.s32.totalorder 0, %v3105
    %v3107 = vsel %vm3106, 0, %v3105
    %v3108 = vsub.s32 32, %v3107
    %v3109 = vshll.u32 %v3100, %v3107
    %v3110 = vshrl.u32 %v3092, %v3108
    %v3111 = vor.u32 %v3109, %v3110
    %v3112 = vsub.s32 4294967266, %v3107
    %v3113 = vadd.s32 %v3112, 127
    %v3114 = vshll.u32 %v3113, 23
    %v3115 = vor.u32 4788187, %v3114
    %v3116 = vand.u32 2147483647, %v3115
    %v3118 = vcvt.s32.f32 %v3111
    %v3119 = vmul.f32 %v3118, %v3116
    %v3120 = vxor.u32 %v3119, 2147483648
    %v3121 = vsel %vm3038, %v3120, %v3119
    %v3122 = vsub.s32 4, %v3098
    %v3123 = vsel %vm3038, %v3122, %v3098
    %v3124 = vsel %vm3037, %v212, %v3121
    %v3125 = vsel %vm3037, 0, %v3123
    %v3126 = vcosq.f32.pop %v3124
    %v3127 = vsinq.f32.pop %v3124
    %vm3128 = vweird.f32 %v212
    %v3129 = vand.u32 %v3125, 3
    %vm3130 = vcmp.lt.s32.totalorder %v3129, 2
    %vm3131 = vcmp.eq.s32.totalorder %v3129, 0
    %v3132 = vxor.u32 %v3127, 2147483648
    %v3133 = vsel %vm3131, %v3126, %v3132
    %vm3134 = vcmp.eq.s32.totalorder %v3129, 2
    %v3135 = vxor.u32 %v3126, 2147483648
    %v3136 = vsel %vm3134, %v3135, %v3127
    %v3137 = vsel %vm3130, %v3133, %v3136
    %v3138 = vsel %vm3128, nan, %v3137
    %v3139 = vand.u32 2147483647, %v217
    %vm3140 = vcmp.le.f32.partialorder %v3139, 0.7853982
    %vm3141 = vcmp.lt.s32.totalorder %v217, 0
    %v3142 = vand.u32 %v217, 2139095040
    %v3143 = vshrl.u32 %v3142, 23
    %v3144 = vsub.s32 %v3143, 127
    %v3145 = vand.u32 2147483647, %v217
    %v3146 = vand.u32 %v3145, 8388607
    %v3147 = vor.u32 %v3146, 8388608
    %v3148 = vsub.s32 0, %v3147
    %v3149 = vadd.s32 %v3144, 1
    %vm3150 = vcmp.gt.s32.totalorder %v3149, 0
    %v3151 = vsel %vm3150, %v3149, 0
    %v3152 = vshrl.u32 %v3151, 5
    %v3153 = vand.u32 %v3151, 31
    %v3154 = vsub.s32 32, %v3153
    %v3155 = vshrl.u32 683565275, %v3154
    %v3156 = vshll.u32 683565275, %v3153
    %v3157 = vshrl.u32 2475754826, %v3154
    %v3158 = vor.u32 %v3156, %v3157
    %v3159 = vshll.u32 2475754826, %v3153
    %v3160 = vshrl.u32 2131351028, %v3154
    %v3161 = vor.u32 %v3159, %v3160
    %v3162 = vshll.u32 2131351028, %v3153
    %v3163 = vshrl.u32 2102212464, %v3154
    %v3164 = vor.u32 %v3162, %v3163
    %v3165 = vshll.u32 2102212464, %v3153
    %v3166 = vshrl.u32 920167782, %v3154
    %v3167 = vor.u32 %v3165, %v3166
    %v3168 = vshll.u32 920167782, %v3153
    %v3169 = vshrl.u32 1326507024, %v3154
    %v3170 = vor.u32 %v3168, %v3169
    %vm3171 = vcmp.lt.s32.totalorder %v3152, 1
    %vm3172 = vcmp.lt.s32.totalorder %v3152, 2
    %vm3173 = vcmp.lt.s32.totalorder %v3152, 3
    %vm3174 = vcmp.lt.s32.totalorder %v3152, 4
    %v3175 = vsel %vm3171, %v3155, %v3158
    %v3176 = vsel %vm3174, %v3164, 2102212464
    %v3177 = vsel %vm3173, %v3161, %v3176
    %v3178 = vsel %vm3172, %v3175, %v3177
    %v3179 = vsel %vm3171, %v3158, %v3161
    %v3180 = vsel %vm3174, %v3167, 920167782
    %v3181 = vsel %vm3173, %v3164, %v3180
    %v3182 = vsel %vm3172, %v3179, %v3181
    %v3183 = vsel %vm3171, %v3161, %v3164
    %v3184 = vsel %vm3174, %v3170, 1326507024
    %v3185 = vsel %vm3173, %v3167, %v3184
    %v3186 = vsel %vm3172, %v3183, %v3185
    %v3187 = vshll.u32 %v3147, 8
    %v3188 = vmul.u32.u64.compose %v3187, %v3186
    %v3189 = vextract.low.u32 %v3188
    %v3190 = vextract.high.u32 %v3188
    %v3191 = vmul.u32.u64.compose %v3187, %v3182
    %v3192 = vextract.low.u32 %v3191
    %v3193 = vextract.high.u32 %v3191
    %v3194 = vmul.u32 %v3187, %v3178
    %v3195 = vadd.s32 %v3190, %v3192
    %vm3196 = vc.u32 %v3190, %v3192
    %v3197 = vadd.s32 %v3193, 1
    %v3198 = vsel %vm3196, %v3197, %v3193
    %v3199 = vadd.s32 %v3194, %v3198
    %v3200 = vadd.s32 %v3199, 536870912
    %v3201 = vshrl.u32 %v3200, 30
    %v3202 = vshll.u32 %v3201, 30
    %v3203 = vsub.s32 %v3199, %v3202
    %vm3204 = vcmp.lt.s32.totalorder %v3203, 0
    %v3205 = vsub.s32 0, %v3203
    %v3206 = vsel %vm3204, %v3205, %v3203
    %v3207 = vclz %v3206
    %v3208 = vsub.s32 %v3207, 2
    %vm3209 = vcmp.gt.s32.totalorder 0, %v3208
    %v3210 = vsel %vm3209, 0, %v3208
    %v3211 = vsub.s32 32, %v3210
    %v3212 = vshll.u32 %v3203, %v3210
    %v3213 = vshrl.u32 %v3195, %v3211
    %v3214 = vor.u32 %v3212, %v3213
    %v3215 = vsub.s32 4294967266, %v3210
    %v3216 = vadd.s32 %v3215, 127
    %v3217 = vshll.u32 %v3216, 23
    %v3218 = vor.u32 4788187, %v3217
    %v3219 = vand.u32 2147483647, %v3218
    %v3221 = vcvt.s32.f32 %v3214
    %v3222 = vmul.f32 %v3221, %v3219
    %v3223 = vxor.u32 %v3222, 2147483648
    %v3224 = vsel %vm3141, %v3223, %v3222
    %v3225 = vsub.s32 4, %v3201
    %v3226 = vsel %vm3141, %v3225, %v3201
    %v3227 = vsel %vm3140, %v217, %v3224
    %v3228 = vsel %vm3140, 0, %v3226
    %v3229 = vcosq.f32.pop %v3227
    %v3230 = vsinq.f32.pop %v3227
    %vm3231 = vweird.f32 %v217
    %v3232 = vand.u32 %v3228, 3
    %vm3233 = vcmp.lt.s32.totalorder %v3232, 2
    %vm3234 = vcmp.eq.s32.totalorder %v3232, 0
    %v3235 = vxor.u32 %v3230, 2147483648
    %v3236 = vsel %vm3234, %v3229, %v3235
    %vm3237 = vcmp.eq.s32.totalorder %v3232, 2
    %v3238 = vxor.u32 %v3229, 2147483648
    %v3239 = vsel %vm3237, %v3238, %v3230
    %v3240 = vsel %vm3233, %v3236, %v3239
    %v3241 = vsel %vm3231, nan, %v3240
    %v3242 = vand.u32 2147483647, %v220
    %vm3243 = vcmp.le.f32.partialorder %v3242, 0.7853982
    %vm3244 = vcmp.lt.s32.totalorder %v220, 0
    %v3245 = vand.u32 %v220, 2139095040
    %v3246 = vshrl.u32 %v3245, 23
    %v3247 = vsub.s32 %v3246, 127
    %v3248 = vand.u32 2147483647, %v220
    %v3249 = vand.u32 %v3248, 8388607
    %v3250 = vor.u32 %v3249, 8388608
    %v3251 = vsub.s32 0, %v3250
    %v3252 = vadd.s32 %v3247, 1
    %vm3253 = vcmp.gt.s32.totalorder %v3252, 0
    %v3254 = vsel %vm3253, %v3252, 0
    %v3255 = vshrl.u32 %v3254, 5
    %v3256 = vand.u32 %v3254, 31
    %v3257 = vsub.s32 32, %v3256
    %v3258 = vshrl.u32 683565275, %v3257
    %v3259 = vshll.u32 683565275, %v3256
    %v3260 = vshrl.u32 2475754826, %v3257
    %v3261 = vor.u32 %v3259, %v3260
    %v3262 = vshll.u32 2475754826, %v3256
    %v3263 = vshrl.u32 2131351028, %v3257
    %v3264 = vor.u32 %v3262, %v3263
    %v3265 = vshll.u32 2131351028, %v3256
    %v3266 = vshrl.u32 2102212464, %v3257
    %v3267 = vor.u32 %v3265, %v3266
    %v3268 = vshll.u32 2102212464, %v3256
    %v3269 = vshrl.u32 920167782, %v3257
    %v3270 = vor.u32 %v3268, %v3269
    %v3271 = vshll.u32 920167782, %v3256
    %v3272 = vshrl.u32 1326507024, %v3257
    %v3273 = vor.u32 %v3271, %v3272
    %vm3274 = vcmp.lt.s32.totalorder %v3255, 1
    %vm3275 = vcmp.lt.s32.totalorder %v3255, 2
    %vm3276 = vcmp.lt.s32.totalorder %v3255, 3
    %vm3277 = vcmp.lt.s32.totalorder %v3255, 4
    %v3278 = vsel %vm3274, %v3258, %v3261
    %v3279 = vsel %vm3277, %v3267, 2102212464
    %v3280 = vsel %vm3276, %v3264, %v3279
    %v3281 = vsel %vm3275, %v3278, %v3280
    %v3282 = vsel %vm3274, %v3261, %v3264
    %v3283 = vsel %vm3277, %v3270, 920167782
    %v3284 = vsel %vm3276, %v3267, %v3283
    %v3285 = vsel %vm3275, %v3282, %v3284
    %v3286 = vsel %vm3274, %v3264, %v3267
    %v3287 = vsel %vm3277, %v3273, 1326507024
    %v3288 = vsel %vm3276, %v3270, %v3287
    %v3289 = vsel %vm3275, %v3286, %v3288
    %v3290 = vshll.u32 %v3250, 8
    %v3291 = vmul.u32.u64.compose %v3290, %v3289
    %v3292 = vextract.low.u32 %v3291
    %v3293 = vextract.high.u32 %v3291
    %v3294 = vmul.u32.u64.compose %v3290, %v3285
    %v3295 = vextract.low.u32 %v3294
    %v3296 = vextract.high.u32 %v3294
    %v3297 = vmul.u32 %v3290, %v3281
    %v3298 = vadd.s32 %v3293, %v3295
    %vm3299 = vc.u32 %v3293, %v3295
    %v3300 = vadd.s32 %v3296, 1
    %v3301 = vsel %vm3299, %v3300, %v3296
    %v3302 = vadd.s32 %v3297, %v3301
    %v3303 = vadd.s32 %v3302, 536870912
    %v3304 = vshrl.u32 %v3303, 30
    %v3305 = vshll.u32 %v3304, 30
    %v3306 = vsub.s32 %v3302, %v3305
    %vm3307 = vcmp.lt.s32.totalorder %v3306, 0
    %v3308 = vsub.s32 0, %v3306
    %v3309 = vsel %vm3307, %v3308, %v3306
    %v3310 = vclz %v3309
    %v3311 = vsub.s32 %v3310, 2
    %vm3312 = vcmp.gt.s32.totalorder 0, %v3311
    %v3313 = vsel %vm3312, 0, %v3311
    %v3314 = vsub.s32 32, %v3313
    %v3315 = vshll.u32 %v3306, %v3313
    %v3316 = vshrl.u32 %v3298, %v3314
    %v3317 = vor.u32 %v3315, %v3316
    %v3318 = vsub.s32 4294967266, %v3313
    %v3319 = vadd.s32 %v3318, 127
    %v3320 = vshll.u32 %v3319, 23
    %v3321 = vor.u32 4788187, %v3320
    %v3322 = vand.u32 2147483647, %v3321
    %v3324 = vcvt.s32.f32 %v3317
    %v3325 = vmul.f32 %v3324, %v3322
    %v3326 = vxor.u32 %v3325, 2147483648
    %v3327 = vsel %vm3244, %v3326, %v3325
    %v3328 = vsub.s32 4, %v3304
    %v3329 = vsel %vm3244, %v3328, %v3304
    %v3330 = vsel %vm3243, %v220, %v3327
    %v3331 = vsel %vm3243, 0, %v3329
    %v3332 = vcosq.f32.pop %v3330
    %v3333 = vsinq.f32.pop %v3330
    %vm3334 = vweird.f32 %v220
    %v3335 = vand.u32 %v3331, 3
    %vm3336 = vcmp.lt.s32.totalorder %v3335, 2
    %vm3337 = vcmp.eq.s32.totalorder %v3335, 0
    %v3338 = vxor.u32 %v3333, 2147483648
    %v3339 = vsel %vm3337, %v3332, %v3338
    %vm3340 = vcmp.eq.s32.totalorder %v3335, 2
    %v3341 = vxor.u32 %v3332, 2147483648
    %v3342 = vsel %vm3340, %v3341, %v3333
    %v3343 = vsel %vm3336, %v3339, %v3342
    %v3344 = vsel %vm3334, nan, %v3343
    %v3345 = vand.u32 2147483647, %v225
    %vm3346 = vcmp.le.f32.partialorder %v3345, 0.7853982
    %vm3347 = vcmp.lt.s32.totalorder %v225, 0
    %v3348 = vand.u32 %v225, 2139095040
    %v3349 = vshrl.u32 %v3348, 23
    %v3350 = vsub.s32 %v3349, 127
    %v3351 = vand.u32 2147483647, %v225
    %v3352 = vand.u32 %v3351, 8388607
    %v3353 = vor.u32 %v3352, 8388608
    %v3354 = vsub.s32 0, %v3353
    %v3355 = vadd.s32 %v3350, 1
    %vm3356 = vcmp.gt.s32.totalorder %v3355, 0
    %v3357 = vsel %vm3356, %v3355, 0
    %v3358 = vshrl.u32 %v3357, 5
    %v3359 = vand.u32 %v3357, 31
    %v3360 = vsub.s32 32, %v3359
    %v3361 = vshrl.u32 683565275, %v3360
    %v3362 = vshll.u32 683565275, %v3359
    %v3363 = vshrl.u32 2475754826, %v3360
    %v3364 = vor.u32 %v3362, %v3363
    %v3365 = vshll.u32 2475754826, %v3359
    %v3366 = vshrl.u32 2131351028, %v3360
    %v3367 = vor.u32 %v3365, %v3366
    %v3368 = vshll.u32 2131351028, %v3359
    %v3369 = vshrl.u32 2102212464, %v3360
    %v3370 = vor.u32 %v3368, %v3369
    %v3371 = vshll.u32 2102212464, %v3359
    %v3372 = vshrl.u32 920167782, %v3360
    %v3373 = vor.u32 %v3371, %v3372
    %v3374 = vshll.u32 920167782, %v3359
    %v3375 = vshrl.u32 1326507024, %v3360
    %v3376 = vor.u32 %v3374, %v3375
    %vm3377 = vcmp.lt.s32.totalorder %v3358, 1
    %vm3378 = vcmp.lt.s32.totalorder %v3358, 2
    %vm3379 = vcmp.lt.s32.totalorder %v3358, 3
    %vm3380 = vcmp.lt.s32.totalorder %v3358, 4
    %v3381 = vsel %vm3377, %v3361, %v3364
    %v3382 = vsel %vm3380, %v3370, 2102212464
    %v3383 = vsel %vm3379, %v3367, %v3382
    %v3384 = vsel %vm3378, %v3381, %v3383
    %v3385 = vsel %vm3377, %v3364, %v3367
    %v3386 = vsel %vm3380, %v3373, 920167782
    %v3387 = vsel %vm3379, %v3370, %v3386
    %v3388 = vsel %vm3378, %v3385, %v3387
    %v3389 = vsel %vm3377, %v3367, %v3370
    %v3390 = vsel %vm3380, %v3376, 1326507024
    %v3391 = vsel %vm3379, %v3373, %v3390
    %v3392 = vsel %vm3378, %v3389, %v3391
    %v3393 = vshll.u32 %v3353, 8
    %v3394 = vmul.u32.u64.compose %v3393, %v3392
    %v3395 = vextract.low.u32 %v3394
    %v3396 = vextract.high.u32 %v3394
    %v3397 = vmul.u32.u64.compose %v3393, %v3388
    %v3398 = vextract.low.u32 %v3397
    %v3399 = vextract.high.u32 %v3397
    %v3400 = vmul.u32 %v3393, %v3384
    %v3401 = vadd.s32 %v3396, %v3398
    %vm3402 = vc.u32 %v3396, %v3398
    %v3403 = vadd.s32 %v3399, 1
    %v3404 = vsel %vm3402, %v3403, %v3399
    %v3405 = vadd.s32 %v3400, %v3404
    %v3406 = vadd.s32 %v3405, 536870912
    %v3407 = vshrl.u32 %v3406, 30
    %v3408 = vshll.u32 %v3407, 30
    %v3409 = vsub.s32 %v3405, %v3408
    %vm3410 = vcmp.lt.s32.totalorder %v3409, 0
    %v3411 = vsub.s32 0, %v3409
    %v3412 = vsel %vm3410, %v3411, %v3409
    %v3413 = vclz %v3412
    %v3414 = vsub.s32 %v3413, 2
    %vm3415 = vcmp.gt.s32.totalorder 0, %v3414
    %v3416 = vsel %vm3415, 0, %v3414
    %v3417 = vsub.s32 32, %v3416
    %v3418 = vshll.u32 %v3409, %v3416
    %v3419 = vshrl.u32 %v3401, %v3417
    %v3420 = vor.u32 %v3418, %v3419
    %v3421 = vsub.s32 4294967266, %v3416
    %v3422 = vadd.s32 %v3421, 127
    %v3423 = vshll.u32 %v3422, 23
    %v3424 = vor.u32 4788187, %v3423
    %v3425 = vand.u32 2147483647, %v3424
    %v3427 = vcvt.s32.f32 %v3420
    %v3428 = vmul.f32 %v3427, %v3425
    %v3429 = vxor.u32 %v3428, 2147483648
    %v3430 = vsel %vm3347, %v3429, %v3428
    %v3431 = vsub.s32 4, %v3407
    %v3432 = vsel %vm3347, %v3431, %v3407
    %v3433 = vsel %vm3346, %v225, %v3430
    %v3434 = vsel %vm3346, 0, %v3432
    %v3435 = vcosq.f32.pop %v3433
    %v3436 = vsinq.f32.pop %v3433
    %vm3437 = vweird.f32 %v225
    %v3438 = vand.u32 %v3434, 3
    %vm3439 = vcmp.lt.s32.totalorder %v3438, 2
    %vm3440 = vcmp.eq.s32.totalorder %v3438, 0
    %v3441 = vxor.u32 %v3436, 2147483648
    %v3442 = vsel %vm3440, %v3435, %v3441
    %vm3443 = vcmp.eq.s32.totalorder %v3438, 2
    %v3444 = vxor.u32 %v3435, 2147483648
    %v3445 = vsel %vm3443, %v3444, %v3436
    %v3446 = vsel %vm3439, %v3442, %v3445
    %v3447 = vsel %vm3437, nan, %v3446
    %v3448 = vand.u32 2147483647, %v228
    %vm3449 = vcmp.le.f32.partialorder %v3448, 0.7853982
    %vm3450 = vcmp.lt.s32.totalorder %v228, 0
    %v3451 = vand.u32 %v228, 2139095040
    %v3452 = vshrl.u32 %v3451, 23
    %v3453 = vsub.s32 %v3452, 127
    %v3454 = vand.u32 2147483647, %v228
    %v3455 = vand.u32 %v3454, 8388607
    %v3456 = vor.u32 %v3455, 8388608
    %v3457 = vsub.s32 0, %v3456
    %v3458 = vadd.s32 %v3453, 1
    %vm3459 = vcmp.gt.s32.totalorder %v3458, 0
    %v3460 = vsel %vm3459, %v3458, 0
    %v3461 = vshrl.u32 %v3460, 5
    %v3462 = vand.u32 %v3460, 31
    %v3463 = vsub.s32 32, %v3462
    %v3464 = vshrl.u32 683565275, %v3463
    %v3465 = vshll.u32 683565275, %v3462
    %v3466 = vshrl.u32 2475754826, %v3463
    %v3467 = vor.u32 %v3465, %v3466
    %v3468 = vshll.u32 2475754826, %v3462
    %v3469 = vshrl.u32 2131351028, %v3463
    %v3470 = vor.u32 %v3468, %v3469
    %v3471 = vshll.u32 2131351028, %v3462
    %v3472 = vshrl.u32 2102212464, %v3463
    %v3473 = vor.u32 %v3471, %v3472
    %v3474 = vshll.u32 2102212464, %v3462
    %v3475 = vshrl.u32 920167782, %v3463
    %v3476 = vor.u32 %v3474, %v3475
    %v3477 = vshll.u32 920167782, %v3462
    %v3478 = vshrl.u32 1326507024, %v3463
    %v3479 = vor.u32 %v3477, %v3478
    %vm3480 = vcmp.lt.s32.totalorder %v3461, 1
    %vm3481 = vcmp.lt.s32.totalorder %v3461, 2
    %vm3482 = vcmp.lt.s32.totalorder %v3461, 3
    %vm3483 = vcmp.lt.s32.totalorder %v3461, 4
    %v3484 = vsel %vm3480, %v3464, %v3467
    %v3485 = vsel %vm3483, %v3473, 2102212464
    %v3486 = vsel %vm3482, %v3470, %v3485
    %v3487 = vsel %vm3481, %v3484, %v3486
    %v3488 = vsel %vm3480, %v3467, %v3470
    %v3489 = vsel %vm3483, %v3476, 920167782
    %v3490 = vsel %vm3482, %v3473, %v3489
    %v3491 = vsel %vm3481, %v3488, %v3490
    %v3492 = vsel %vm3480, %v3470, %v3473
    %v3493 = vsel %vm3483, %v3479, 1326507024
    %v3494 = vsel %vm3482, %v3476, %v3493
    %v3495 = vsel %vm3481, %v3492, %v3494
    %v3496 = vshll.u32 %v3456, 8
    %v3497 = vmul.u32.u64.compose %v3496, %v3495
    %v3498 = vextract.low.u32 %v3497
    %v3499 = vextract.high.u32 %v3497
    %v3500 = vmul.u32.u64.compose %v3496, %v3491
    %v3501 = vextract.low.u32 %v3500
    %v3502 = vextract.high.u32 %v3500
    %v3503 = vmul.u32 %v3496, %v3487
    %v3504 = vadd.s32 %v3499, %v3501
    %vm3505 = vc.u32 %v3499, %v3501
    %v3506 = vadd.s32 %v3502, 1
    %v3507 = vsel %vm3505, %v3506, %v3502
    %v3508 = vadd.s32 %v3503, %v3507
    %v3509 = vadd.s32 %v3508, 536870912
    %v3510 = vshrl.u32 %v3509, 30
    %v3511 = vshll.u32 %v3510, 30
    %v3512 = vsub.s32 %v3508, %v3511
    %vm3513 = vcmp.lt.s32.totalorder %v3512, 0
    %v3514 = vsub.s32 0, %v3512
    %v3515 = vsel %vm3513, %v3514, %v3512
    %v3516 = vclz %v3515
    %v3517 = vsub.s32 %v3516, 2
    %vm3518 = vcmp.gt.s32.totalorder 0, %v3517
    %v3519 = vsel %vm3518, 0, %v3517
    %v3520 = vsub.s32 32, %v3519
    %v3521 = vshll.u32 %v3512, %v3519
    %v3522 = vshrl.u32 %v3504, %v3520
    %v3523 = vor.u32 %v3521, %v3522
    %v3524 = vsub.s32 4294967266, %v3519
    %v3525 = vadd.s32 %v3524, 127
    %v3526 = vshll.u32 %v3525, 23
    %v3527 = vor.u32 4788187, %v3526
    %v3528 = vand.u32 2147483647, %v3527
    %v3530 = vcvt.s32.f32 %v3523
    %v3531 = vmul.f32 %v3530, %v3528
    %v3532 = vxor.u32 %v3531, 2147483648
    %v3533 = vsel %vm3450, %v3532, %v3531
    %v3534 = vsub.s32 4, %v3510
    %v3535 = vsel %vm3450, %v3534, %v3510
    %v3536 = vsel %vm3449, %v228, %v3533
    %v3537 = vsel %vm3449, 0, %v3535
    %v3538 = vcosq.f32.pop %v3536
    %v3539 = vsinq.f32.pop %v3536
    %vm3540 = vweird.f32 %v228
    %v3541 = vand.u32 %v3537, 3
    %vm3542 = vcmp.lt.s32.totalorder %v3541, 2
    %vm3543 = vcmp.eq.s32.totalorder %v3541, 0
    %v3544 = vxor.u32 %v3539, 2147483648
    %v3545 = vsel %vm3543, %v3538, %v3544
    %vm3546 = vcmp.eq.s32.totalorder %v3541, 2
    %v3547 = vxor.u32 %v3538, 2147483648
    %v3548 = vsel %vm3546, %v3547, %v3539
    %v3549 = vsel %vm3542, %v3545, %v3548
    %v3550 = vsel %vm3540, nan, %v3549
    %v3551 = vpack.c.bf16 %v2108, %v2005
    %v3552 = vpack.c.bf16 %v2314, %v2211
    %v3553 = vpack.c.bf16 %v2520, %v2417
    %v3554 = vpack.c.bf16 %v2726, %v2623
    %v3555 = vpack.c.bf16 %v2932, %v2829
    %v3556 = vpack.c.bf16 %v3138, %v3035
    %v3557 = vpack.c.bf16 %v3344, %v3241
    %v3558 = vpack.c.bf16 %v3550, %v3447
    %v3559 = vld [vmem:[%s2] sm:$0xf]
    %v3560 = vld [vmem:[%s2 + $0x4] sm:$0xf]
    %v3561 = vld [vmem:[%s2 + $0x8] sm:$0xf]
    %v3562 = vld [vmem:[%s2 + $0xc] sm:$0xf]
    %v3563 = vld [vmem:[%s2 + $0x10] sm:$0xf]
    %v3564 = vld [vmem:[%s2 + $0x14] sm:$0xf]
    %v3565 = vld [vmem:[%s2 + $0x18] sm:$0xf]
    %v3566 = vld [vmem:[%s2 + $0x1c] sm:$0xf]
    %v3567 = vld [vmem:[%s2 + $0x20] sm:$0xf]
    %v3568 = vld [vmem:[%s2 + $0x24] sm:$0xf]
    %v3569 = vld [vmem:[%s2 + $0x28] sm:$0xf]
    %v3570 = vld [vmem:[%s2 + $0x2c] sm:$0xf]
    %v3571 = vld [vmem:[%s2 + $0x30] sm:$0xf]
    %v3572 = vld [vmem:[%s2 + $0x34] sm:$0xf]
    %v3573 = vld [vmem:[%s2 + $0x38] sm:$0xf]
    %v3574 = vld [vmem:[%s2 + $0x3c] sm:$0xf]
    %v3575 = vld [vmem:[%s3] sm:$0xf]
    %v3576 = vld [vmem:[%s3 + $0x4] sm:$0xf]
    %v3577 = vld [vmem:[%s3 + $0x8] sm:$0xf]
    %v3578 = vld [vmem:[%s3 + $0xc] sm:$0xf]
    %v3579 = vld [vmem:[%s3 + $0x10] sm:$0xf]
    %v3580 = vld [vmem:[%s3 + $0x14] sm:$0xf]
    %v3581 = vld [vmem:[%s3 + $0x18] sm:$0xf]
    %v3582 = vld [vmem:[%s3 + $0x1c] sm:$0xf]
    %v3583 = vld [vmem:[%s3 + $0x20] sm:$0xf]
    %v3584 = vld [vmem:[%s3 + $0x24] sm:$0xf]
    %v3585 = vld [vmem:[%s3 + $0x28] sm:$0xf]
    %v3586 = vld [vmem:[%s3 + $0x2c] sm:$0xf]
    %v3587 = vld [vmem:[%s3 + $0x30] sm:$0xf]
    %v3588 = vld [vmem:[%s3 + $0x34] sm:$0xf]
    %v3589 = vld [vmem:[%s3 + $0x38] sm:$0xf]
    %v3590 = vld [vmem:[%s3 + $0x3c] sm:$0xf]
    %v3607 = vunpack.c.l.b16 %v3575
    %v3608 = vunpack.c.l.b16 %v3576
    %v3609 = vunpack.c.l.b16 %v3577
    %v3610 = vunpack.c.l.b16 %v3578
    %v3611 = vunpack.c.l.b16 %v3579
    %v3612 = vunpack.c.l.b16 %v3580
    %v3613 = vunpack.c.l.b16 %v3581
    %v3614 = vunpack.c.l.b16 %v3582
    %v3615 = vunpack.c.l.b16 %v3583
    %v3616 = vunpack.c.l.b16 %v3584
    %v3617 = vunpack.c.l.b16 %v3585
    %v3618 = vunpack.c.l.b16 %v3586
    %v3619 = vunpack.c.l.b16 %v3587
    %v3620 = vunpack.c.l.b16 %v3588
    %v3621 = vunpack.c.l.b16 %v3589
    %v3622 = vunpack.c.l.b16 %v3590
    %v3623 = vpack.c.b16 %v3608, %v3607
    %v3624 = vpack.c.b16 %v3610, %v3609
    %v3625 = vpack.c.b16 %v3612, %v3611
    %v3626 = vpack.c.b16 %v3614, %v3613
    %v3627 = vpack.c.b16 %v3616, %v3615
    %v3628 = vpack.c.b16 %v3618, %v3617
    %v3629 = vpack.c.b16 %v3620, %v3619
    %v3630 = vpack.c.b16 %v3622, %v3621
    %3639 = vmatprep.subr.bf16.mxu0 0
    %3640 = vmatpush1.bf16.msra.mxu0 %v3623
    %3641 = vmatprep.subr.bf16.mxu0 0
    %3642 = vmatpush1.bf16.msra.mxu0 %v3624
    %3643 = vmatprep.subr.bf16.mxu0 0
    %3644 = vmatpush1.bf16.msra.mxu0 %v3625
    %3645 = vmatprep.subr.bf16.mxu0 0
    %3646 = vmatpush1.bf16.msra.mxu0 %v3626
    %3647 = vmatprep.subr.bf16.mxu0 0
    %3648 = vmatpush1.bf16.msra.mxu0 %v3627
    %3649 = vmatprep.subr.bf16.mxu0 0
    %3650 = vmatpush1.bf16.msra.mxu0 %v3628
    %3651 = vmatprep.subr.bf16.mxu0 0
    %3652 = vmatpush1.bf16.msra.mxu0 %v3629
    %3653 = vmatprep.subr.bf16.mxu0 0
    %3654 = vmatpush1.bf16.msra.mxu0 %v3630
    %3655 = vmatprep.subr.bf16.mxu0 0
    %3656 = vmatpush1.bf16.msra.mxu0 0
    %3657 = vmatprep.subr.bf16.mxu0 0
    %3658 = vmatpush1.bf16.msra.mxu0 0
    %3659 = vmatprep.subr.bf16.mxu0 0
    %3660 = vmatpush1.bf16.msra.mxu0 0
    %3661 = vmatprep.subr.bf16.mxu0 0
    %3662 = vmatpush1.bf16.msra.mxu0 0
    %3663 = vmatprep.subr.bf16.mxu0 0
    %3664 = vmatpush1.bf16.msra.mxu0 0
    %3665 = vmatprep.subr.bf16.mxu0 0
    %3666 = vmatpush1.bf16.msra.mxu0 0
    %3667 = vmatprep.subr.bf16.mxu0 0
    %3668 = vmatpush1.bf16.msra.mxu0 0
    %3669 = vmatprep.subr.bf16.mxu0 0
    %3670 = vmatpush1.bf16.msra.mxu0 0
    %3671 = vmatprep.mubr.bf16.mxu0 0
    %3672 = vmatmul.mubr.bf16.gmra.mrb[0].mxu0 %v3551
    %v3673 = vpop.f32.mrb[0].mxu0
    %v3674 = vadd.f32 0.0, %v3673
    %v3675 = vpop.f32.mrb[0].mxu0
    %v3676 = vpop.f32.mrb[0].mxu0
    %v3677 = vadd.f32 0.0, %v3676
    %v3678 = vpop.f32.mrb[0].mxu0
    %3679 = vmatprep.mubr.bf16.mxu0 0
    %3680 = vmatmul.mubr.bf16.gmra.mrb[0].mxu0 %v3552
    %v3681 = vpop.f32.mrb[0].mxu0
    %v3682 = vadd.f32 0.0, %v3681
    %v3683 = vpop.f32.mrb[0].mxu0
    %v3684 = vpop.f32.mrb[0].mxu0
    %v3685 = vadd.f32 0.0, %v3684
    %v3686 = vpop.f32.mrb[0].mxu0
    %3687 = vmatprep.mubr.bf16.mxu0 0
    %3688 = vmatmul.mubr.bf16.gmra.mrb[0].mxu0 %v3553
    %v3689 = vpop.f32.mrb[0].mxu0
    %v3690 = vadd.f32 0.0, %v3689
    %v3691 = vpop.f32.mrb[0].mxu0
    %v3692 = vpop.f32.mrb[0].mxu0
    %v3693 = vadd.f32 0.0, %v3692
    %v3694 = vpop.f32.mrb[0].mxu0
    %3695 = vmatprep.mubr.bf16.mxu0 0
    %3696 = vmatmul.mubr.bf16.gmra.mrb[0].mxu0 %v3554
    %v3697 = vpop.f32.mrb[0].mxu0
    %v3698 = vadd.f32 0.0, %v3697
    %v3699 = vpop.f32.mrb[0].mxu0
    %v3700 = vpop.f32.mrb[0].mxu0
    %v3701 = vadd.f32 0.0, %v3700
    %v3702 = vpop.f32.mrb[0].mxu0
    %3703 = vmatprep.mubr.bf16.mxu0 0
    %3704 = vmatmul.mubr.bf16.gmra.mrb[0].mxu0 %v3555
    %v3705 = vpop.f32.mrb[0].mxu0
    %v3706 = vadd.f32 0.0, %v3705
    %v3707 = vpop.f32.mrb[0].mxu0
    %v3708 = vpop.f32.mrb[0].mxu0
    %v3709 = vadd.f32 0.0, %v3708
    %v3710 = vpop.f32.mrb[0].mxu0
    %3711 = vmatprep.mubr.bf16.mxu0 0
    %3712 = vmatmul.mubr.bf16.gmra.mrb[0].mxu0 %v3556
    %v3713 = vpop.f32.mrb[0].mxu0
    %v3714 = vadd.f32 0.0, %v3713
    %v3715 = vpop.f32.mrb[0].mxu0
    %v3716 = vpop.f32.mrb[0].mxu0
    %v3717 = vadd.f32 0.0, %v3716
    %v3718 = vpop.f32.mrb[0].mxu0
    %3719 = vmatprep.mubr.bf16.mxu0 0
    %3720 = vmatmul.mubr.bf16.gmra.mrb[0].mxu0 %v3557
    %v3721 = vpop.f32.mrb[0].mxu0
    %v3722 = vadd.f32 0.0, %v3721
    %v3723 = vpop.f32.mrb[0].mxu0
    %v3724 = vpop.f32.mrb[0].mxu0
    %v3725 = vadd.f32 0.0, %v3724
    %v3726 = vpop.f32.mrb[0].mxu0
    %3727 = vmatprep.mubr.bf16.mxu0 0
    %3728 = vmatmul.mubr.bf16.gmra.mrb[0].mxu0 %v3558
    %v3729 = vpop.f32.mrb[0].mxu0
    %v3730 = vadd.f32 0.0, %v3729
    %v3731 = vpop.f32.mrb[0].mxu0
    %v3732 = vpop.f32.mrb[0].mxu0
    %v3733 = vadd.f32 0.0, %v3732
    %v3734 = vpop.f32.mrb[0].mxu0
    %3735 = vdwg.mxu0
    %v3752 = vunpack.c.l.b16 %v3559
    %v3753 = vunpack.c.l.b16 %v3560
    %v3754 = vunpack.c.l.b16 %v3561
    %v3755 = vunpack.c.l.b16 %v3562
    %v3756 = vunpack.c.l.b16 %v3563
    %v3757 = vunpack.c.l.b16 %v3564
    %v3758 = vunpack.c.l.b16 %v3565
    %v3759 = vunpack.c.l.b16 %v3566
    %v3760 = vunpack.c.l.b16 %v3567
    %v3761 = vunpack.c.l.b16 %v3568
    %v3762 = vunpack.c.l.b16 %v3569
    %v3763 = vunpack.c.l.b16 %v3570
    %v3764 = vunpack.c.l.b16 %v3571
    %v3765 = vunpack.c.l.b16 %v3572
    %v3766 = vunpack.c.l.b16 %v3573
    %v3767 = vunpack.c.l.b16 %v3574
    %v3768 = vpack.c.b16 %v3753, %v3752
    %v3769 = vpack.c.b16 %v3755, %v3754
    %v3770 = vpack.c.b16 %v3757, %v3756
    %v3771 = vpack.c.b16 %v3759, %v3758
    %v3772 = vpack.c.b16 %v3761, %v3760
    %v3773 = vpack.c.b16 %v3763, %v3762
    %v3774 = vpack.c.b16 %v3765, %v3764
    %v3775 = vpack.c.b16 %v3767, %v3766
    %3784 = vmatprep.subr.bf16.mxu0 0
    %3785 = vmatpush1.bf16.msra.mxu0 %v3768
    %3786 = vmatprep.subr.bf16.mxu0 0
    %3787 = vmatpush1.bf16.msra.mxu0 %v3769
    %3788 = vmatprep.subr.bf16.mxu0 0
    %3789 = vmatpush1.bf16.msra.mxu0 %v3770
    %3790 = vmatprep.subr.bf16.mxu0 0
    %3791 = vmatpush1.bf16.msra.mxu0 %v3771
    %3792 = vmatprep.subr.bf16.mxu0 0
    %3793 = vmatpush1.bf16.msra.mxu0 %v3772
    %3794 = vmatprep.subr.bf16.mxu0 0
    %3795 = vmatpush1.bf16.msra.mxu0 %v3773
    %3796 = vmatprep.subr.bf16.mxu0 0
    %3797 = vmatpush1.bf16.msra.mxu0 %v3774
    %3798 = vmatprep.subr.bf16.mxu0 0
    %3799 = vmatpush1.bf16.msra.mxu0 %v3775
    %3800 = vmatprep.subr.bf16.mxu0 0
    %3801 = vmatpush1.bf16.msra.mxu0 0
    %3802 = vmatprep.subr.bf16.mxu0 0
    %3803 = vmatpush1.bf16.msra.mxu0 0
    %3804 = vmatprep.subr.bf16.mxu0 0
    %3805 = vmatpush1.bf16.msra.mxu0 0
    %3806 = vmatprep.subr.bf16.mxu0 0
    %3807 = vmatpush1.bf16.msra.mxu0 0
    %3808 = vmatprep.subr.bf16.mxu0 0
    %3809 = vmatpush1.bf16.msra.mxu0 0
    %3810 = vmatprep.subr.bf16.mxu0 0
    %3811 = vmatpush1.bf16.msra.mxu0 0
    %3812 = vmatprep.subr.bf16.mxu0 0
    %3813 = vmatpush1.bf16.msra.mxu0 0
    %3814 = vmatprep.subr.bf16.mxu0 0
    %3815 = vmatpush1.bf16.msra.mxu0 0
    %3816 = vmatprep.mubr.bf16.mxu0 0
    %3817 = vmatmul.mubr.bf16.gmra.mrb[0].mxu0 %v1895
    %v3818 = vpop.f32.mrb[0].mxu0
    %v3819 = vadd.f32 %v3674, %v3818
    %v3820 = vpop.f32.mrb[0].mxu0
    %v3821 = vpop.f32.mrb[0].mxu0
    %v3822 = vadd.f32 %v3677, %v3821
    %v3823 = vpop.f32.mrb[0].mxu0
    %3824 = vmatprep.mubr.bf16.mxu0 0
    %3825 = vmatmul.mubr.bf16.gmra.mrb[0].mxu0 %v1896
    %v3826 = vpop.f32.mrb[0].mxu0
    %v3827 = vadd.f32 %v3682, %v3826
    %v3828 = vpop.f32.mrb[0].mxu0
    %v3829 = vpop.f32.mrb[0].mxu0
    %v3830 = vadd.f32 %v3685, %v3829
    %v3831 = vpop.f32.mrb[0].mxu0
    %3832 = vmatprep.mubr.bf16.mxu0 0
    %3833 = vmatmul.mubr.bf16.gmra.mrb[0].mxu0 %v1897
    %v3834 = vpop.f32.mrb[0].mxu0
    %v3835 = vadd.f32 %v3690, %v3834
    %v3836 = vpop.f32.mrb[0].mxu0
    %v3837 = vpop.f32.mrb[0].mxu0
    %v3838 = vadd.f32 %v3693, %v3837
    %v3839 = vpop.f32.mrb[0].mxu0
    %3840 = vmatprep.mubr.bf16.mxu0 0
    %3841 = vmatmul.mubr.bf16.gmra.mrb[0].mxu0 %v1898
    %v3842 = vpop.f32.mrb[0].mxu0
    %v3843 = vadd.f32 %v3698, %v3842
    %v3844 = vpop.f32.mrb[0].mxu0
    %v3845 = vpop.f32.mrb[0].mxu0
    %v3846 = vadd.f32 %v3701, %v3845
    %v3847 = vpop.f32.mrb[0].mxu0
    %3848 = vmatprep.mubr.bf16.mxu0 0
    %3849 = vmatmul.mubr.bf16.gmra.mrb[0].mxu0 %v1899
    %v3850 = vpop.f32.mrb[0].mxu0
    %v3851 = vadd.f32 %v3706, %v3850
    %v3852 = vpop.f32.mrb[0].mxu0
    %v3853 = vpop.f32.mrb[0].mxu0
    %v3854 = vadd.f32 %v3709, %v3853
    %v3855 = vpop.f32.mrb[0].mxu0
    %3856 = vmatprep.mubr.bf16.mxu0 0
    %3857 = vmatmul.mubr.bf16.gmra.mrb[0].mxu0 %v1900
    %v3858 = vpop.f32.mrb[0].mxu0
    %v3859 = vadd.f32 %v3714, %v3858
    %v3860 = vpop.f32.mrb[0].mxu0
    %v3861 = vpop.f32.mrb[0].mxu0
    %v3862 = vadd.f32 %v3717, %v3861
    %v3863 = vpop.f32.mrb[0].mxu0
    %3864 = vmatprep.mubr.bf16.mxu0 0
    %3865 = vmatmul.mubr.bf16.gmra.mrb[0].mxu0 %v1901
    %v3866 = vpop.f32.mrb[0].mxu0
    %v3867 = vadd.f32 %v3722, %v3866
    %v3868 = vpop.f32.mrb[0].mxu0
    %v3869 = vpop.f32.mrb[0].mxu0
    %v3870 = vadd.f32 %v3725, %v3869
    %v3871 = vpop.f32.mrb[0].mxu0
    %3872 = vmatprep.mubr.bf16.mxu0 0
    %3873 = vmatmul.mubr.bf16.gmra.mrb[0].mxu0 %v1902
    %v3874 = vpop.f32.mrb[0].mxu0
    %v3875 = vadd.f32 %v3730, %v3874
    %v3876 = vpop.f32.mrb[0].mxu0
    %v3877 = vpop.f32.mrb[0].mxu0
    %v3878 = vadd.f32 %v3733, %v3877
    %v3879 = vpop.f32.mrb[0].mxu0
    %3880 = vdwg.mxu0
    %v3881 = vld [vmem:[%s4] sm:$0x1]
    %v3883 = vlaneseq
    %v3884 = vshrl.u32 %v3883, 7
    %v3885 = vsub.s32 0, %v3884
    %v3886 = vrot.slane %v3881, %v3885
    %v3888 = vadd.f32 %v3819, %v3886
    %v3889 = vadd.f32 %v3822, %v3886
    %v3890 = vadd.f32 %v3827, %v3886
    %v3891 = vadd.f32 %v3830, %v3886
    %v3892 = vadd.f32 %v3835, %v3886
    %v3893 = vadd.f32 %v3838, %v3886
    %v3894 = vadd.f32 %v3843, %v3886
    %v3895 = vadd.f32 %v3846, %v3886
    %v3896 = vadd.f32 %v3851, %v3886
    %v3897 = vadd.f32 %v3854, %v3886
    %v3898 = vadd.f32 %v3859, %v3886
    %v3899 = vadd.f32 %v3862, %v3886
    %v3900 = vadd.f32 %v3867, %v3886
    %v3901 = vadd.f32 %v3870, %v3886
    %v3902 = vadd.f32 %v3875, %v3886
    %v3903 = vadd.f32 %v3878, %v3886
    %v3904 = vmax.f32 %v3888, 0.0
    %v3905 = vmax.f32 %v3889, 0.0
    %v3906 = vmax.f32 %v3890, 0.0
    %v3907 = vmax.f32 %v3891, 0.0
    %v3908 = vmax.f32 %v3892, 0.0
    %v3909 = vmax.f32 %v3893, 0.0
    %v3910 = vmax.f32 %v3894, 0.0
    %v3911 = vmax.f32 %v3895, 0.0
    %v3912 = vmax.f32 %v3896, 0.0
    %v3913 = vmax.f32 %v3897, 0.0
    %v3914 = vmax.f32 %v3898, 0.0
    %v3915 = vmax.f32 %v3899, 0.0
    %v3916 = vmax.f32 %v3900, 0.0
    %v3917 = vmax.f32 %v3901, 0.0
    %v3918 = vmax.f32 %v3902, 0.0
    %v3919 = vmax.f32 %v3903, 0.0
    %v3920 = vld [vmem:[%s5] sm:$0x1]
    %v3921 = vld [vmem:[%s6] sm:$0x1]
    %3922 = vadd.xlane.f32.xlu0 %v3904
    %v3923 = vpop.xlane.xlu0 %3922
    %3924 = vadd.xlane.f32.xlu0 %v3905
    %v3925 = vpop.xlane.xlu0 %3924
    %3926 = vadd.xlane.f32.xlu0 %v3906
    %v3927 = vpop.xlane.xlu0 %3926
    %3928 = vadd.xlane.f32.xlu0 %v3907
    %v3929 = vpop.xlane.xlu0 %3928
    %3930 = vadd.xlane.f32.xlu0 %v3908
    %v3931 = vpop.xlane.xlu0 %3930
    %3932 = vadd.xlane.f32.xlu0 %v3909
    %v3933 = vpop.xlane.xlu0 %3932
    %3934 = vadd.xlane.f32.xlu0 %v3910
    %v3935 = vpop.xlane.xlu0 %3934
    %3936 = vadd.xlane.f32.xlu0 %v3911
    %v3937 = vpop.xlane.xlu0 %3936
    %3938 = vadd.xlane.f32.xlu0 %v3912
    %v3939 = vpop.xlane.xlu0 %3938
    %3940 = vadd.xlane.f32.xlu0 %v3913
    %v3941 = vpop.xlane.xlu0 %3940
    %3942 = vadd.xlane.f32.xlu0 %v3914
    %v3943 = vpop.xlane.xlu0 %3942
    %3944 = vadd.xlane.f32.xlu0 %v3915
    %v3945 = vpop.xlane.xlu0 %3944
    %3946 = vadd.xlane.f32.xlu0 %v3916
    %v3947 = vpop.xlane.xlu0 %3946
    %3948 = vadd.xlane.f32.xlu0 %v3917
    %v3949 = vpop.xlane.xlu0 %3948
    %3950 = vadd.xlane.f32.xlu0 %v3918
    %v3951 = vpop.xlane.xlu0 %3950
    %3952 = vadd.xlane.f32.xlu0 %v3919
    %v3953 = vpop.xlane.xlu0 %3952
    %v3954 = vrcp.pop 128.0
    %v3955 = vmul.f32 %v3923, %v3954
    %v3956 = vmul.f32 %v3925, %v3954
    %v3957 = vmul.f32 %v3927, %v3954
    %v3958 = vmul.f32 %v3929, %v3954
    %v3959 = vmul.f32 %v3931, %v3954
    %v3960 = vmul.f32 %v3933, %v3954
    %v3961 = vmul.f32 %v3935, %v3954
    %v3962 = vmul.f32 %v3937, %v3954
    %v3963 = vmul.f32 %v3939, %v3954
    %v3964 = vmul.f32 %v3941, %v3954
    %v3965 = vmul.f32 %v3943, %v3954
    %v3966 = vmul.f32 %v3945, %v3954
    %v3967 = vmul.f32 %v3947, %v3954
    %v3968 = vmul.f32 %v3949, %v3954
    %v3969 = vmul.f32 %v3951, %v3954
    %v3970 = vmul.f32 %v3953, %v3954
    %v3971 = vmul.f32 %v3904, %v3904
    %v3972 = vmul.f32 %v3905, %v3905
    %v3973 = vmul.f32 %v3906, %v3906
    %v3974 = vmul.f32 %v3907, %v3907
    %v3975 = vmul.f32 %v3908, %v3908
    %v3976 = vmul.f32 %v3909, %v3909
    %v3977 = vmul.f32 %v3910, %v3910
    %v3978 = vmul.f32 %v3911, %v3911
    %v3979 = vmul.f32 %v3912, %v3912
    %v3980 = vmul.f32 %v3913, %v3913
    %v3981 = vmul.f32 %v3914, %v3914
    %v3982 = vmul.f32 %v3915, %v3915
    %v3983 = vmul.f32 %v3916, %v3916
    %v3984 = vmul.f32 %v3917, %v3917
    %v3985 = vmul.f32 %v3918, %v3918
    %v3986 = vmul.f32 %v3919, %v3919
    %3987 = vadd.xlane.f32.xlu0 %v3971
    %v3988 = vpop.xlane.xlu0 %3987
    %3989 = vadd.xlane.f32.xlu0 %v3972
    %v3990 = vpop.xlane.xlu0 %3989
    %3991 = vadd.xlane.f32.xlu0 %v3973
    %v3992 = vpop.xlane.xlu0 %3991
    %3993 = vadd.xlane.f32.xlu0 %v3974
    %v3994 = vpop.xlane.xlu0 %3993
    %3995 = vadd.xlane.f32.xlu0 %v3975
    %v3996 = vpop.xlane.xlu0 %3995
    %3997 = vadd.xlane.f32.xlu0 %v3976
    %v3998 = vpop.xlane.xlu0 %3997
    %3999 = vadd.xlane.f32.xlu0 %v3977
    %v4000 = vpop.xlane.xlu0 %3999
    %4001 = vadd.xlane.f32.xlu0 %v3978
    %v4002 = vpop.xlane.xlu0 %4001
    %4003 = vadd.xlane.f32.xlu0 %v3979
    %v4004 = vpop.xlane.xlu0 %4003
    %4005 = vadd.xlane.f32.xlu0 %v3980
    %v4006 = vpop.xlane.xlu0 %4005
    %4007 = vadd.xlane.f32.xlu0 %v3981
    %v4008 = vpop.xlane.xlu0 %4007
    %4009 = vadd.xlane.f32.xlu0 %v3982
    %v4010 = vpop.xlane.xlu0 %4009
    %4011 = vadd.xlane.f32.xlu0 %v3983
    %v4012 = vpop.xlane.xlu0 %4011
    %4013 = vadd.xlane.f32.xlu0 %v3984
    %v4014 = vpop.xlane.xlu0 %4013
    %4015 = vadd.xlane.f32.xlu0 %v3985
    %v4016 = vpop.xlane.xlu0 %4015
    %4017 = vadd.xlane.f32.xlu0 %v3986
    %v4018 = vpop.xlane.xlu0 %4017
    %v4019 = vmul.f32 %v3988, %v3954
    %v4020 = vmul.f32 %v3990, %v3954
    %v4021 = vmul.f32 %v3992, %v3954
    %v4022 = vmul.f32 %v3994, %v3954
    %v4023 = vmul.f32 %v3996, %v3954
    %v4024 = vmul.f32 %v3998, %v3954
    %v4025 = vmul.f32 %v4000, %v3954
    %v4026 = vmul.f32 %v4002, %v3954
    %v4027 = vmul.f32 %v4004, %v3954
    %v4028 = vmul.f32 %v4006, %v3954
    %v4029 = vmul.f32 %v4008, %v3954
    %v4030 = vmul.f32 %v4010, %v3954
    %v4031 = vmul.f32 %v4012, %v3954
    %v4032 = vmul.f32 %v4014, %v3954
    %v4033 = vmul.f32 %v4016, %v3954
    %v4034 = vmul.f32 %v4018, %v3954
    %v4035 = vmul.f32 %v3955, %v3955
    %v4036 = vmul.f32 %v3956, %v3956
    %v4037 = vmul.f32 %v3957, %v3957
    %v4038 = vmul.f32 %v3958, %v3958
    %v4039 = vmul.f32 %v3959, %v3959
    %v4040 = vmul.f32 %v3960, %v3960
    %v4041 = vmul.f32 %v3961, %v3961
    %v4042 = vmul.f32 %v3962, %v3962
    %v4043 = vmul.f32 %v3963, %v3963
    %v4044 = vmul.f32 %v3964, %v3964
    %v4045 = vmul.f32 %v3965, %v3965
    %v4046 = vmul.f32 %v3966, %v3966
    %v4047 = vmul.f32 %v3967, %v3967
    %v4048 = vmul.f32 %v3968, %v3968
    %v4049 = vmul.f32 %v3969, %v3969
    %v4050 = vmul.f32 %v3970, %v3970
    %v4051 = vsub.f32 %v4019, %v4035
    %v4052 = vsub.f32 %v4020, %v4036
    %v4053 = vsub.f32 %v4021, %v4037
    %v4054 = vsub.f32 %v4022, %v4038
    %v4055 = vsub.f32 %v4023, %v4039
    %v4056 = vsub.f32 %v4024, %v4040
    %v4057 = vsub.f32 %v4025, %v4041
    %v4058 = vsub.f32 %v4026, %v4042
    %v4059 = vsub.f32 %v4027, %v4043
    %v4060 = vsub.f32 %v4028, %v4044
    %v4061 = vsub.f32 %v4029, %v4045
    %v4062 = vsub.f32 %v4030, %v4046
    %v4063 = vsub.f32 %v4031, %v4047
    %v4064 = vsub.f32 %v4032, %v4048
    %v4065 = vsub.f32 %v4033, %v4049
    %v4066 = vsub.f32 %v4034, %v4050
    %v4067 = vmax.f32 %v4051, 0.0
    %v4068 = vmax.f32 %v4052, 0.0
    %v4069 = vmax.f32 %v4053, 0.0
    %v4070 = vmax.f32 %v4054, 0.0
    %v4071 = vmax.f32 %v4055, 0.0
    %v4072 = vmax.f32 %v4056, 0.0
    %v4073 = vmax.f32 %v4057, 0.0
    %v4074 = vmax.f32 %v4058, 0.0
    %v4075 = vmax.f32 %v4059, 0.0
    %v4076 = vmax.f32 %v4060, 0.0
    %v4077 = vmax.f32 %v4061, 0.0
    %v4078 = vmax.f32 %v4062, 0.0
    %v4079 = vmax.f32 %v4063, 0.0
    %v4080 = vmax.f32 %v4064, 0.0
    %v4081 = vmax.f32 %v4065, 0.0
    %v4082 = vmax.f32 %v4066, 0.0
    %v4083 = vsub.f32 %v3904, %v3955
    %v4084 = vsub.f32 %v3905, %v3956
    %v4085 = vsub.f32 %v3906, %v3957
    %v4086 = vsub.f32 %v3907, %v3958
    %v4087 = vsub.f32 %v3908, %v3959
    %v4088 = vsub.f32 %v3909, %v3960
    %v4089 = vsub.f32 %v3910, %v3961
    %v4090 = vsub.f32 %v3911, %v3962
    %v4091 = vsub.f32 %v3912, %v3963
    %v4092 = vsub.f32 %v3913, %v3964
    %v4093 = vsub.f32 %v3914, %v3965
    %v4094 = vsub.f32 %v3915, %v3966
    %v4095 = vsub.f32 %v3916, %v3967
    %v4096 = vsub.f32 %v3917, %v3968
    %v4097 = vsub.f32 %v3918, %v3969
    %v4098 = vsub.f32 %v3919, %v3970
    %v4099 = vadd.f32 %v4067, 1e-05
    %v4100 = vadd.f32 %v4068, 1e-05
    %v4101 = vadd.f32 %v4069, 1e-05
    %v4102 = vadd.f32 %v4070, 1e-05
    %v4103 = vadd.f32 %v4071, 1e-05
    %v4104 = vadd.f32 %v4072, 1e-05
    %v4105 = vadd.f32 %v4073, 1e-05
    %v4106 = vadd.f32 %v4074, 1e-05
    %v4107 = vadd.f32 %v4075, 1e-05
    %v4108 = vadd.f32 %v4076, 1e-05
    %v4109 = vadd.f32 %v4077, 1e-05
    %v4110 = vadd.f32 %v4078, 1e-05
    %v4111 = vadd.f32 %v4079, 1e-05
    %v4112 = vadd.f32 %v4080, 1e-05
    %v4113 = vadd.f32 %v4081, 1e-05
    %v4114 = vadd.f32 %v4082, 1e-05
    %v4115 = vrsqrt.pop %v4099
    %v4116 = vrsqrt.pop %v4100
    %v4117 = vrsqrt.pop %v4101
    %v4118 = vrsqrt.pop %v4102
    %v4119 = vrsqrt.pop %v4103
    %v4120 = vrsqrt.pop %v4104
    %v4121 = vrsqrt.pop %v4105
    %v4122 = vrsqrt.pop %v4106
    %v4123 = vrsqrt.pop %v4107
    %v4124 = vrsqrt.pop %v4108
    %v4125 = vrsqrt.pop %v4109
    %v4126 = vrsqrt.pop %v4110
    %v4127 = vrsqrt.pop %v4111
    %v4128 = vrsqrt.pop %v4112
    %v4129 = vrsqrt.pop %v4113
    %v4130 = vrsqrt.pop %v4114
    %v4131 = vmul.f32 %v4083, %v4115
    %v4132 = vmul.f32 %v4084, %v4116
    %v4133 = vmul.f32 %v4085, %v4117
    %v4134 = vmul.f32 %v4086, %v4118
    %v4135 = vmul.f32 %v4087, %v4119
    %v4136 = vmul.f32 %v4088, %v4120
    %v4137 = vmul.f32 %v4089, %v4121
    %v4138 = vmul.f32 %v4090, %v4122
    %v4139 = vmul.f32 %v4091, %v4123
    %v4140 = vmul.f32 %v4092, %v4124
    %v4141 = vmul.f32 %v4093, %v4125
    %v4142 = vmul.f32 %v4094, %v4126
    %v4143 = vmul.f32 %v4095, %v4127
    %v4144 = vmul.f32 %v4096, %v4128
    %v4145 = vmul.f32 %v4097, %v4129
    %v4146 = vmul.f32 %v4098, %v4130
    %v4148 = vlaneseq
    %v4149 = vshrl.u32 %v4148, 7
    %v4150 = vsub.s32 0, %v4149
    %v4151 = vrot.slane %v3920, %v4150
    %v4153 = vmul.f32 %v4131, %v4151
    %v4154 = vmul.f32 %v4132, %v4151
    %v4155 = vmul.f32 %v4133, %v4151
    %v4156 = vmul.f32 %v4134, %v4151
    %v4157 = vmul.f32 %v4135, %v4151
    %v4158 = vmul.f32 %v4136, %v4151
    %v4159 = vmul.f32 %v4137, %v4151
    %v4160 = vmul.f32 %v4138, %v4151
    %v4161 = vmul.f32 %v4139, %v4151
    %v4162 = vmul.f32 %v4140, %v4151
    %v4163 = vmul.f32 %v4141, %v4151
    %v4164 = vmul.f32 %v4142, %v4151
    %v4165 = vmul.f32 %v4143, %v4151
    %v4166 = vmul.f32 %v4144, %v4151
    %v4167 = vmul.f32 %v4145, %v4151
    %v4168 = vmul.f32 %v4146, %v4151
    %v4170 = vlaneseq
    %v4171 = vshrl.u32 %v4170, 7
    %v4172 = vsub.s32 0, %v4171
    %v4173 = vrot.slane %v3921, %v4172
    %v4175 = vadd.f32 %v4153, %v4173
    %v4176 = vadd.f32 %v4154, %v4173
    %v4177 = vadd.f32 %v4155, %v4173
    %v4178 = vadd.f32 %v4156, %v4173
    %v4179 = vadd.f32 %v4157, %v4173
    %v4180 = vadd.f32 %v4158, %v4173
    %v4181 = vadd.f32 %v4159, %v4173
    %v4182 = vadd.f32 %v4160, %v4173
    %v4183 = vadd.f32 %v4161, %v4173
    %v4184 = vadd.f32 %v4162, %v4173
    %v4185 = vadd.f32 %v4163, %v4173
    %v4186 = vadd.f32 %v4164, %v4173
    %v4187 = vadd.f32 %v4165, %v4173
    %v4188 = vadd.f32 %v4166, %v4173
    %v4189 = vadd.f32 %v4167, %v4173
    %v4190 = vadd.f32 %v4168, %v4173
    %v4191 = vpack.c.bf16 %v4176, %v4175
    %v4192 = vpack.c.bf16 %v4178, %v4177
    %v4193 = vpack.c.bf16 %v4180, %v4179
    %v4194 = vpack.c.bf16 %v4182, %v4181
    %v4195 = vpack.c.bf16 %v4184, %v4183
    %v4196 = vpack.c.bf16 %v4186, %v4185
    %v4197 = vpack.c.bf16 %v4188, %v4187
    %v4198 = vpack.c.bf16 %v4190, %v4189
    %v4199 = vld [vmem:[#allocation2] sm:$0xf]
    %v4200 = vld [vmem:[#allocation2 + $0x4] sm:$0xf]
    %v4201 = vld [vmem:[#allocation2 + $0x8] sm:$0xf]
    %v4202 = vld [vmem:[#allocation2 + $0xc] sm:$0xf]
    %v4203 = vld [vmem:[#allocation2 + $0x10] sm:$0xf]
    %v4204 = vld [vmem:[#allocation2 + $0x14] sm:$0xf]
    %v4205 = vld [vmem:[#allocation2 + $0x18] sm:$0xf]
    %v4206 = vld [vmem:[#allocation2 + $0x1c] sm:$0xf]
    %v4207 = vld [vmem:[#allocation2 + $0x20] sm:$0xf]
    %v4208 = vld [vmem:[#allocation2 + $0x24] sm:$0xf]
    %v4209 = vld [vmem:[#allocation2 + $0x28] sm:$0xf]
    %v4210 = vld [vmem:[#allocation2 + $0x2c] sm:$0xf]
    %v4211 = vld [vmem:[#allocation2 + $0x30] sm:$0xf]
    %v4212 = vld [vmem:[#allocation2 + $0x34] sm:$0xf]
    %v4213 = vld [vmem:[#allocation2 + $0x38] sm:$0xf]
    %v4214 = vld [vmem:[#allocation2 + $0x3c] sm:$0xf]
    %v4215 = vld [vmem:[%s8] sm:$0x1]
    %v4217 = vlaneseq
    %v4218 = vshrl.u32 %v4217, 7
    %v4219 = vsub.s32 0, %v4218
    %v4220 = vrot.slane %v4215, %v4219
    %v4238 = vunpack.c.l.b16 %v4199
    %v4239 = vunpack.c.l.b16 %v4200
    %v4240 = vunpack.c.l.b16 %v4201
    %v4241 = vunpack.c.l.b16 %v4202
    %v4242 = vunpack.c.l.b16 %v4203
    %v4243 = vunpack.c.l.b16 %v4204
    %v4244 = vunpack.c.l.b16 %v4205
    %v4245 = vunpack.c.l.b16 %v4206
    %v4246 = vunpack.c.l.b16 %v4207
    %v4247 = vunpack.c.l.b16 %v4208
    %v4248 = vunpack.c.l.b16 %v4209
    %v4249 = vunpack.c.l.b16 %v4210
    %v4250 = vunpack.c.l.b16 %v4211
    %v4251 = vunpack.c.l.b16 %v4212
    %v4252 = vunpack.c.l.b16 %v4213
    %v4253 = vunpack.c.l.b16 %v4214
    %v4254 = vpack.c.b16 %v4239, %v4238
    %v4255 = vpack.c.b16 %v4241, %v4240
    %v4256 = vpack.c.b16 %v4243, %v4242
    %v4257 = vpack.c.b16 %v4245, %v4244
    %v4258 = vpack.c.b16 %v4247, %v4246
    %v4259 = vpack.c.b16 %v4249, %v4248
    %v4260 = vpack.c.b16 %v4251, %v4250
    %v4261 = vpack.c.b16 %v4253, %v4252
    %4270 = vmatprep.subr.bf16.mxu0 0
    %4271 = vmatpush1.bf16.msra.mxu0 %v4254
    %4272 = vmatprep.subr.bf16.mxu0 0
    %4273 = vmatpush1.bf16.msra.mxu0 %v4255
    %4274 = vmatprep.subr.bf16.mxu0 0
    %4275 = vmatpush1.bf16.msra.mxu0 %v4256
    %4276 = vmatprep.subr.bf16.mxu0 0
    %4277 = vmatpush1.bf16.msra.mxu0 %v4257
    %4278 = vmatprep.subr.bf16.mxu0 0
    %4279 = vmatpush1.bf16.msra.mxu0 %v4258
    %4280 = vmatprep.subr.bf16.mxu0 0
    %4281 = vmatpush1.bf16.msra.mxu0 %v4259
    %4282 = vmatprep.subr.bf16.mxu0 0
    %4283 = vmatpush1.bf16.msra.mxu0 %v4260
    %4284 = vmatprep.subr.bf16.mxu0 0
    %4285 = vmatpush1.bf16.msra.mxu0 %v4261
    %4286 = vmatprep.subr.bf16.mxu0 0
    %4287 = vmatpush1.bf16.msra.mxu0 0
    %4288 = vmatprep.subr.bf16.mxu0 0
    %4289 = vmatpush1.bf16.msra.mxu0 0
    %4290 = vmatprep.subr.bf16.mxu0 0
    %4291 = vmatpush1.bf16.msra.mxu0 0
    %4292 = vmatprep.subr.bf16.mxu0 0
    %4293 = vmatpush1.bf16.msra.mxu0 0
    %4294 = vmatprep.subr.bf16.mxu0 0
    %4295 = vmatpush1.bf16.msra.mxu0 0
    %4296 = vmatprep.subr.bf16.mxu0 0
    %4297 = vmatpush1.bf16.msra.mxu0 0
    %4298 = vmatprep.subr.bf16.mxu0 0
    %4299 = vmatpush1.bf16.msra.mxu0 0
    %4300 = vmatprep.subr.bf16.mxu0 0
    %4301 = vmatpush1.bf16.msra.mxu0 0
    %4302 = vmatprep.mubr.bf16.mxu0 0
    %4303 = vmatmul.mubr.bf16.gmra.mrb[0].mxu0 %v4191
    %v4304 = vpop.f32.mrb[0].mxu0
    %v4305 = vadd.f32 %v4220, %v4304
    %v4306 = vpop.f32.mrb[0].mxu0
    %v4307 = vpop.f32.mrb[0].mxu0
    %v4308 = vadd.f32 %v4220, %v4307
    %v4309 = vpop.f32.mrb[0].mxu0
    %4310 = vmatprep.mubr.bf16.mxu0 0
    %4311 = vmatmul.mubr.bf16.gmra.mrb[0].mxu0 %v4192
    %v4312 = vpop.f32.mrb[0].mxu0
    %v4313 = vadd.f32 %v4220, %v4312
    %v4314 = vpop.f32.mrb[0].mxu0
    %v4315 = vpop.f32.mrb[0].mxu0
    %v4316 = vadd.f32 %v4220, %v4315
    %v4317 = vpop.f32.mrb[0].mxu0
    %4318 = vmatprep.mubr.bf16.mxu0 0
    %4319 = vmatmul.mubr.bf16.gmra.mrb[0].mxu0 %v4193
    %v4320 = vpop.f32.mrb[0].mxu0
    %v4321 = vadd.f32 %v4220, %v4320
    %v4322 = vpop.f32.mrb[0].mxu0
    %v4323 = vpop.f32.mrb[0].mxu0
    %v4324 = vadd.f32 %v4220, %v4323
    %v4325 = vpop.f32.mrb[0].mxu0
    %4326 = vmatprep.mubr.bf16.mxu0 0
    %4327 = vmatmul.mubr.bf16.gmra.mrb[0].mxu0 %v4194
    %v4328 = vpop.f32.mrb[0].mxu0
    %v4329 = vadd.f32 %v4220, %v4328
    %v4330 = vpop.f32.mrb[0].mxu0
    %v4331 = vpop.f32.mrb[0].mxu0
    %v4332 = vadd.f32 %v4220, %v4331
    %v4333 = vpop.f32.mrb[0].mxu0
    %4334 = vmatprep.mubr.bf16.mxu0 0
    %4335 = vmatmul.mubr.bf16.gmra.mrb[0].mxu0 %v4195
    %v4336 = vpop.f32.mrb[0].mxu0
    %v4337 = vadd.f32 %v4220, %v4336
    %v4338 = vpop.f32.mrb[0].mxu0
    %v4339 = vpop.f32.mrb[0].mxu0
    %v4340 = vadd.f32 %v4220, %v4339
    %v4341 = vpop.f32.mrb[0].mxu0
    %4342 = vmatprep.mubr.bf16.mxu0 0
    %4343 = vmatmul.mubr.bf16.gmra.mrb[0].mxu0 %v4196
    %v4344 = vpop.f32.mrb[0].mxu0
    %v4345 = vadd.f32 %v4220, %v4344
    %v4346 = vpop.f32.mrb[0].mxu0
    %v4347 = vpop.f32.mrb[0].mxu0
    %v4348 = vadd.f32 %v4220, %v4347
    %v4349 = vpop.f32.mrb[0].mxu0
    %4350 = vmatprep.mubr.bf16.mxu0 0
    %4351 = vmatmul.mubr.bf16.gmra.mrb[0].mxu0 %v4197
    %v4352 = vpop.f32.mrb[0].mxu0
    %v4353 = vadd.f32 %v4220, %v4352
    %v4354 = vpop.f32.mrb[0].mxu0
    %v4355 = vpop.f32.mrb[0].mxu0
    %v4356 = vadd.f32 %v4220, %v4355
    %v4357 = vpop.f32.mrb[0].mxu0
    %4358 = vmatprep.mubr.bf16.mxu0 0
    %4359 = vmatmul.mubr.bf16.gmra.mrb[0].mxu0 %v4198
    %v4360 = vpop.f32.mrb[0].mxu0
    %v4361 = vadd.f32 %v4220, %v4360
    %v4362 = vpop.f32.mrb[0].mxu0
    %v4363 = vpop.f32.mrb[0].mxu0
    %v4364 = vadd.f32 %v4220, %v4363
    %v4365 = vpop.f32.mrb[0].mxu0
    %4366 = vdwg.mxu0
    %v4367 = vmax.f32 %v4305, 0.0
    %v4368 = vmax.f32 %v4308, 0.0
    %v4369 = vmax.f32 %v4313, 0.0
    %v4370 = vmax.f32 %v4316, 0.0
    %v4371 = vmax.f32 %v4321, 0.0
    %v4372 = vmax.f32 %v4324, 0.0
    %v4373 = vmax.f32 %v4329, 0.0
    %v4374 = vmax.f32 %v4332, 0.0
    %v4375 = vmax.f32 %v4337, 0.0
    %v4376 = vmax.f32 %v4340, 0.0
    %v4377 = vmax.f32 %v4345, 0.0
    %v4378 = vmax.f32 %v4348, 0.0
    %v4379 = vmax.f32 %v4353, 0.0
    %v4380 = vmax.f32 %v4356, 0.0
    %v4381 = vmax.f32 %v4361, 0.0
    %v4382 = vmax.f32 %v4364, 0.0
    %v4383 = vld [vmem:[%s9] sm:$0x1]
    %v4384 = vld [vmem:[%s10] sm:$0x1]
    %4385 = vadd.xlane.f32.xlu0 %v4367
    %v4386 = vpop.xlane.xlu0 %4385
    %4387 = vadd.xlane.f32.xlu0 %v4368
    %v4388 = vpop.xlane.xlu0 %4387
    %4389 = vadd.xlane.f32.xlu0 %v4369
    %v4390 = vpop.xlane.xlu0 %4389
    %4391 = vadd.xlane.f32.xlu0 %v4370
    %v4392 = vpop.xlane.xlu0 %4391
    %4393 = vadd.xlane.f32.xlu0 %v4371
    %v4394 = vpop.xlane.xlu0 %4393
    %4395 = vadd.xlane.f32.xlu0 %v4372
    %v4396 = vpop.xlane.xlu0 %4395
    %4397 = vadd.xlane.f32.xlu0 %v4373
    %v4398 = vpop.xlane.xlu0 %4397
    %4399 = vadd.xlane.f32.xlu0 %v4374
    %v4400 = vpop.xlane.xlu0 %4399
    %4401 = vadd.xlane.f32.xlu0 %v4375
    %v4402 = vpop.xlane.xlu0 %4401
    %4403 = vadd.xlane.f32.xlu0 %v4376
    %v4404 = vpop.xlane.xlu0 %4403
    %4405 = vadd.xlane.f32.xlu0 %v4377
    %v4406 = vpop.xlane.xlu0 %4405
    %4407 = vadd.xlane.f32.xlu0 %v4378
    %v4408 = vpop.xlane.xlu0 %4407
    %4409 = vadd.xlane.f32.xlu0 %v4379
    %v4410 = vpop.xlane.xlu0 %4409
    %4411 = vadd.xlane.f32.xlu0 %v4380
    %v4412 = vpop.xlane.xlu0 %4411
    %4413 = vadd.xlane.f32.xlu0 %v4381
    %v4414 = vpop.xlane.xlu0 %4413
    %4415 = vadd.xlane.f32.xlu0 %v4382
    %v4416 = vpop.xlane.xlu0 %4415
    %v4417 = vmul.f32 %v4386, %v3954
    %v4418 = vmul.f32 %v4388, %v3954
    %v4419 = vmul.f32 %v4390, %v3954
    %v4420 = vmul.f32 %v4392, %v3954
    %v4421 = vmul.f32 %v4394, %v3954
    %v4422 = vmul.f32 %v4396, %v3954
    %v4423 = vmul.f32 %v4398, %v3954
    %v4424 = vmul.f32 %v4400, %v3954
    %v4425 = vmul.f32 %v4402, %v3954
    %v4426 = vmul.f32 %v4404, %v3954
    %v4427 = vmul.f32 %v4406, %v3954
    %v4428 = vmul.f32 %v4408, %v3954
    %v4429 = vmul.f32 %v4410, %v3954
    %v4430 = vmul.f32 %v4412, %v3954
    %v4431 = vmul.f32 %v4414, %v3954
    %v4432 = vmul.f32 %v4416, %v3954
    %v4433 = vmul.f32 %v4367, %v4367
    %v4434 = vmul.f32 %v4368, %v4368
    %v4435 = vmul.f32 %v4369, %v4369
    %v4436 = vmul.f32 %v4370, %v4370
    %v4437 = vmul.f32 %v4371, %v4371
    %v4438 = vmul.f32 %v4372, %v4372
    %v4439 = vmul.f32 %v4373, %v4373
    %v4440 = vmul.f32 %v4374, %v4374
    %v4441 = vmul.f32 %v4375, %v4375
    %v4442 = vmul.f32 %v4376, %v4376
    %v4443 = vmul.f32 %v4377, %v4377
    %v4444 = vmul.f32 %v4378, %v4378
    %v4445 = vmul.f32 %v4379, %v4379
    %v4446 = vmul.f32 %v4380, %v4380
    %v4447 = vmul.f32 %v4381, %v4381
    %v4448 = vmul.f32 %v4382, %v4382
    %4449 = vadd.xlane.f32.xlu0 %v4433
    %v4450 = vpop.xlane.xlu0 %4449
    %4451 = vadd.xlane.f32.xlu0 %v4434
    %v4452 = vpop.xlane.xlu0 %4451
    %4453 = vadd.xlane.f32.xlu0 %v4435
    %v4454 = vpop.xlane.xlu0 %4453
    %4455 = vadd.xlane.f32.xlu0 %v4436
    %v4456 = vpop.xlane.xlu0 %4455
    %4457 = vadd.xlane.f32.xlu0 %v4437
    %v4458 = vpop.xlane.xlu0 %4457
    %4459 = vadd.xlane.f32.xlu0 %v4438
    %v4460 = vpop.xlane.xlu0 %4459
    %4461 = vadd.xlane.f32.xlu0 %v4439
    %v4462 = vpop.xlane.xlu0 %4461
    %4463 = vadd.xlane.f32.xlu0 %v4440
    %v4464 = vpop.xlane.xlu0 %4463
    %4465 = vadd.xlane.f32.xlu0 %v4441
    %v4466 = vpop.xlane.xlu0 %4465
    %4467 = vadd.xlane.f32.xlu0 %v4442
    %v4468 = vpop.xlane.xlu0 %4467
    %4469 = vadd.xlane.f32.xlu0 %v4443
    %v4470 = vpop.xlane.xlu0 %4469
    %4471 = vadd.xlane.f32.xlu0 %v4444
    %v4472 = vpop.xlane.xlu0 %4471
    %4473 = vadd.xlane.f32.xlu0 %v4445
    %v4474 = vpop.xlane.xlu0 %4473
    %4475 = vadd.xlane.f32.xlu0 %v4446
    %v4476 = vpop.xlane.xlu0 %4475
    %4477 = vadd.xlane.f32.xlu0 %v4447
    %v4478 = vpop.xlane.xlu0 %4477
    %4479 = vadd.xlane.f32.xlu0 %v4448
    %v4480 = vpop.xlane.xlu0 %4479
    %v4481 = vmul.f32 %v4450, %v3954
    %v4482 = vmul.f32 %v4452, %v3954
    %v4483 = vmul.f32 %v4454, %v3954
    %v4484 = vmul.f32 %v4456, %v3954
    %v4485 = vmul.f32 %v4458, %v3954
    %v4486 = vmul.f32 %v4460, %v3954
    %v4487 = vmul.f32 %v4462, %v3954
    %v4488 = vmul.f32 %v4464, %v3954
    %v4489 = vmul.f32 %v4466, %v3954
    %v4490 = vmul.f32 %v4468, %v3954
    %v4491 = vmul.f32 %v4470, %v3954
    %v4492 = vmul.f32 %v4472, %v3954
    %v4493 = vmul.f32 %v4474, %v3954
    %v4494 = vmul.f32 %v4476, %v3954
    %v4495 = vmul.f32 %v4478, %v3954
    %v4496 = vmul.f32 %v4480, %v3954
    %v4497 = vmul.f32 %v4417, %v4417
    %v4498 = vmul.f32 %v4418, %v4418
    %v4499 = vmul.f32 %v4419, %v4419
    %v4500 = vmul.f32 %v4420, %v4420
    %v4501 = vmul.f32 %v4421, %v4421
    %v4502 = vmul.f32 %v4422, %v4422
    %v4503 = vmul.f32 %v4423, %v4423
    %v4504 = vmul.f32 %v4424, %v4424
    %v4505 = vmul.f32 %v4425, %v4425
    %v4506 = vmul.f32 %v4426, %v4426
    %v4507 = vmul.f32 %v4427, %v4427
    %v4508 = vmul.f32 %v4428, %v4428
    %v4509 = vmul.f32 %v4429, %v4429
    %v4510 = vmul.f32 %v4430, %v4430
    %v4511 = vmul.f32 %v4431, %v4431
    %v4512 = vmul.f32 %v4432, %v4432
    %v4513 = vsub.f32 %v4481, %v4497
    %v4514 = vsub.f32 %v4482, %v4498
    %v4515 = vsub.f32 %v4483, %v4499
    %v4516 = vsub.f32 %v4484, %v4500
    %v4517 = vsub.f32 %v4485, %v4501
    %v4518 = vsub.f32 %v4486, %v4502
    %v4519 = vsub.f32 %v4487, %v4503
    %v4520 = vsub.f32 %v4488, %v4504
    %v4521 = vsub.f32 %v4489, %v4505
    %v4522 = vsub.f32 %v4490, %v4506
    %v4523 = vsub.f32 %v4491, %v4507
    %v4524 = vsub.f32 %v4492, %v4508
    %v4525 = vsub.f32 %v4493, %v4509
    %v4526 = vsub.f32 %v4494, %v4510
    %v4527 = vsub.f32 %v4495, %v4511
    %v4528 = vsub.f32 %v4496, %v4512
    %v4529 = vmax.f32 %v4513, 0.0
    %v4530 = vmax.f32 %v4514, 0.0
    %v4531 = vmax.f32 %v4515, 0.0
    %v4532 = vmax.f32 %v4516, 0.0
    %v4533 = vmax.f32 %v4517, 0.0
    %v4534 = vmax.f32 %v4518, 0.0
    %v4535 = vmax.f32 %v4519, 0.0
    %v4536 = vmax.f32 %v4520, 0.0
    %v4537 = vmax.f32 %v4521, 0.0
    %v4538 = vmax.f32 %v4522, 0.0
    %v4539 = vmax.f32 %v4523, 0.0
    %v4540 = vmax.f32 %v4524, 0.0
    %v4541 = vmax.f32 %v4525, 0.0
    %v4542 = vmax.f32 %v4526, 0.0
    %v4543 = vmax.f32 %v4527, 0.0
    %v4544 = vmax.f32 %v4528, 0.0
    %v4545 = vsub.f32 %v4367, %v4417
    %v4546 = vsub.f32 %v4368, %v4418
    %v4547 = vsub.f32 %v4369, %v4419
    %v4548 = vsub.f32 %v4370, %v4420
    %v4549 = vsub.f32 %v4371, %v4421
    %v4550 = vsub.f32 %v4372, %v4422
    %v4551 = vsub.f32 %v4373, %v4423
    %v4552 = vsub.f32 %v4374, %v4424
    %v4553 = vsub.f32 %v4375, %v4425
    %v4554 = vsub.f32 %v4376, %v4426
    %v4555 = vsub.f32 %v4377, %v4427
    %v4556 = vsub.f32 %v4378, %v4428
    %v4557 = vsub.f32 %v4379, %v4429
    %v4558 = vsub.f32 %v4380, %v4430
    %v4559 = vsub.f32 %v4381, %v4431
    %v4560 = vsub.f32 %v4382, %v4432
    %v4561 = vadd.f32 %v4529, 1e-05
    %v4562 = vadd.f32 %v4530, 1e-05
    %v4563 = vadd.f32 %v4531, 1e-05
    %v4564 = vadd.f32 %v4532, 1e-05
    %v4565 = vadd.f32 %v4533, 1e-05
    %v4566 = vadd.f32 %v4534, 1e-05
    %v4567 = vadd.f32 %v4535, 1e-05
    %v4568 = vadd.f32 %v4536, 1e-05
    %v4569 = vadd.f32 %v4537, 1e-05
    %v4570 = vadd.f32 %v4538, 1e-05
    %v4571 = vadd.f32 %v4539, 1e-05
    %v4572 = vadd.f32 %v4540, 1e-05
    %v4573 = vadd.f32 %v4541, 1e-05
    %v4574 = vadd.f32 %v4542, 1e-05
    %v4575 = vadd.f32 %v4543, 1e-05
    %v4576 = vadd.f32 %v4544, 1e-05
    %v4577 = vrsqrt.pop %v4561
    %v4578 = vrsqrt.pop %v4562
    %v4579 = vrsqrt.pop %v4563
    %v4580 = vrsqrt.pop %v4564
    %v4581 = vrsqrt.pop %v4565
    %v4582 = vrsqrt.pop %v4566
    %v4583 = vrsqrt.pop %v4567
    %v4584 = vrsqrt.pop %v4568
    %v4585 = vrsqrt.pop %v4569
    %v4586 = vrsqrt.pop %v4570
    %v4587 = vrsqrt.pop %v4571
    %v4588 = vrsqrt.pop %v4572
    %v4589 = vrsqrt.pop %v4573
    %v4590 = vrsqrt.pop %v4574
    %v4591 = vrsqrt.pop %v4575
    %v4592 = vrsqrt.pop %v4576
    %v4593 = vmul.f32 %v4545, %v4577
    %v4594 = vmul.f32 %v4546, %v4578
    %v4595 = vmul.f32 %v4547, %v4579
    %v4596 = vmul.f32 %v4548, %v4580
    %v4597 = vmul.f32 %v4549, %v4581
    %v4598 = vmul.f32 %v4550, %v4582
    %v4599 = vmul.f32 %v4551, %v4583
    %v4600 = vmul.f32 %v4552, %v4584
    %v4601 = vmul.f32 %v4553, %v4585
    %v4602 = vmul.f32 %v4554, %v4586
    %v4603 = vmul.f32 %v4555, %v4587
    %v4604 = vmul.f32 %v4556, %v4588
    %v4605 = vmul.f32 %v4557, %v4589
    %v4606 = vmul.f32 %v4558, %v4590
    %v4607 = vmul.f32 %v4559, %v4591
    %v4608 = vmul.f32 %v4560, %v4592
    %v4610 = vlaneseq
    %v4611 = vshrl.u32 %v4610, 7
    %v4612 = vsub.s32 0, %v4611
    %v4613 = vrot.slane %v4383, %v4612
    %v4615 = vmul.f32 %v4593, %v4613
    %v4616 = vmul.f32 %v4594, %v4613
    %v4617 = vmul.f32 %v4595, %v4613
    %v4618 = vmul.f32 %v4596, %v4613
    %v4619 = vmul.f32 %v4597, %v4613
    %v4620 = vmul.f32 %v4598, %v4613
    %v4621 = vmul.f32 %v4599, %v4613
    %v4622 = vmul.f32 %v4600, %v4613
    %v4623 = vmul.f32 %v4601, %v4613
    %v4624 = vmul.f32 %v4602, %v4613
    %v4625 = vmul.f32 %v4603, %v4613
    %v4626 = vmul.f32 %v4604, %v4613
    %v4627 = vmul.f32 %v4605, %v4613
    %v4628 = vmul.f32 %v4606, %v4613
    %v4629 = vmul.f32 %v4607, %v4613
    %v4630 = vmul.f32 %v4608, %v4613
    %v4632 = vlaneseq
    %v4633 = vshrl.u32 %v4632, 7
    %v4634 = vsub.s32 0, %v4633
    %v4635 = vrot.slane %v4384, %v4634
    %v4637 = vadd.f32 %v4615, %v4635
    %v4638 = vadd.f32 %v4616, %v4635
    %v4639 = vadd.f32 %v4617, %v4635
    %v4640 = vadd.f32 %v4618, %v4635
    %v4641 = vadd.f32 %v4619, %v4635
    %v4642 = vadd.f32 %v4620, %v4635
    %v4643 = vadd.f32 %v4621, %v4635
    %v4644 = vadd.f32 %v4622, %v4635
    %v4645 = vadd.f32 %v4623, %v4635
    %v4646 = vadd.f32 %v4624, %v4635
    %v4647 = vadd.f32 %v4625, %v4635
    %v4648 = vadd.f32 %v4626, %v4635
    %v4649 = vadd.f32 %v4627, %v4635
    %v4650 = vadd.f32 %v4628, %v4635
    %v4651 = vadd.f32 %v4629, %v4635
    %v4652 = vadd.f32 %v4630, %v4635
    %v4653 = vpack.c.bf16 %v4638, %v4637
    %v4654 = vpack.c.bf16 %v4640, %v4639
    %v4655 = vpack.c.bf16 %v4642, %v4641
    %v4656 = vpack.c.bf16 %v4644, %v4643
    %v4657 = vpack.c.bf16 %v4646, %v4645
    %v4658 = vpack.c.bf16 %v4648, %v4647
    %v4659 = vpack.c.bf16 %v4650, %v4649
    %v4660 = vpack.c.bf16 %v4652, %v4651
    %v4661 = vld [vmem:[#allocation5] sm:$0xf]
    %v4662 = vld [vmem:[#allocation5 + $0x4] sm:$0xf]
    %v4663 = vld [vmem:[#allocation5 + $0x8] sm:$0xf]
    %v4664 = vld [vmem:[#allocation5 + $0xc] sm:$0xf]
    %v4665 = vld [vmem:[#allocation5 + $0x10] sm:$0xf]
    %v4666 = vld [vmem:[#allocation5 + $0x14] sm:$0xf]
    %v4667 = vld [vmem:[#allocation5 + $0x18] sm:$0xf]
    %v4668 = vld [vmem:[#allocation5 + $0x1c] sm:$0xf]
    %v4669 = vld [vmem:[#allocation5 + $0x20] sm:$0xf]
    %v4670 = vld [vmem:[#allocation5 + $0x24] sm:$0xf]
    %v4671 = vld [vmem:[#allocation5 + $0x28] sm:$0xf]
    %v4672 = vld [vmem:[#allocation5 + $0x2c] sm:$0xf]
    %v4673 = vld [vmem:[#allocation5 + $0x30] sm:$0xf]
    %v4674 = vld [vmem:[#allocation5 + $0x34] sm:$0xf]
    %v4675 = vld [vmem:[#allocation5 + $0x38] sm:$0xf]
    %v4676 = vld [vmem:[#allocation5 + $0x3c] sm:$0xf]
    %v4677 = vld [vmem:[%s12] sm:$0x1]
    %v4679 = vlaneseq
    %v4680 = vshrl.u32 %v4679, 7
    %v4681 = vsub.s32 0, %v4680
    %v4682 = vrot.slane %v4677, %v4681
    %v4700 = vunpack.c.l.b16 %v4661
    %v4701 = vunpack.c.l.b16 %v4662
    %v4702 = vunpack.c.l.b16 %v4663
    %v4703 = vunpack.c.l.b16 %v4664
    %v4704 = vunpack.c.l.b16 %v4665
    %v4705 = vunpack.c.l.b16 %v4666
    %v4706 = vunpack.c.l.b16 %v4667
    %v4707 = vunpack.c.l.b16 %v4668
    %v4708 = vunpack.c.l.b16 %v4669
    %v4709 = vunpack.c.l.b16 %v4670
    %v4710 = vunpack.c.l.b16 %v4671
    %v4711 = vunpack.c.l.b16 %v4672
    %v4712 = vunpack.c.l.b16 %v4673
    %v4713 = vunpack.c.l.b16 %v4674
    %v4714 = vunpack.c.l.b16 %v4675
    %v4715 = vunpack.c.l.b16 %v4676
    %v4716 = vpack.c.b16 %v4701, %v4700
    %v4717 = vpack.c.b16 %v4703, %v4702
    %v4718 = vpack.c.b16 %v4705, %v4704
    %v4719 = vpack.c.b16 %v4707, %v4706
    %v4720 = vpack.c.b16 %v4709, %v4708
    %v4721 = vpack.c.b16 %v4711, %v4710
    %v4722 = vpack.c.b16 %v4713, %v4712
    %v4723 = vpack.c.b16 %v4715, %v4714
    %4732 = vmatprep.subr.bf16.mxu0 0
    %4733 = vmatpush1.bf16.msra.mxu0 %v4716
    %4734 = vmatprep.subr.bf16.mxu0 0
    %4735 = vmatpush1.bf16.msra.mxu0 %v4717
    %4736 = vmatprep.subr.bf16.mxu0 0
    %4737 = vmatpush1.bf16.msra.mxu0 %v4718
    %4738 = vmatprep.subr.bf16.mxu0 0
    %4739 = vmatpush1.bf16.msra.mxu0 %v4719
    %4740 = vmatprep.subr.bf16.mxu0 0
    %4741 = vmatpush1.bf16.msra.mxu0 %v4720
    %4742 = vmatprep.subr.bf16.mxu0 0
    %4743 = vmatpush1.bf16.msra.mxu0 %v4721
    %4744 = vmatprep.subr.bf16.mxu0 0
    %4745 = vmatpush1.bf16.msra.mxu0 %v4722
    %4746 = vmatprep.subr.bf16.mxu0 0
    %4747 = vmatpush1.bf16.msra.mxu0 %v4723
    %4748 = vmatprep.subr.bf16.mxu0 0
    %4749 = vmatpush1.bf16.msra.mxu0 0
    %4750 = vmatprep.subr.bf16.mxu0 0
    %4751 = vmatpush1.bf16.msra.mxu0 0
    %4752 = vmatprep.subr.bf16.mxu0 0
    %4753 = vmatpush1.bf16.msra.mxu0 0
    %4754 = vmatprep.subr.bf16.mxu0 0
    %4755 = vmatpush1.bf16.msra.mxu0 0
    %4756 = vmatprep.subr.bf16.mxu0 0
    %4757 = vmatpush1.bf16.msra.mxu0 0
    %4758 = vmatprep.subr.bf16.mxu0 0
    %4759 = vmatpush1.bf16.msra.mxu0 0
    %4760 = vmatprep.subr.bf16.mxu0 0
    %4761 = vmatpush1.bf16.msra.mxu0 0
    %4762 = vmatprep.subr.bf16.mxu0 0
    %4763 = vmatpush1.bf16.msra.mxu0 0
    %4764 = vmatprep.mubr.bf16.mxu0 0
    %4765 = vmatmul.mubr.bf16.gmra.mrb[0].mxu0 %v4653
    %v4766 = vpop.f32.mrb[0].mxu0
    %v4767 = vadd.f32 %v4682, %v4766
    %v4768 = vpop.f32.mrb[0].mxu0
    %v4769 = vpop.f32.mrb[0].mxu0
    %v4770 = vadd.f32 %v4682, %v4769
    %v4771 = vpop.f32.mrb[0].mxu0
    %4772 = vmatprep.mubr.bf16.mxu0 0
    %4773 = vmatmul.mubr.bf16.gmra.mrb[0].mxu0 %v4654
    %v4774 = vpop.f32.mrb[0].mxu0
    %v4775 = vadd.f32 %v4682, %v4774
    %v4776 = vpop.f32.mrb[0].mxu0
    %v4777 = vpop.f32.mrb[0].mxu0
    %v4778 = vadd.f32 %v4682, %v4777
    %v4779 = vpop.f32.mrb[0].mxu0
    %4780 = vmatprep.mubr.bf16.mxu0 0
    %4781 = vmatmul.mubr.bf16.gmra.mrb[0].mxu0 %v4655
    %v4782 = vpop.f32.mrb[0].mxu0
    %v4783 = vadd.f32 %v4682, %v4782
    %v4784 = vpop.f32.mrb[0].mxu0
    %v4785 = vpop.f32.mrb[0].mxu0
    %v4786 = vadd.f32 %v4682, %v4785
    %v4787 = vpop.f32.mrb[0].mxu0
    %4788 = vmatprep.mubr.bf16.mxu0 0
    %4789 = vmatmul.mubr.bf16.gmra.mrb[0].mxu0 %v4656
    %v4790 = vpop.f32.mrb[0].mxu0
    %v4791 = vadd.f32 %v4682, %v4790
    %v4792 = vpop.f32.mrb[0].mxu0
    %v4793 = vpop.f32.mrb[0].mxu0
    %v4794 = vadd.f32 %v4682, %v4793
    %v4795 = vpop.f32.mrb[0].mxu0
    %4796 = vmatprep.mubr.bf16.mxu0 0
    %4797 = vmatmul.mubr.bf16.gmra.mrb[0].mxu0 %v4657
    %v4798 = vpop.f32.mrb[0].mxu0
    %v4799 = vadd.f32 %v4682, %v4798
    %v4800 = vpop.f32.mrb[0].mxu0
    %v4801 = vpop.f32.mrb[0].mxu0
    %v4802 = vadd.f32 %v4682, %v4801
    %v4803 = vpop.f32.mrb[0].mxu0
    %4804 = vmatprep.mubr.bf16.mxu0 0
    %4805 = vmatmul.mubr.bf16.gmra.mrb[0].mxu0 %v4658
    %v4806 = vpop.f32.mrb[0].mxu0
    %v4807 = vadd.f32 %v4682, %v4806
    %v4808 = vpop.f32.mrb[0].mxu0
    %v4809 = vpop.f32.mrb[0].mxu0
    %v4810 = vadd.f32 %v4682, %v4809
    %v4811 = vpop.f32.mrb[0].mxu0
    %4812 = vmatprep.mubr.bf16.mxu0 0
    %4813 = vmatmul.mubr.bf16.gmra.mrb[0].mxu0 %v4659
    %v4814 = vpop.f32.mrb[0].mxu0
    %v4815 = vadd.f32 %v4682, %v4814
    %v4816 = vpop.f32.mrb[0].mxu0
    %v4817 = vpop.f32.mrb[0].mxu0
    %v4818 = vadd.f32 %v4682, %v4817
    %v4819 = vpop.f32.mrb[0].mxu0
    %4820 = vmatprep.mubr.bf16.mxu0 0
    %4821 = vmatmul.mubr.bf16.gmra.mrb[0].mxu0 %v4660
    %v4822 = vpop.f32.mrb[0].mxu0
    %v4823 = vadd.f32 %v4682, %v4822
    %v4824 = vpop.f32.mrb[0].mxu0
    %v4825 = vpop.f32.mrb[0].mxu0
    %v4826 = vadd.f32 %v4682, %v4825
    %v4827 = vpop.f32.mrb[0].mxu0
    %4828 = vdwg.mxu0
    %v4829 = vmax.f32 %v4767, 0.0
    %v4830 = vmax.f32 %v4770, 0.0
    %v4831 = vmax.f32 %v4775, 0.0
    %v4832 = vmax.f32 %v4778, 0.0
    %v4833 = vmax.f32 %v4783, 0.0
    %v4834 = vmax.f32 %v4786, 0.0
    %v4835 = vmax.f32 %v4791, 0.0
    %v4836 = vmax.f32 %v4794, 0.0
    %v4837 = vmax.f32 %v4799, 0.0
    %v4838 = vmax.f32 %v4802, 0.0
    %v4839 = vmax.f32 %v4807, 0.0
    %v4840 = vmax.f32 %v4810, 0.0
    %v4841 = vmax.f32 %v4815, 0.0
    %v4842 = vmax.f32 %v4818, 0.0
    %v4843 = vmax.f32 %v4823, 0.0
    %v4844 = vmax.f32 %v4826, 0.0
    %v4845 = vld [vmem:[%s13] sm:$0x1]
    %v4846 = vld [vmem:[%s14] sm:$0x1]
    %4847 = vadd.xlane.f32.xlu0 %v4829
    %v4848 = vpop.xlane.xlu0 %4847
    %4849 = vadd.xlane.f32.xlu0 %v4830
    %v4850 = vpop.xlane.xlu0 %4849
    %4851 = vadd.xlane.f32.xlu0 %v4831
    %v4852 = vpop.xlane.xlu0 %4851
    %4853 = vadd.xlane.f32.xlu0 %v4832
    %v4854 = vpop.xlane.xlu0 %4853
    %4855 = vadd.xlane.f32.xlu0 %v4833
    %v4856 = vpop.xlane.xlu0 %4855
    %4857 = vadd.xlane.f32.xlu0 %v4834
    %v4858 = vpop.xlane.xlu0 %4857
    %4859 = vadd.xlane.f32.xlu0 %v4835
    %v4860 = vpop.xlane.xlu0 %4859
    %4861 = vadd.xlane.f32.xlu0 %v4836
    %v4862 = vpop.xlane.xlu0 %4861
    %4863 = vadd.xlane.f32.xlu0 %v4837
    %v4864 = vpop.xlane.xlu0 %4863
    %4865 = vadd.xlane.f32.xlu0 %v4838
    %v4866 = vpop.xlane.xlu0 %4865
    %4867 = vadd.xlane.f32.xlu0 %v4839
    %v4868 = vpop.xlane.xlu0 %4867
    %4869 = vadd.xlane.f32.xlu0 %v4840
    %v4870 = vpop.xlane.xlu0 %4869
    %4871 = vadd.xlane.f32.xlu0 %v4841
    %v4872 = vpop.xlane.xlu0 %4871
    %4873 = vadd.xlane.f32.xlu0 %v4842
    %v4874 = vpop.xlane.xlu0 %4873
    %4875 = vadd.xlane.f32.xlu0 %v4843
    %v4876 = vpop.xlane.xlu0 %4875
    %4877 = vadd.xlane.f32.xlu0 %v4844
    %v4878 = vpop.xlane.xlu0 %4877
    %v4879 = vmul.f32 %v4848, %v3954
    %v4880 = vmul.f32 %v4850, %v3954
    %v4881 = vmul.f32 %v4852, %v3954
    %v4882 = vmul.f32 %v4854, %v3954
    %v4883 = vmul.f32 %v4856, %v3954
    %v4884 = vmul.f32 %v4858, %v3954
    %v4885 = vmul.f32 %v4860, %v3954
    %v4886 = vmul.f32 %v4862, %v3954
    %v4887 = vmul.f32 %v4864, %v3954
    %v4888 = vmul.f32 %v4866, %v3954
    %v4889 = vmul.f32 %v4868, %v3954
    %v4890 = vmul.f32 %v4870, %v3954
    %v4891 = vmul.f32 %v4872, %v3954
    %v4892 = vmul.f32 %v4874, %v3954
    %v4893 = vmul.f32 %v4876, %v3954
    %v4894 = vmul.f32 %v4878, %v3954
    %v4895 = vmul.f32 %v4829, %v4829
    %v4896 = vmul.f32 %v4830, %v4830
    %v4897 = vmul.f32 %v4831, %v4831
    %v4898 = vmul.f32 %v4832, %v4832
    %v4899 = vmul.f32 %v4833, %v4833
    %v4900 = vmul.f32 %v4834, %v4834
    %v4901 = vmul.f32 %v4835, %v4835
    %v4902 = vmul.f32 %v4836, %v4836
    %v4903 = vmul.f32 %v4837, %v4837
    %v4904 = vmul.f32 %v4838, %v4838
    %v4905 = vmul.f32 %v4839, %v4839
    %v4906 = vmul.f32 %v4840, %v4840
    %v4907 = vmul.f32 %v4841, %v4841
    %v4908 = vmul.f32 %v4842, %v4842
    %v4909 = vmul.f32 %v4843, %v4843
    %v4910 = vmul.f32 %v4844, %v4844
    %4911 = vadd.xlane.f32.xlu0 %v4895
    %v4912 = vpop.xlane.xlu0 %4911
    %4913 = vadd.xlane.f32.xlu0 %v4896
    %v4914 = vpop.xlane.xlu0 %4913
    %4915 = vadd.xlane.f32.xlu0 %v4897
    %v4916 = vpop.xlane.xlu0 %4915
    %4917 = vadd.xlane.f32.xlu0 %v4898
    %v4918 = vpop.xlane.xlu0 %4917
    %4919 = vadd.xlane.f32.xlu0 %v4899
    %v4920 = vpop.xlane.xlu0 %4919
    %4921 = vadd.xlane.f32.xlu0 %v4900
    %v4922 = vpop.xlane.xlu0 %4921
    %4923 = vadd.xlane.f32.xlu0 %v4901
    %v4924 = vpop.xlane.xlu0 %4923
    %4925 = vadd.xlane.f32.xlu0 %v4902
    %v4926 = vpop.xlane.xlu0 %4925
    %4927 = vadd.xlane.f32.xlu0 %v4903
    %v4928 = vpop.xlane.xlu0 %4927
    %4929 = vadd.xlane.f32.xlu0 %v4904
    %v4930 = vpop.xlane.xlu0 %4929
    %4931 = vadd.xlane.f32.xlu0 %v4905
    %v4932 = vpop.xlane.xlu0 %4931
    %4933 = vadd.xlane.f32.xlu0 %v4906
    %v4934 = vpop.xlane.xlu0 %4933
    %4935 = vadd.xlane.f32.xlu0 %v4907
    %v4936 = vpop.xlane.xlu0 %4935
    %4937 = vadd.xlane.f32.xlu0 %v4908
    %v4938 = vpop.xlane.xlu0 %4937
    %4939 = vadd.xlane.f32.xlu0 %v4909
    %v4940 = vpop.xlane.xlu0 %4939
    %4941 = vadd.xlane.f32.xlu0 %v4910
    %v4942 = vpop.xlane.xlu0 %4941
    %v4943 = vmul.f32 %v4912, %v3954
    %v4944 = vmul.f32 %v4914, %v3954
    %v4945 = vmul.f32 %v4916, %v3954
    %v4946 = vmul.f32 %v4918, %v3954
    %v4947 = vmul.f32 %v4920, %v3954
    %v4948 = vmul.f32 %v4922, %v3954
    %v4949 = vmul.f32 %v4924, %v3954
    %v4950 = vmul.f32 %v4926, %v3954
    %v4951 = vmul.f32 %v4928, %v3954
    %v4952 = vmul.f32 %v4930, %v3954
    %v4953 = vmul.f32 %v4932, %v3954
    %v4954 = vmul.f32 %v4934, %v3954
    %v4955 = vmul.f32 %v4936, %v3954
    %v4956 = vmul.f32 %v4938, %v3954
    %v4957 = vmul.f32 %v4940, %v3954
    %v4958 = vmul.f32 %v4942, %v3954
    %v4959 = vmul.f32 %v4879, %v4879
    %v4960 = vmul.f32 %v4880, %v4880
    %v4961 = vmul.f32 %v4881, %v4881
    %v4962 = vmul.f32 %v4882, %v4882
    %v4963 = vmul.f32 %v4883, %v4883
    %v4964 = vmul.f32 %v4884, %v4884
    %v4965 = vmul.f32 %v4885, %v4885
    %v4966 = vmul.f32 %v4886, %v4886
    %v4967 = vmul.f32 %v4887, %v4887
    %v4968 = vmul.f32 %v4888, %v4888
    %v4969 = vmul.f32 %v4889, %v4889
    %v4970 = vmul.f32 %v4890, %v4890
    %v4971 = vmul.f32 %v4891, %v4891
    %v4972 = vmul.f32 %v4892, %v4892
    %v4973 = vmul.f32 %v4893, %v4893
    %v4974 = vmul.f32 %v4894, %v4894
    %v4975 = vsub.f32 %v4943, %v4959
    %v4976 = vsub.f32 %v4944, %v4960
    %v4977 = vsub.f32 %v4945, %v4961
    %v4978 = vsub.f32 %v4946, %v4962
    %v4979 = vsub.f32 %v4947, %v4963
    %v4980 = vsub.f32 %v4948, %v4964
    %v4981 = vsub.f32 %v4949, %v4965
    %v4982 = vsub.f32 %v4950, %v4966
    %v4983 = vsub.f32 %v4951, %v4967
    %v4984 = vsub.f32 %v4952, %v4968
    %v4985 = vsub.f32 %v4953, %v4969
    %v4986 = vsub.f32 %v4954, %v4970
    %v4987 = vsub.f32 %v4955, %v4971
    %v4988 = vsub.f32 %v4956, %v4972
    %v4989 = vsub.f32 %v4957, %v4973
    %v4990 = vsub.f32 %v4958, %v4974
    %v4991 = vmax.f32 %v4975, 0.0
    %v4992 = vmax.f32 %v4976, 0.0
    %v4993 = vmax.f32 %v4977, 0.0
    %v4994 = vmax.f32 %v4978, 0.0
    %v4995 = vmax.f32 %v4979, 0.0
    %v4996 = vmax.f32 %v4980, 0.0
    %v4997 = vmax.f32 %v4981, 0.0
    %v4998 = vmax.f32 %v4982, 0.0
    %v4999 = vmax.f32 %v4983, 0.0
    %v5000 = vmax.f32 %v4984, 0.0
    %v5001 = vmax.f32 %v4985, 0.0
    %v5002 = vmax.f32 %v4986, 0.0
    %v5003 = vmax.f32 %v4987, 0.0
    %v5004 = vmax.f32 %v4988, 0.0
    %v5005 = vmax.f32 %v4989, 0.0
    %v5006 = vmax.f32 %v4990, 0.0
    %v5007 = vsub.f32 %v4829, %v4879
    %v5008 = vsub.f32 %v4830, %v4880
    %v5009 = vsub.f32 %v4831, %v4881
    %v5010 = vsub.f32 %v4832, %v4882
    %v5011 = vsub.f32 %v4833, %v4883
    %v5012 = vsub.f32 %v4834, %v4884
    %v5013 = vsub.f32 %v4835, %v4885
    %v5014 = vsub.f32 %v4836, %v4886
    %v5015 = vsub.f32 %v4837, %v4887
    %v5016 = vsub.f32 %v4838, %v4888
    %v5017 = vsub.f32 %v4839, %v4889
    %v5018 = vsub.f32 %v4840, %v4890
    %v5019 = vsub.f32 %v4841, %v4891
    %v5020 = vsub.f32 %v4842, %v4892
    %v5021 = vsub.f32 %v4843, %v4893
    %v5022 = vsub.f32 %v4844, %v4894
    %v5023 = vadd.f32 %v4991, 1e-05
    %v5024 = vadd.f32 %v4992, 1e-05
    %v5025 = vadd.f32 %v4993, 1e-05
    %v5026 = vadd.f32 %v4994, 1e-05
    %v5027 = vadd.f32 %v4995, 1e-05
    %v5028 = vadd.f32 %v4996, 1e-05
    %v5029 = vadd.f32 %v4997, 1e-05
    %v5030 = vadd.f32 %v4998, 1e-05
    %v5031 = vadd.f32 %v4999, 1e-05
    %v5032 = vadd.f32 %v5000, 1e-05
    %v5033 = vadd.f32 %v5001, 1e-05
    %v5034 = vadd.f32 %v5002, 1e-05
    %v5035 = vadd.f32 %v5003, 1e-05
    %v5036 = vadd.f32 %v5004, 1e-05
    %v5037 = vadd.f32 %v5005, 1e-05
    %v5038 = vadd.f32 %v5006, 1e-05
    %v5039 = vrsqrt.pop %v5023
    %v5040 = vrsqrt.pop %v5024
    %v5041 = vrsqrt.pop %v5025
    %v5042 = vrsqrt.pop %v5026
    %v5043 = vrsqrt.pop %v5027
    %v5044 = vrsqrt.pop %v5028
    %v5045 = vrsqrt.pop %v5029
    %v5046 = vrsqrt.pop %v5030
    %v5047 = vrsqrt.pop %v5031
    %v5048 = vrsqrt.pop %v5032
    %v5049 = vrsqrt.pop %v5033
    %v5050 = vrsqrt.pop %v5034
    %v5051 = vrsqrt.pop %v5035
    %v5052 = vrsqrt.pop %v5036
    %v5053 = vrsqrt.pop %v5037
    %v5054 = vrsqrt.pop %v5038
    %v5055 = vmul.f32 %v5007, %v5039
    %v5056 = vmul.f32 %v5008, %v5040
    %v5057 = vmul.f32 %v5009, %v5041
    %v5058 = vmul.f32 %v5010, %v5042
    %v5059 = vmul.f32 %v5011, %v5043
    %v5060 = vmul.f32 %v5012, %v5044
    %v5061 = vmul.f32 %v5013, %v5045
    %v5062 = vmul.f32 %v5014, %v5046
    %v5063 = vmul.f32 %v5015, %v5047
    %v5064 = vmul.f32 %v5016, %v5048
    %v5065 = vmul.f32 %v5017, %v5049
    %v5066 = vmul.f32 %v5018, %v5050
    %v5067 = vmul.f32 %v5019, %v5051
    %v5068 = vmul.f32 %v5020, %v5052
    %v5069 = vmul.f32 %v5021, %v5053
    %v5070 = vmul.f32 %v5022, %v5054
    %v5072 = vlaneseq
    %v5073 = vshrl.u32 %v5072, 7
    %v5074 = vsub.s32 0, %v5073
    %v5075 = vrot.slane %v4845, %v5074
    %v5077 = vmul.f32 %v5055, %v5075
    %v5078 = vmul.f32 %v5056, %v5075
    %v5079 = vmul.f32 %v5057, %v5075
    %v5080 = vmul.f32 %v5058, %v5075
    %v5081 = vmul.f32 %v5059, %v5075
    %v5082 = vmul.f32 %v5060, %v5075
    %v5083 = vmul.f32 %v5061, %v5075
    %v5084 = vmul.f32 %v5062, %v5075
    %v5085 = vmul.f32 %v5063, %v5075
    %v5086 = vmul.f32 %v5064, %v5075
    %v5087 = vmul.f32 %v5065, %v5075
    %v5088 = vmul.f32 %v5066, %v5075
    %v5089 = vmul.f32 %v5067, %v5075
    %v5090 = vmul.f32 %v5068, %v5075
    %v5091 = vmul.f32 %v5069, %v5075
    %v5092 = vmul.f32 %v5070, %v5075
    %v5094 = vlaneseq
    %v5095 = vshrl.u32 %v5094, 7
    %v5096 = vsub.s32 0, %v5095
    %v5097 = vrot.slane %v4846, %v5096
    %v5099 = vadd.f32 %v5077, %v5097
    %v5100 = vadd.f32 %v5078, %v5097
    %v5101 = vadd.f32 %v5079, %v5097
    %v5102 = vadd.f32 %v5080, %v5097
    %v5103 = vadd.f32 %v5081, %v5097
    %v5104 = vadd.f32 %v5082, %v5097
    %v5105 = vadd.f32 %v5083, %v5097
    %v5106 = vadd.f32 %v5084, %v5097
    %v5107 = vadd.f32 %v5085, %v5097
    %v5108 = vadd.f32 %v5086, %v5097
    %v5109 = vadd.f32 %v5087, %v5097
    %v5110 = vadd.f32 %v5088, %v5097
    %v5111 = vadd.f32 %v5089, %v5097
    %v5112 = vadd.f32 %v5090, %v5097
    %v5113 = vadd.f32 %v5091, %v5097
    %v5114 = vadd.f32 %v5092, %v5097
    %5115 = vst [vmem:[#allocation7] sm:$0xff] %v5099
    %5116 = vst [vmem:[#allocation7 + $0x8] sm:$0xff] %v5100
    %5117 = vst [vmem:[#allocation7 + $0x10] sm:$0xff] %v5101
    %5118 = vst [vmem:[#allocation7 + $0x18] sm:$0xff] %v5102
    %5119 = vst [vmem:[#allocation7 + $0x20] sm:$0xff] %v5103
    %5120 = vst [vmem:[#allocation7 + $0x28] sm:$0xff] %v5104
    %5121 = vst [vmem:[#allocation7 + $0x30] sm:$0xff] %v5105
    %5122 = vst [vmem:[#allocation7 + $0x38] sm:$0xff] %v5106
    %5123 = vst [vmem:[#allocation7 + $0x40] sm:$0xff] %v5107
    %5124 = vst [vmem:[#allocation7 + $0x48] sm:$0xff] %v5108
    %5125 = vst [vmem:[#allocation7 + $0x50] sm:$0xff] %v5109
    %5126 = vst [vmem:[#allocation7 + $0x58] sm:$0xff] %v5110
    %5127 = vst [vmem:[#allocation7 + $0x60] sm:$0xff] %v5111
    %5128 = vst [vmem:[#allocation7 + $0x68] sm:$0xff] %v5112
    %5129 = vst [vmem:[#allocation7 + $0x70] sm:$0xff] %v5113
    %5130 = vst [vmem:[#allocation7 + $0x78] sm:$0xff] %v5114
    // Predicated region
    $region70: #{tpu_custom_call.1} parent=1 // pred_check
      _
    $region71: #{tpu_custom_call.1} parent=1 // pred_check_branch
      %5132 = sbr.rel (0) target = $region73
    $region72: #{tpu_custom_call.1} parent=1 // pred_region
      %s5134 = ssub.s32 2048, 2048
      %5135 = vsyncadd [#allocation4], %s5134
      %s5136 = sshll.u32 [#allocation7], 4
      %s5137 = int_to_ptr.vmem [resolvable:$true] %s5136
      %5142 = dma.vmem_to_hbm [thread:$0]  %s5137, 2048, %s15, [#allocation4], 128, 128, 8
    $region73: #{tpu_custom_call.1} parent=1 // pred_fallthru
      _
    // Predicated region
    $region74: #{tpu_custom_call.1} parent=1 // pred_check
      _
    $region75: #{tpu_custom_call.1} parent=1 // pred_check_branch
      %5144 = sbr.rel (0) target = $region77
    $region76: #{tpu_custom_call.1} parent=1 // pred_region
      %5145 = dma.done [#allocation4], 2048
    $region77: #{tpu_custom_call.1} parent=1 // pred_fallthru
      _
    %5146 = vsyncpa [#allocation3], 1
    %5147 = vsyncpa [#allocation6], 1
    %5148 = vsyncpa [#allocation4], 1

</llo_original>
